<compile_context>
chip_gen: v5e
topology: v5e:2x2
jax: 0.10.0
libtpu: 0.0.40
codegen_flags: <defaults>
</compile_context>

<pallas_src>
import functools

import numpy as np
import jax
import jax.numpy as jnp
from jax.experimental import pallas as pl
from jax.experimental.pallas import tpu as pltpu


B_TILE = 8  # images per grid step (multiple of 8 so the output block is (8,128))


# ----------------------------- fused Pallas kernel --------------------------

def _fused_tinycnn_kernel(x_ref, k1_ref, b1_ref, rs1e_ref, rs1o_ref,
                          p1a_ref, p1b_ref, k2_ref, b2_ref, rs2e_ref, rs2o_ref,
                          p2a_ref, p2b_ref, w3_ref, b3_ref, w4_ref, b4_ref,
                          out_ref, lhs1_ref, xp2_ref):
    f32, bf16 = jnp.float32, jnp.bfloat16
    B = x_ref.shape[0]

    # ---- stage conv1 LHS in VMEM scratch: 3 vertical taps as 32-lane slabs --
    # lhs1[(i,r), dy*32 + c] = x[i, r+dy-1, c]   (zero when the row is padding)
    z32 = jnp.zeros((B, 1, 32), f32)
    lhs1_ref[:, 0:1, 0:32] = z32            # tap dy=0 at output row 0 -> pad row
    lhs1_ref[:, 31:32, 64:96] = z32         # tap dy=2 at output row 31 -> pad row
    lhs1_ref[:, 1:32, 0:32] = x_ref[:, 0:31, :]
    lhs1_ref[:, :, 32:64] = x_ref[...]
    lhs1_ref[:, 0:31, 64:96] = x_ref[:, 1:32, :]

    # ---- conv1 (1->8, 3x3, pad 1): ONE fused K=96 contraction + bias + ReLU --
    lhs1 = lhs1_ref[...].astype(bf16).reshape(B * 32, 96)
    acc1 = jnp.dot(lhs1, k1_ref[...], preferred_element_type=f32)   # (B*32, 256)
    a1 = jnp.maximum(acc1 + b1_ref[...], 0.0).astype(bf16)

    # ---- maxpool1 2x2: block-diag row selection + column selection/relayout -
    vm1 = jnp.maximum(jnp.dot(rs1e_ref[...], a1, preferred_element_type=f32),
                      jnp.dot(rs1o_ref[...], a1, preferred_element_type=f32))
    v1 = vm1.astype(bf16)                                           # (B*16, 256)
    pooled1 = jnp.maximum(jnp.dot(v1, p1a_ref[...], preferred_element_type=f32),
                          jnp.dot(v1, p1b_ref[...], preferred_element_type=f32))
    # pooled1: (B*16, 128) with lane layout [ci*16 + w'].

    # ---- conv2 (8->16, 3x3, pad 1): vertical pad via scratch, 3 taps ---------
    z128 = jnp.zeros((B, 1, 128), f32)
    xp2_ref[:, 0:1, :] = z128
    xp2_ref[:, 17:18, :] = z128
    xp2_ref[:, 1:17, :] = pooled1.reshape(B, 16, 128)

    acc2 = jnp.dot(xp2_ref[:, 0:16, :].astype(bf16).reshape(B * 16, 128),
                   k2_ref[0], preferred_element_type=f32)           # (B*16, 256)
    for dy in (1, 2):
        acc2 = acc2 + jnp.dot(
            xp2_ref[:, dy:dy + 16, :].astype(bf16).reshape(B * 16, 128),
            k2_ref[dy], preferred_element_type=f32)
    a2 = jnp.maximum(acc2 + b2_ref[...], 0.0).astype(bf16)

    # ---- maxpool2 2x2 --------------------------------------------------------
    vm2 = jnp.maximum(jnp.dot(rs2e_ref[...], a2, preferred_element_type=f32),
                      jnp.dot(rs2o_ref[...], a2, preferred_element_type=f32))
    v2 = vm2.astype(bf16)                                           # (B*8, 256)
    pooled2 = jnp.maximum(jnp.dot(v2, p2a_ref[...], preferred_element_type=f32),
                          jnp.dot(v2, p2b_ref[...], preferred_element_type=f32))
    # pooled2: (B*8, 128) with lane layout [co*8 + wo].

    # ---- fc1 (1024 -> 64) + ReLU: 128-lane-aligned slab reduction ------------
    t = jnp.dot(pooled2.astype(bf16), w3_ref[...], preferred_element_type=f32)
    t3 = t.reshape(B, 8, 1024)
    h = t3[:, 0, 0:64]
    for ho in range(1, 8):
        h = h + t3[:, ho, ho * 128:ho * 128 + 64]
    h = jnp.maximum(h + b3_ref[...], 0.0)                           # (B, 64)

    # ---- fc2 (64 -> num_classes, padded to 128 lanes) ------------------------
    logits = jnp.dot(h.astype(bf16), w4_ref[...],
                     preferred_element_type=f32) + b4_ref[...]
    out_ref[...] = logits                                           # (B, 128)


# ------------------------- one-time parameter preparation -------------------

def build_kernel_params(params, num_classes, batch_tile):
    """Pre-permute / pre-pad all weights once (torch layouts -> kernel layouts)."""
    B = batch_tile
    w1 = np.asarray(params["w1"], np.float32)    # (8, 1, 3, 3)
    b1 = np.asarray(params["b1"], np.float32)    # (8,)
    w2 = np.asarray(params["w2"], np.float32)    # (16, 8, 3, 3)
    b2 = np.asarray(params["b2"], np.float32)    # (16,)
    wf1 = np.asarray(params["wf1"], np.float32)  # (64, 1024)
    bf1 = np.asarray(params["bf1"], np.float32)  # (64,)
    wf2 = np.asarray(params["wf2"], np.float32)  # (nc, 64)
    bf2 = np.asarray(params["bf2"], np.float32)  # (nc,)

    C1, C2, W1, W2, HP = 8, 16, 32, 16, 8

    # conv1 fused-tap weights: K1[dy*32 + c, co*32 + w] = w1[co,0,dy,c-w+1]
    # (column boundary taps are simply absent => zero-pad conv semantics)
    K1 = np.zeros((3 * W1, C1 * W1), np.float32)
    for dy in range(3):
        for dx in range(3):
            w = np.arange(W1)
            c = w + dx - 1
            m = (c >= 0) & (c < W1)
            for co in range(C1):
                K1[dy * W1 + c[m], co * W1 + w[m]] = w1[co, 0, dy, dx]
    b1rep = np.repeat(b1, W1).reshape(1, C1 * W1)

    # maxpool1: even/odd row selectors, block-diagonal over the batch tile
    SE1 = np.zeros((W2, W1), np.float32); SE1[np.arange(W2), 2 * np.arange(W2)] = 1.0
    SO1 = np.zeros((W2, W1), np.float32); SO1[np.arange(W2), 2 * np.arange(W2) + 1] = 1.0
    eyeB = np.eye(B, dtype=np.float32)
    RS1E, RS1O = np.kron(eyeB, SE1), np.kron(eyeB, SO1)      # (B*16, B*32)

    # maxpool1 column selectors + relayout into conv2's 16-lane channel blocks
    P1A = np.zeros((C1 * W1, C1 * W2), np.float32)
    P1B = np.zeros((C1 * W1, C1 * W2), np.float32)
    for ci in range(C1):
        k = np.arange(W2)
        P1A[ci * W1 + 2 * k, ci * W2 + k] = 1.0
        P1B[ci * W1 + 2 * k + 1, ci * W2 + k] = 1.0

    # conv2 per-tap weights: K2[dy, ci*16 + c, co*16 + w] = w2[co,ci,dy,c-w+1]
    K2 = np.zeros((3, C1 * W2, C2 * W2), np.float32)
    for dy in range(3):
        for dx in range(3):
            w = np.arange(W2)
            c = w + dx - 1
            m = (c >= 0) & (c < W2)
            for co in range(C2):
                for ci in range(C1):
                    K2[dy, ci * W2 + c[m], co * W2 + w[m]] = w2[co, ci, dy, dx]
    b2rep = np.repeat(b2, W2).reshape(1, C2 * W2)

    # maxpool2 selectors
    SE2 = np.zeros((HP, W2), np.float32); SE2[np.arange(HP), 2 * np.arange(HP)] = 1.0
    SO2 = np.zeros((HP, W2), np.float32); SO2[np.arange(HP), 2 * np.arange(HP) + 1] = 1.0
    RS2E, RS2O = np.kron(eyeB, SE2), np.kron(eyeB, SO2)      # (B*8, B*16)

    P2A = np.zeros((C2 * W2, C2 * HP), np.float32)
    P2B = np.zeros((C2 * W2, C2 * HP), np.float32)
    for co in range(C2):
        k = np.arange(HP)
        P2A[co * W2 + 2 * k, co * HP + k] = 1.0
        P2B[co * W2 + 2 * k + 1, co * HP + k] = 1.0

    # fc1: pooled2 lane = co*8+wo; torch flat index = co*64 + ho*8 + wo.
    # Slabs start at 128-lane boundaries: W3[co*8+wo, ho*128 + j] (j < 64).
    W3 = np.zeros((C2 * HP, HP * 128), np.float32)
    wf1r = wf1.reshape(64, C2, HP, HP)                       # [j, c, ho, wo]
    for ho in range(HP):
        sub = np.transpose(wf1r[:, :, ho, :], (1, 2, 0)).reshape(C2 * HP, 64)
        W3[:, ho * 128:ho * 128 + 64] = sub
    b3 = bf1.reshape(1, 64)

    # fc2 padded to 128 output lanes (sliced back in the wrapper)
    NPAD = 128
    assert num_classes <= NPAD
    W4 = np.zeros((64, NPAD), np.float32); W4[:, :num_classes] = wf2.T
    b4 = np.zeros((1, NPAD), np.float32); b4[0, :num_classes] = bf2

    bfl, f32 = jnp.bfloat16, jnp.float32
    return (jnp.asarray(K1, bfl), jnp.asarray(b1rep, f32),
            jnp.asarray(RS1E, bfl), jnp.asarray(RS1O, bfl),
            jnp.asarray(P1A, bfl), jnp.asarray(P1B, bfl),
            jnp.asarray(K2, bfl), jnp.asarray(b2rep, f32),
            jnp.asarray(RS2E, bfl), jnp.asarray(RS2O, bfl),
            jnp.asarray(P2A, bfl), jnp.asarray(P2B, bfl),
            jnp.asarray(W3, bfl), jnp.asarray(b3, f32),
            jnp.asarray(W4, bfl), jnp.asarray(b4, f32))


# --------------------------------- forward ----------------------------------

def _const_spec(arr):
    if arr.ndim == 3:
        return pl.BlockSpec(arr.shape, lambda i: (0, 0, 0))
    return pl.BlockSpec(arr.shape, lambda i: (0, 0))


@functools.partial(jax.jit, static_argnums=(2, 3))
def tiny_cnn_forward(x_nchw, kparams, num_classes, batch_tile):
    n, cin, hh, ww = x_nchw.shape
    assert cin == 1 and hh == 32 and ww == 32, "TinyCNN expects (N,1,32,32) input"
    assert num_classes <= 128
    assert batch_tile % 8 == 0

    x = x_nchw.reshape(n, 32, 32)                    # free: drop Cin==1
    n_pad = ((n + batch_tile - 1) // batch_tile) * batch_tile
    if n_pad != n:
        x = jnp.concatenate([x, jnp.zeros((n_pad - n, 32, 32), x.dtype)], axis=0)

    B = batch_tile
    in_specs = [pl.BlockSpec((B, 32, 32), lambda i: (i, 0, 0))]
    in_specs += [_const_spec(w) for w in kparams]    # weights resident across grid

    out = pl.pallas_call(
        _fused_tinycnn_kernel,
        out_shape=jax.ShapeDtypeStruct((n_pad, 128), jnp.float32),
        grid=(n_pad // B,),
        in_specs=in_specs,
        out_specs=pl.BlockSpec((B, 128), lambda i: (i, 0)),
        scratch_shapes=[pltpu.VMEM((B, 32, 96), jnp.float32),   # conv1 fused LHS
                        pltpu.VMEM((B, 18, 128), jnp.float32)], # conv2 padded input
        compiler_params=pltpu.CompilerParams(
            dimension_semantics=("parallel",)),
    )(x, *kparams)
    return out[:n, :num_classes]


# ------------------------------- reference / init ---------------------------

def init_params(num_classes, key):
    ks = jax.random.split(key, 8)
    s = 0.1
    return {
        "w1": s * jax.random.normal(ks[0], (8, 1, 3, 3), jnp.float32),
        "b1": s * jax.random.normal(ks[1], (8,), jnp.float32),
        "w2": s * jax.random.normal(ks[2], (16, 8, 3, 3), jnp.float32),
        "b2": s * jax.random.normal(ks[3], (16,), jnp.float32),
        "wf1": s * jax.random.normal(ks[4], (64, 16 * 8 * 8), jnp.float32),
        "bf1": s * jax.random.normal(ks[5], (64,), jnp.float32),
        "wf2": s * jax.random.normal(ks[6], (num_classes, 64), jnp.float32),
        "bf2": s * jax.random.normal(ks[7], (num_classes,), jnp.float32),
    }


def reference_forward(x, params):
    dn = ("NCHW", "OIHW", "NCHW")
    y = jax.lax.conv_general_dilated(x, params["w1"], (1, 1), "SAME",
                                     dimension_numbers=dn)
    y = jax.nn.relu(y + params["b1"][None, :, None, None])
    y = jax.lax.reduce_window(y, -jnp.inf, jax.lax.max,
                              (1, 1, 2, 2), (1, 1, 2, 2), "VALID")
    y = jax.lax.conv_general_dilated(y, params["w2"], (1, 1), "SAME",
                                     dimension_numbers=dn)
    y = jax.nn.relu(y + params["b2"][None, :, None, None])
    y = jax.lax.reduce_window(y, -jnp.inf, jax.lax.max,
                              (1, 1, 2, 2), (1, 1, 2, 2), "VALID")
    y = y.reshape(y.shape[0], -1)                    # torch C,H,W flatten order
    y = jax.nn.relu(y @ params["wf1"].T + params["bf1"])
    return y @ params["wf2"].T + params["bf2"]


if __name__ == "__main__":
    num_classes = 10
    key = jax.random.PRNGKey(0)
    k_param, k_x = jax.random.split(key)

    params = init_params(num_classes, k_param)
    kparams = build_kernel_params(params, num_classes, B_TILE)  # one-time prep

    # 16 images -> grid of 2 steps of 8 images (keeps both v7x TCs busy).
    x = jax.random.normal(k_x, (16, 1, 32, 32), jnp.float32)

    logits = tiny_cnn_forward(x, kparams, num_classes, B_TILE)
    jax.block_until_ready(logits)
    assert logits.shape == (16, num_classes)
    assert logits.dtype == jnp.float32

    ref = reference_forward(x, params)
    err = float(jnp.max(jnp.abs(logits - ref)))
    assert err < 1e-1, f"mismatch vs reference: max abs err {err}"
    print("KERNEL_OK")
</pallas_src>

<mosaic_0001>
module attributes {stable_mosaic.version = 11 : i64} {
  func.func @_fused_tinycnn_kernel(%arg0: i32, %arg1: memref<8x32x32xf32, #tpu.memory_space<vmem>>, %arg2: memref<96x256xbf16, #tpu.memory_space<vmem>>, %arg3: memref<1x256xf32, #tpu.memory_space<vmem>>, %arg4: memref<128x256xbf16, #tpu.memory_space<vmem>>, %arg5: memref<128x256xbf16, #tpu.memory_space<vmem>>, %arg6: memref<256x128xbf16, #tpu.memory_space<vmem>>, %arg7: memref<256x128xbf16, #tpu.memory_space<vmem>>, %arg8: memref<3x128x256xbf16, #tpu.memory_space<vmem>>, %arg9: memref<1x256xf32, #tpu.memory_space<vmem>>, %arg10: memref<64x128xbf16, #tpu.memory_space<vmem>>, %arg11: memref<64x128xbf16, #tpu.memory_space<vmem>>, %arg12: memref<256x128xbf16, #tpu.memory_space<vmem>>, %arg13: memref<256x128xbf16, #tpu.memory_space<vmem>>, %arg14: memref<128x1024xbf16, #tpu.memory_space<vmem>>, %arg15: memref<1x64xf32, #tpu.memory_space<vmem>>, %arg16: memref<64x128xbf16, #tpu.memory_space<vmem>>, %arg17: memref<1x128xf32, #tpu.memory_space<vmem>>, %arg18: memref<8x128xf32, #tpu.memory_space<vmem>>, %arg19: memref<8x32x96xf32, #tpu.memory_space<vmem>>, %arg20: memref<8x18x128xf32, #tpu.memory_space<vmem>>) attributes {dimension_semantics = [#tpu.dimension_semantics<parallel>], iteration_bounds = array<i64: 2>, scalar_prefetch = 0 : i64, scratch_operands = 2 : i64, tpu.core_type = #tpu.core_type<tc>, window_params = [{transform_indices = @transform_0, window_bounds = array<i64: 8, 32, 32>}, {pipeline_mode = #tpu.pipeline_mode<synchronous>, transform_indices = @transform_1, window_bounds = array<i64: 96, 256>}, {pipeline_mode = #tpu.pipeline_mode<synchronous>, transform_indices = @transform_2, window_bounds = array<i64: 1, 256>}, {pipeline_mode = #tpu.pipeline_mode<synchronous>, transform_indices = @transform_3, window_bounds = array<i64: 128, 256>}, {pipeline_mode = #tpu.pipeline_mode<synchronous>, transform_indices = @transform_4, window_bounds = array<i64: 128, 256>}, {pipeline_mode = #tpu.pipeline_mode<synchronous>, transform_indices = @transform_5, window_bounds = array<i64: 256, 128>}, {pipeline_mode = #tpu.pipeline_mode<synchronous>, transform_indices = @transform_6, window_bounds = array<i64: 256, 128>}, {pipeline_mode = #tpu.pipeline_mode<synchronous>, transform_indices = @transform_7, window_bounds = array<i64: 3, 128, 256>}, {pipeline_mode = #tpu.pipeline_mode<synchronous>, transform_indices = @transform_8, window_bounds = array<i64: 1, 256>}, {pipeline_mode = #tpu.pipeline_mode<synchronous>, transform_indices = @transform_9, window_bounds = array<i64: 64, 128>}, {pipeline_mode = #tpu.pipeline_mode<synchronous>, transform_indices = @transform_10, window_bounds = array<i64: 64, 128>}, {pipeline_mode = #tpu.pipeline_mode<synchronous>, transform_indices = @transform_11, window_bounds = array<i64: 256, 128>}, {pipeline_mode = #tpu.pipeline_mode<synchronous>, transform_indices = @transform_12, window_bounds = array<i64: 256, 128>}, {pipeline_mode = #tpu.pipeline_mode<synchronous>, transform_indices = @transform_13, window_bounds = array<i64: 128, 1024>}, {pipeline_mode = #tpu.pipeline_mode<synchronous>, transform_indices = @transform_14, window_bounds = array<i64: 1, 64>}, {pipeline_mode = #tpu.pipeline_mode<synchronous>, transform_indices = @transform_15, window_bounds = array<i64: 64, 128>}, {pipeline_mode = #tpu.pipeline_mode<synchronous>, transform_indices = @transform_16, window_bounds = array<i64: 1, 128>}, {transform_indices = @transform_17, window_bounds = array<i64: 8, 128>}]} {
    %cst = arith.constant 0.000000e+00 : f32
    %0 = vector.broadcast %cst : f32 to vector<8x1x32xf32>
    %c0 = arith.constant 0 : index
    %c0_0 = arith.constant 0 : index
    %c0_1 = arith.constant 0 : index
    %1 = vector.load %arg19[%c0, %c0_0, %c0_1] : memref<8x32x96xf32, #tpu.memory_space<vmem>>, vector<8x1x32xf32>
    tpu.vector_store %arg19[%c0, %c0_0, %c0_1], %0 {strides = array<i32>} : memref<8x32x96xf32, #tpu.memory_space<vmem>>, vector<8x1x32xf32>,
    %c0_2 = arith.constant 0 : index
    %c31 = arith.constant 31 : index
    %c64 = arith.constant 64 : index
    %2 = vector.load %arg19[%c0_2, %c31, %c64] : memref<8x32x96xf32, #tpu.memory_space<vmem>>, vector<8x1x32xf32>
    tpu.vector_store %arg19[%c0_2, %c31, %c64], %0 {strides = array<i32>} : memref<8x32x96xf32, #tpu.memory_space<vmem>>, vector<8x1x32xf32>,
    %c0_3 = arith.constant 0 : index
    %c0_4 = arith.constant 0 : index
    %c0_5 = arith.constant 0 : index
    %3 = vector.load %arg1[%c0_3, %c0_4, %c0_5] : memref<8x32x32xf32, #tpu.memory_space<vmem>>, vector<8x31x32xf32>
    %c0_6 = arith.constant 0 : index
    %c1 = arith.constant 1 : index
    %c0_7 = arith.constant 0 : index
    %4 = vector.load %arg19[%c0_6, %c1, %c0_7] : memref<8x32x96xf32, #tpu.memory_space<vmem>>, vector<8x31x32xf32>
    tpu.vector_store %arg19[%c0_6, %c1, %c0_7], %3 {strides = array<i32>} : memref<8x32x96xf32, #tpu.memory_space<vmem>>, vector<8x31x32xf32>,
    %c0_8 = arith.constant 0 : index
    %c0_9 = arith.constant 0 : index
    %c0_10 = arith.constant 0 : index
    %5 = vector.load %arg1[%c0_8, %c0_9, %c0_10] : memref<8x32x32xf32, #tpu.memory_space<vmem>>, vector<8x32x32xf32>
    %c0_11 = arith.constant 0 : index
    %c0_12 = arith.constant 0 : index
    %c32 = arith.constant 32 : index
    %6 = vector.load %arg19[%c0_11, %c0_12, %c32] : memref<8x32x96xf32, #tpu.memory_space<vmem>>, vector<8x32x32xf32>
    tpu.vector_store %arg19[%c0_11, %c0_12, %c32], %5 {strides = array<i32>} : memref<8x32x96xf32, #tpu.memory_space<vmem>>, vector<8x32x32xf32>,
    %c0_13 = arith.constant 0 : index
    %c1_14 = arith.constant 1 : index
    %c0_15 = arith.constant 0 : index
    %7 = vector.load %arg1[%c0_13, %c1_14, %c0_15] : memref<8x32x32xf32, #tpu.memory_space<vmem>>, vector<8x31x32xf32>
    %c0_16 = arith.constant 0 : index
    %c0_17 = arith.constant 0 : index
    %c64_18 = arith.constant 64 : index
    %8 = vector.load %arg19[%c0_16, %c0_17, %c64_18] : memref<8x32x96xf32, #tpu.memory_space<vmem>>, vector<8x31x32xf32>
    tpu.vector_store %arg19[%c0_16, %c0_17, %c64_18], %7 {strides = array<i32>} : memref<8x32x96xf32, #tpu.memory_space<vmem>>, vector<8x31x32xf32>,
    %c0_19 = arith.constant 0 : index
    %c0_20 = arith.constant 0 : index
    %c0_21 = arith.constant 0 : index
    %9 = vector.load %arg19[%c0_19, %c0_20, %c0_21] : memref<8x32x96xf32, #tpu.memory_space<vmem>>, vector<8x32x96xf32>
    %10 = arith.truncf %9 : vector<8x32x96xf32> to vector<8x32x96xbf16>
    %11 = vector.shape_cast %10 : vector<8x32x96xbf16> to vector<256x96xbf16>
    %c0_22 = arith.constant 0 : index
    %c0_23 = arith.constant 0 : index
    %12 = vector.load %arg2[%c0_22, %c0_23] : memref<96x256xbf16, #tpu.memory_space<vmem>>, vector<96x256xbf16>
    %cst_24 = arith.constant dense<0.000000e+00> : vector<256x256xf32>
    %13 = tpu.matmul %11, %12, %cst_24 {dimension_numbers = #tpu.dot_dimension_numbers<[1], [0], [0], [1], [0, 0, 1, 1], [], []>} : vector<256x96xbf16>, vector<96x256xbf16>, vector<256x256xf32> -> vector<256x256xf32>
    %c0_25 = arith.constant 0 : index
    %c0_26 = arith.constant 0 : index
    %14 = vector.load %arg3[%c0_25, %c0_26] : memref<1x256xf32, #tpu.memory_space<vmem>>, vector<1x256xf32>
    %15 = vector.broadcast %14 : vector<1x256xf32> to vector<256x256xf32>
    %16 = arith.addf %13, %15 : vector<256x256xf32>
    %cst_27 = arith.constant 0.000000e+00 : f32
    %17 = vector.broadcast %cst_27 : f32 to vector<256x256xf32>
    %18 = arith.maximumf %16, %17 : vector<256x256xf32>
    %19 = arith.truncf %18 : vector<256x256xf32> to vector<256x256xbf16>
    %c0_28 = arith.constant 0 : index
    %c0_29 = arith.constant 0 : index
    %20 = vector.load %arg4[%c0_28, %c0_29] : memref<128x256xbf16, #tpu.memory_space<vmem>>, vector<128x256xbf16>
    %cst_30 = arith.constant dense<0.000000e+00> : vector<128x256xf32>
    %21 = tpu.matmul %20, %19, %cst_30 {dimension_numbers = #tpu.dot_dimension_numbers<[1], [0], [0], [1], [0, 0, 1, 1], [], []>} : vector<128x256xbf16>, vector<256x256xbf16>, vector<128x256xf32> -> vector<128x256xf32>
    %c0_31 = arith.constant 0 : index
    %c0_32 = arith.constant 0 : index
    %22 = vector.load %arg5[%c0_31, %c0_32] : memref<128x256xbf16, #tpu.memory_space<vmem>>, vector<128x256xbf16>
    %cst_33 = arith.constant dense<0.000000e+00> : vector<128x256xf32>
    %23 = tpu.matmul %22, %19, %cst_33 {dimension_numbers = #tpu.dot_dimension_numbers<[1], [0], [0], [1], [0, 0, 1, 1], [], []>} : vector<128x256xbf16>, vector<256x256xbf16>, vector<128x256xf32> -> vector<128x256xf32>
    %24 = arith.maximumf %21, %23 : vector<128x256xf32>
    %25 = arith.truncf %24 : vector<128x256xf32> to vector<128x256xbf16>
    %c0_34 = arith.constant 0 : index
    %c0_35 = arith.constant 0 : index
    %26 = vector.load %arg6[%c0_34, %c0_35] : memref<256x128xbf16, #tpu.memory_space<vmem>>, vector<256x128xbf16>
    %cst_36 = arith.constant dense<0.000000e+00> : vector<128x128xf32>
    %27 = tpu.matmul %25, %26, %cst_36 {dimension_numbers = #tpu.dot_dimension_numbers<[1], [0], [0], [1], [0, 0, 1, 1], [], []>} : vector<128x256xbf16>, vector<256x128xbf16>, vector<128x128xf32> -> vector<128x128xf32>
    %c0_37 = arith.constant 0 : index
    %c0_38 = arith.constant 0 : index
    %28 = vector.load %arg7[%c0_37, %c0_38] : memref<256x128xbf16, #tpu.memory_space<vmem>>, vector<256x128xbf16>
    %cst_39 = arith.constant dense<0.000000e+00> : vector<128x128xf32>
    %29 = tpu.matmul %25, %28, %cst_39 {dimension_numbers = #tpu.dot_dimension_numbers<[1], [0], [0], [1], [0, 0, 1, 1], [], []>} : vector<128x256xbf16>, vector<256x128xbf16>, vector<128x128xf32> -> vector<128x128xf32>
    %30 = arith.maximumf %27, %29 : vector<128x128xf32>
    %cst_40 = arith.constant 0.000000e+00 : f32
    %31 = vector.broadcast %cst_40 : f32 to vector<8x1x128xf32>
    %c0_41 = arith.constant 0 : index
    %c0_42 = arith.constant 0 : index
    %c0_43 = arith.constant 0 : index
    %32 = vector.load %arg20[%c0_41, %c0_42, %c0_43] : memref<8x18x128xf32, #tpu.memory_space<vmem>>, vector<8x1x128xf32>
    tpu.vector_store %arg20[%c0_41, %c0_42, %c0_43], %31 {strides = array<i32>} : memref<8x18x128xf32, #tpu.memory_space<vmem>>, vector<8x1x128xf32>,
    %c0_44 = arith.constant 0 : index
    %c17 = arith.constant 17 : index
    %c0_45 = arith.constant 0 : index
    %33 = vector.load %arg20[%c0_44, %c17, %c0_45] : memref<8x18x128xf32, #tpu.memory_space<vmem>>, vector<8x1x128xf32>
    tpu.vector_store %arg20[%c0_44, %c17, %c0_45], %31 {strides = array<i32>} : memref<8x18x128xf32, #tpu.memory_space<vmem>>, vector<8x1x128xf32>,
    %34 = vector.shape_cast %30 : vector<128x128xf32> to vector<8x16x128xf32>
    %c0_46 = arith.constant 0 : index
    %c1_47 = arith.constant 1 : index
    %c0_48 = arith.constant 0 : index
    %35 = vector.load %arg20[%c0_46, %c1_47, %c0_48] : memref<8x18x128xf32, #tpu.memory_space<vmem>>, vector<8x16x128xf32>
    tpu.vector_store %arg20[%c0_46, %c1_47, %c0_48], %34 {strides = array<i32>} : memref<8x18x128xf32, #tpu.memory_space<vmem>>, vector<8x16x128xf32>,
    %c0_49 = arith.constant 0 : index
    %c0_50 = arith.constant 0 : index
    %c0_51 = arith.constant 0 : index
    %36 = vector.load %arg20[%c0_49, %c0_50, %c0_51] : memref<8x18x128xf32, #tpu.memory_space<vmem>>, vector<8x16x128xf32>
    %37 = arith.truncf %36 : vector<8x16x128xf32> to vector<8x16x128xbf16>
    %38 = vector.shape_cast %37 : vector<8x16x128xbf16> to vector<128x128xbf16>
    %c0_52 = arith.constant 0 : index
    %c0_53 = arith.constant 0 : index
    %c0_54 = arith.constant 0 : index
    %39 = vector.load %arg8[%c0_52, %c0_53, %c0_54] : memref<3x128x256xbf16, #tpu.memory_space<vmem>>, vector<1x128x256xbf16>
    %40 = vector.shape_cast %39 : vector<1x128x256xbf16> to vector<128x256xbf16>
    %cst_55 = arith.constant dense<0.000000e+00> : vector<128x256xf32>
    %41 = tpu.matmul %38, %40, %cst_55 {dimension_numbers = #tpu.dot_dimension_numbers<[1], [0], [0], [1], [0, 0, 1, 1], [], []>} : vector<128x128xbf16>, vector<128x256xbf16>, vector<128x256xf32> -> vector<128x256xf32>
    %c0_56 = arith.constant 0 : index
    %c1_57 = arith.constant 1 : index
    %c0_58 = arith.constant 0 : index
    %42 = vector.load %arg20[%c0_56, %c1_57, %c0_58] : memref<8x18x128xf32, #tpu.memory_space<vmem>>, vector<8x16x128xf32>
    %43 = arith.truncf %42 : vector<8x16x128xf32> to vector<8x16x128xbf16>
    %44 = vector.shape_cast %43 : vector<8x16x128xbf16> to vector<128x128xbf16>
    %c1_59 = arith.constant 1 : index
    %c0_60 = arith.constant 0 : index
    %c0_61 = arith.constant 0 : index
    %45 = vector.load %arg8[%c1_59, %c0_60, %c0_61] : memref<3x128x256xbf16, #tpu.memory_space<vmem>>, vector<1x128x256xbf16>
    %46 = vector.shape_cast %45 : vector<1x128x256xbf16> to vector<128x256xbf16>
    %cst_62 = arith.constant dense<0.000000e+00> : vector<128x256xf32>
    %47 = tpu.matmul %44, %46, %cst_62 {dimension_numbers = #tpu.dot_dimension_numbers<[1], [0], [0], [1], [0, 0, 1, 1], [], []>} : vector<128x128xbf16>, vector<128x256xbf16>, vector<128x256xf32> -> vector<128x256xf32>
    %48 = arith.addf %41, %47 : vector<128x256xf32>
    %c0_63 = arith.constant 0 : index
    %c2 = arith.constant 2 : index
    %c0_64 = arith.constant 0 : index
    %49 = vector.load %arg20[%c0_63, %c2, %c0_64] : memref<8x18x128xf32, #tpu.memory_space<vmem>>, vector<8x16x128xf32>
    %50 = arith.truncf %49 : vector<8x16x128xf32> to vector<8x16x128xbf16>
    %51 = vector.shape_cast %50 : vector<8x16x128xbf16> to vector<128x128xbf16>
    %c2_65 = arith.constant 2 : index
    %c0_66 = arith.constant 0 : index
    %c0_67 = arith.constant 0 : index
    %52 = vector.load %arg8[%c2_65, %c0_66, %c0_67] : memref<3x128x256xbf16, #tpu.memory_space<vmem>>, vector<1x128x256xbf16>
    %53 = vector.shape_cast %52 : vector<1x128x256xbf16> to vector<128x256xbf16>
    %cst_68 = arith.constant dense<0.000000e+00> : vector<128x256xf32>
    %54 = tpu.matmul %51, %53, %cst_68 {dimension_numbers = #tpu.dot_dimension_numbers<[1], [0], [0], [1], [0, 0, 1, 1], [], []>} : vector<128x128xbf16>, vector<128x256xbf16>, vector<128x256xf32> -> vector<128x256xf32>
    %55 = arith.addf %48, %54 : vector<128x256xf32>
    %c0_69 = arith.constant 0 : index
    %c0_70 = arith.constant 0 : index
    %56 = vector.load %arg9[%c0_69, %c0_70] : memref<1x256xf32, #tpu.memory_space<vmem>>, vector<1x256xf32>
    %57 = vector.broadcast %56 : vector<1x256xf32> to vector<128x256xf32>
    %58 = arith.addf %55, %57 : vector<128x256xf32>
    %cst_71 = arith.constant 0.000000e+00 : f32
    %59 = vector.broadcast %cst_71 : f32 to vector<128x256xf32>
    %60 = arith.maximumf %58, %59 : vector<128x256xf32>
    %61 = arith.truncf %60 : vector<128x256xf32> to vector<128x256xbf16>
    %c0_72 = arith.constant 0 : index
    %c0_73 = arith.constant 0 : index
    %62 = vector.load %arg10[%c0_72, %c0_73] : memref<64x128xbf16, #tpu.memory_space<vmem>>, vector<64x128xbf16>
    %cst_74 = arith.constant dense<0.000000e+00> : vector<64x256xf32>
    %63 = tpu.matmul %62, %61, %cst_74 {dimension_numbers = #tpu.dot_dimension_numbers<[1], [0], [0], [1], [0, 0, 1, 1], [], []>} : vector<64x128xbf16>, vector<128x256xbf16>, vector<64x256xf32> -> vector<64x256xf32>
    %c0_75 = arith.constant 0 : index
    %c0_76 = arith.constant 0 : index
    %64 = vector.load %arg11[%c0_75, %c0_76] : memref<64x128xbf16, #tpu.memory_space<vmem>>, vector<64x128xbf16>
    %cst_77 = arith.constant dense<0.000000e+00> : vector<64x256xf32>
    %65 = tpu.matmul %64, %61, %cst_77 {dimension_numbers = #tpu.dot_dimension_numbers<[1], [0], [0], [1], [0, 0, 1, 1], [], []>} : vector<64x128xbf16>, vector<128x256xbf16>, vector<64x256xf32> -> vector<64x256xf32>
    %66 = arith.maximumf %63, %65 : vector<64x256xf32>
    %67 = arith.truncf %66 : vector<64x256xf32> to vector<64x256xbf16>
    %c0_78 = arith.constant 0 : index
    %c0_79 = arith.constant 0 : index
    %68 = vector.load %arg12[%c0_78, %c0_79] : memref<256x128xbf16, #tpu.memory_space<vmem>>, vector<256x128xbf16>
    %cst_80 = arith.constant dense<0.000000e+00> : vector<64x128xf32>
    %69 = tpu.matmul %67, %68, %cst_80 {dimension_numbers = #tpu.dot_dimension_numbers<[1], [0], [0], [1], [0, 0, 1, 1], [], []>} : vector<64x256xbf16>, vector<256x128xbf16>, vector<64x128xf32> -> vector<64x128xf32>
    %c0_81 = arith.constant 0 : index
    %c0_82 = arith.constant 0 : index
    %70 = vector.load %arg13[%c0_81, %c0_82] : memref<256x128xbf16, #tpu.memory_space<vmem>>, vector<256x128xbf16>
    %cst_83 = arith.constant dense<0.000000e+00> : vector<64x128xf32>
    %71 = tpu.matmul %67, %70, %cst_83 {dimension_numbers = #tpu.dot_dimension_numbers<[1], [0], [0], [1], [0, 0, 1, 1], [], []>} : vector<64x256xbf16>, vector<256x128xbf16>, vector<64x128xf32> -> vector<64x128xf32>
    %72 = arith.maximumf %69, %71 : vector<64x128xf32>
    %73 = arith.truncf %72 : vector<64x128xf32> to vector<64x128xbf16>
    %c0_84 = arith.constant 0 : index
    %c0_85 = arith.constant 0 : index
    %74 = vector.load %arg14[%c0_84, %c0_85] : memref<128x1024xbf16, #tpu.memory_space<vmem>>, vector<128x1024xbf16>
    %cst_86 = arith.constant dense<0.000000e+00> : vector<64x1024xf32>
    %75 = tpu.matmul %73, %74, %cst_86 {dimension_numbers = #tpu.dot_dimension_numbers<[1], [0], [0], [1], [0, 0, 1, 1], [], []>} : vector<64x128xbf16>, vector<128x1024xbf16>, vector<64x1024xf32> -> vector<64x1024xf32>
    %76 = vector.shape_cast %75 : vector<64x1024xf32> to vector<8x8x1024xf32>
    %77 = vector.extract_strided_slice %76 {offsets = [0, 0, 0], sizes = [8, 1, 64], strides = [1, 1, 1]} : vector<8x8x1024xf32> to vector<8x1x64xf32>
    %78 = vector.shape_cast %77 : vector<8x1x64xf32> to vector<8x64xf32>
    %79 = vector.extract_strided_slice %76 {offsets = [0, 1, 128], sizes = [8, 1, 64], strides = [1, 1, 1]} : vector<8x8x1024xf32> to vector<8x1x64xf32>
    %80 = vector.shape_cast %79 : vector<8x1x64xf32> to vector<8x64xf32>
    %81 = arith.addf %78, %80 : vector<8x64xf32>
    %82 = vector.extract_strided_slice %76 {offsets = [0, 2, 256], sizes = [8, 1, 64], strides = [1, 1, 1]} : vector<8x8x1024xf32> to vector<8x1x64xf32>
    %83 = vector.shape_cast %82 : vector<8x1x64xf32> to vector<8x64xf32>
    %84 = arith.addf %81, %83 : vector<8x64xf32>
    %85 = vector.extract_strided_slice %76 {offsets = [0, 3, 384], sizes = [8, 1, 64], strides = [1, 1, 1]} : vector<8x8x1024xf32> to vector<8x1x64xf32>
    %86 = vector.shape_cast %85 : vector<8x1x64xf32> to vector<8x64xf32>
    %87 = arith.addf %84, %86 : vector<8x64xf32>
    %88 = vector.extract_strided_slice %76 {offsets = [0, 4, 512], sizes = [8, 1, 64], strides = [1, 1, 1]} : vector<8x8x1024xf32> to vector<8x1x64xf32>
    %89 = vector.shape_cast %88 : vector<8x1x64xf32> to vector<8x64xf32>
    %90 = arith.addf %87, %89 : vector<8x64xf32>
    %91 = vector.extract_strided_slice %76 {offsets = [0, 5, 640], sizes = [8, 1, 64], strides = [1, 1, 1]} : vector<8x8x1024xf32> to vector<8x1x64xf32>
    %92 = vector.shape_cast %91 : vector<8x1x64xf32> to vector<8x64xf32>
    %93 = arith.addf %90, %92 : vector<8x64xf32>
    %94 = vector.extract_strided_slice %76 {offsets = [0, 6, 768], sizes = [8, 1, 64], strides = [1, 1, 1]} : vector<8x8x1024xf32> to vector<8x1x64xf32>
    %95 = vector.shape_cast %94 : vector<8x1x64xf32> to vector<8x64xf32>
    %96 = arith.addf %93, %95 : vector<8x64xf32>
    %97 = vector.extract_strided_slice %76 {offsets = [0, 7, 896], sizes = [8, 1, 64], strides = [1, 1, 1]} : vector<8x8x1024xf32> to vector<8x1x64xf32>
    %98 = vector.shape_cast %97 : vector<8x1x64xf32> to vector<8x64xf32>
    %99 = arith.addf %96, %98 : vector<8x64xf32>
    %c0_87 = arith.constant 0 : index
    %c0_88 = arith.constant 0 : index
    %100 = vector.load %arg15[%c0_87, %c0_88] : memref<1x64xf32, #tpu.memory_space<vmem>>, vector<1x64xf32>
    %101 = vector.broadcast %100 : vector<1x64xf32> to vector<8x64xf32>
    %102 = arith.addf %99, %101 : vector<8x64xf32>
    %cst_89 = arith.constant 0.000000e+00 : f32
    %103 = vector.broadcast %cst_89 : f32 to vector<8x64xf32>
    %104 = arith.maximumf %102, %103 : vector<8x64xf32>
    %105 = arith.truncf %104 : vector<8x64xf32> to vector<8x64xbf16>
    %c0_90 = arith.constant 0 : index
    %c0_91 = arith.constant 0 : index
    %106 = vector.load %arg16[%c0_90, %c0_91] : memref<64x128xbf16, #tpu.memory_space<vmem>>, vector<64x128xbf16>
    %cst_92 = arith.constant dense<0.000000e+00> : vector<8x128xf32>
    %107 = tpu.matmul %105, %106, %cst_92 {dimension_numbers = #tpu.dot_dimension_numbers<[1], [0], [0], [1], [0, 0, 1, 1], [], []>} : vector<8x64xbf16>, vector<64x128xbf16>, vector<8x128xf32> -> vector<8x128xf32>
    %c0_93 = arith.constant 0 : index
    %c0_94 = arith.constant 0 : index
    %108 = vector.load %arg17[%c0_93, %c0_94] : memref<1x128xf32, #tpu.memory_space<vmem>>, vector<1x128xf32>
    %109 = vector.broadcast %108 : vector<1x128xf32> to vector<8x128xf32>
    %110 = arith.addf %107, %109 : vector<8x128xf32>
    %c0_95 = arith.constant 0 : index
    %c0_96 = arith.constant 0 : index
    %111 = vector.load %arg18[%c0_95, %c0_96] : memref<8x128xf32, #tpu.memory_space<vmem>>, vector<8x128xf32>
    tpu.vector_store %arg18[%c0_95, %c0_96], %110 {strides = array<i32>} : memref<8x128xf32, #tpu.memory_space<vmem>>, vector<8x128xf32>,
    return
  }
  func.func @transform_0(%arg0: i32) -> (i32, i32, i32) {
    %c0_i32 = arith.constant 0 : i32
    %c0_i32_0 = arith.constant 0 : i32
    %c0_i32_1 = arith.constant 0 : i32
    return %arg0, %c0_i32, %c0_i32_0 : i32, i32, i32
  }
  func.func @transform_1(%arg0: i32) -> (i32, i32) {
    %c0_i32 = arith.constant 0 : i32
    %c0_i32_0 = arith.constant 0 : i32
    %c0_i32_1 = arith.constant 0 : i32
    return %c0_i32, %c0_i32_0 : i32, i32
  }
  func.func @transform_2(%arg0: i32) -> (i32, i32) {
    %c0_i32 = arith.constant 0 : i32
    %c0_i32_0 = arith.constant 0 : i32
    %c0_i32_1 = arith.constant 0 : i32
    return %c0_i32, %c0_i32_0 : i32, i32
  }
  func.func @transform_3(%arg0: i32) -> (i32, i32) {
    %c0_i32 = arith.constant 0 : i32
    %c0_i32_0 = arith.constant 0 : i32
    %c0_i32_1 = arith.constant 0 : i32
    return %c0_i32, %c0_i32_0 : i32, i32
  }
  func.func @transform_4(%arg0: i32) -> (i32, i32) {
    %c0_i32 = arith.constant 0 : i32
    %c0_i32_0 = arith.constant 0 : i32
    %c0_i32_1 = arith.constant 0 : i32
    return %c0_i32, %c0_i32_0 : i32, i32
  }
  func.func @transform_5(%arg0: i32) -> (i32, i32) {
    %c0_i32 = arith.constant 0 : i32
    %c0_i32_0 = arith.constant 0 : i32
    %c0_i32_1 = arith.constant 0 : i32
    return %c0_i32, %c0_i32_0 : i32, i32
  }
  func.func @transform_6(%arg0: i32) -> (i32, i32) {
    %c0_i32 = arith.constant 0 : i32
    %c0_i32_0 = arith.constant 0 : i32
    %c0_i32_1 = arith.constant 0 : i32
    return %c0_i32, %c0_i32_0 : i32, i32
  }
  func.func @transform_7(%arg0: i32) -> (i32, i32, i32) {
    %c0_i32 = arith.constant 0 : i32
    %c0_i32_0 = arith.constant 0 : i32
    %c0_i32_1 = arith.constant 0 : i32
    %c0_i32_2 = arith.constant 0 : i32
    return %c0_i32, %c0_i32_0, %c0_i32_1 : i32, i32, i32
  }
  func.func @transform_8(%arg0: i32) -> (i32, i32) {
    %c0_i32 = arith.constant 0 : i32
    %c0_i32_0 = arith.constant 0 : i32
    %c0_i32_1 = arith.constant 0 : i32
    return %c0_i32, %c0_i32_0 : i32, i32
  }
  func.func @transform_9(%arg0: i32) -> (i32, i32) {
    %c0_i32 = arith.constant 0 : i32
    %c0_i32_0 = arith.constant 0 : i32
    %c0_i32_1 = arith.constant 0 : i32
    return %c0_i32, %c0_i32_0 : i32, i32
  }
  func.func @transform_10(%arg0: i32) -> (i32, i32) {
    %c0_i32 = arith.constant 0 : i32
    %c0_i32_0 = arith.constant 0 : i32
    %c0_i32_1 = arith.constant 0 : i32
    return %c0_i32, %c0_i32_0 : i32, i32
  }
  func.func @transform_11(%arg0: i32) -> (i32, i32) {
    %c0_i32 = arith.constant 0 : i32
    %c0_i32_0 = arith.constant 0 : i32
    %c0_i32_1 = arith.constant 0 : i32
    return %c0_i32, %c0_i32_0 : i32, i32
  }
  func.func @transform_12(%arg0: i32) -> (i32, i32) {
    %c0_i32 = arith.constant 0 : i32
    %c0_i32_0 = arith.constant 0 : i32
    %c0_i32_1 = arith.constant 0 : i32
    return %c0_i32, %c0_i32_0 : i32, i32
  }
  func.func @transform_13(%arg0: i32) -> (i32, i32) {
    %c0_i32 = arith.constant 0 : i32
    %c0_i32_0 = arith.constant 0 : i32
    %c0_i32_1 = arith.constant 0 : i32
    return %c0_i32, %c0_i32_0 : i32, i32
  }
  func.func @transform_14(%arg0: i32) -> (i32, i32) {
    %c0_i32 = arith.constant 0 : i32
    %c0_i32_0 = arith.constant 0 : i32
    %c0_i32_1 = arith.constant 0 : i32
    return %c0_i32, %c0_i32_0 : i32, i32
  }
  func.func @transform_15(%arg0: i32) -> (i32, i32) {
    %c0_i32 = arith.constant 0 : i32
    %c0_i32_0 = arith.constant 0 : i32
    %c0_i32_1 = arith.constant 0 : i32
    return %c0_i32, %c0_i32_0 : i32, i32
  }
  func.func @transform_16(%arg0: i32) -> (i32, i32) {
    %c0_i32 = arith.constant 0 : i32
    %c0_i32_0 = arith.constant 0 : i32
    %c0_i32_1 = arith.constant 0 : i32
    return %c0_i32, %c0_i32_0 : i32, i32
  }
  func.func @transform_17(%arg0: i32) -> (i32, i32) {
    %c0_i32 = arith.constant 0 : i32
    %c0_i32_0 = arith.constant 0 : i32
    return %arg0, %c0_i32 : i32, i32
  }
}

</mosaic_0001>

<llo_original>
// kernel: tiny_cnn_forward.1
$region0: #{tiny_cnn_forward.1}
  #allocation0 [shape = 'u32[]', space=smem, size = 0x4, offset = 0x4, fixed_abs, tag = 'smem constant byte address 0x4 - core index']
  #allocation1 [shape = 'u32[72,128]{1,0:T(1,128)}', space=vmem, size = 0x9000, scoped, tag = 'internal scratch']
  #allocation2 [shape = 'f32[8,32,96]{2,1,0:T(8,128)}', space=vmem, size = 0x20000, scoped, tag = 'scratch operand']
  #allocation3 [shape = 'f32[8,18,128]{2,1,0:T(8,128)}', space=vmem, size = 0x18000, scoped, tag = 'scratch operand']
  %s0 = inlined_call_operand.hbm [shape: f32[16,32,32], index: 0, kind: input, shape index: {}]
  %s1 = inlined_call_operand.hbm [shape: bf16[96,256], index: 1, kind: input, shape index: {}]
  %s2 = inlined_call_operand.vmem [shape: f32[1,256], index: 2, kind: input, shape index: {}]
  %s3 = inlined_call_operand.hbm [shape: bf16[128,256], index: 3, kind: input, shape index: {}]
  %s4 = inlined_call_operand.hbm [shape: bf16[128,256], index: 4, kind: input, shape index: {}]
  %s5 = inlined_call_operand.hbm [shape: bf16[256,128], index: 5, kind: input, shape index: {}]
  %s6 = inlined_call_operand.hbm [shape: bf16[256,128], index: 6, kind: input, shape index: {}]
  %s7 = inlined_call_operand.hbm [shape: bf16[3,128,256], index: 7, kind: input, shape index: {}]
  %s8 = inlined_call_operand.vmem [shape: f32[1,256], index: 8, kind: input, shape index: {}]
  %s9 = inlined_call_operand.hbm [shape: bf16[64,128], index: 9, kind: input, shape index: {}]
  %s10 = inlined_call_operand.hbm [shape: bf16[64,128], index: 10, kind: input, shape index: {}]
  %s11 = inlined_call_operand.hbm [shape: bf16[256,128], index: 11, kind: input, shape index: {}]
  %s12 = inlined_call_operand.hbm [shape: bf16[256,128], index: 12, kind: input, shape index: {}]
  %s13 = inlined_call_operand.hbm [shape: bf16[128,1024], index: 13, kind: input, shape index: {}]
  %s14 = inlined_call_operand.vmem [shape: f32[1,64], index: 14, kind: input, shape index: {}]
  %s15 = inlined_call_operand.hbm [shape: bf16[64,128], index: 15, kind: input, shape index: {}]
  %s16 = inlined_call_operand.vmem [shape: f32[1,128], index: 16, kind: input, shape index: {}]
  %s17 = inlined_call_operand.hbm [shape: f32[16,128], index: 17, kind: output, shape index: {}]
  %s18 = sld [smem:[#allocation0]]
  $region153: #{tiny_cnn_forward.1} parent=0
    _
  %s20 = ssub.s32 1, %s18
  %s21 = scalar_select 0, %s20, %s18
  $region1: #{tiny_cnn_forward.1} parent=0
    #allocation4 [shape = 'u8[262144]{0}', space=vmem, size = 0x40000, scoped, tag = 'input window, operand 0']
    #allocation5 [shape = 's32[2]{0}', space=sflag, size = 0x8, scoped, tag = 'scoped memory for tiny_cnn_forward.1']
    #allocation6 [shape = 's32[2]{0}', space=sflag, size = 0x8, scoped, tag = 'scoped memory for tiny_cnn_forward.1']
    #allocation7 [shape = 'u8[49152]{0}', space=vmem, size = 0xc000, scoped, tag = 'input window, operand 1, single buffered']
    #allocation8 [shape = 's32[1]{0}', space=sflag, size = 0x4, scoped, tag = 'scoped memory for tiny_cnn_forward.1']
    #allocation9 [shape = 'u8[65536]{0}', space=vmem, size = 0x10000, scoped, tag = 'input window, operand 3, single buffered']
    #allocation10 [shape = 'u8[65536]{0}', space=vmem, size = 0x10000, scoped, tag = 'input window, operand 4, single buffered']
    #allocation11 [shape = 's32[1]{0}', space=sflag, size = 0x4, scoped, tag = 'scoped memory for tiny_cnn_forward.1']
    #allocation12 [shape = 'u8[65536]{0}', space=vmem, size = 0x10000, scoped, tag = 'input window, operand 5, single buffered']
    #allocation13 [shape = 'u8[65536]{0}', space=vmem, size = 0x10000, scoped, tag = 'input window, operand 6, single buffered']
    #allocation14 [shape = 's32[1]{0}', space=sflag, size = 0x4, scoped, tag = 'scoped memory for tiny_cnn_forward.1']
    #allocation15 [shape = 'u8[196608]{0}', space=vmem, size = 0x30000, scoped, tag = 'input window, operand 7, single buffered']
    #allocation16 [shape = 'u8[16384]{0}', space=vmem, size = 0x4000, scoped, tag = 'input window, operand 9, single buffered']
    #allocation17 [shape = 's32[1]{0}', space=sflag, size = 0x4, scoped, tag = 'scoped memory for tiny_cnn_forward.1']
    #allocation18 [shape = 'u8[16384]{0}', space=vmem, size = 0x4000, scoped, tag = 'input window, operand 10, single buffered']
    #allocation19 [shape = 'u8[65536]{0}', space=vmem, size = 0x10000, scoped, tag = 'input window, operand 11, single buffered']
    #allocation20 [shape = 's32[1]{0}', space=sflag, size = 0x4, scoped, tag = 'scoped memory for tiny_cnn_forward.1']
    #allocation21 [shape = 'u8[65536]{0}', space=vmem, size = 0x10000, scoped, tag = 'input window, operand 12, single buffered']
    #allocation22 [shape = 'u8[262144]{0}', space=vmem, size = 0x40000, scoped, tag = 'input window, operand 13, single buffered']
    #allocation23 [shape = 's32[1]{0}', space=sflag, size = 0x4, scoped, tag = 'scoped memory for tiny_cnn_forward.1']
    #allocation24 [shape = 'u8[16384]{0}', space=vmem, size = 0x4000, scoped, tag = 'input window, operand 15, single buffered']
    #allocation25 [shape = 'u8[8192]{0}', space=vmem, size = 0x2000, scoped, tag = 'output window, operand 0']
    %22 = vsyncpa [#allocation5], 0
    %s23 = scalar_lea.sflag [#allocation5], 1
    %24 = vsyncpa %s23, 0
    %25 = vsyncpa [#allocation8], 0
    %26 = vsyncpa [#allocation11], 0
    %27 = vsyncpa [#allocation14], 0
    %28 = vsyncpa [#allocation17], 0
    %29 = vsyncpa [#allocation20], 0
    %30 = vsyncpa [#allocation23], 0
    %31 = vsyncpa [#allocation6], 0
    %s32 = scalar_lea.sflag [#allocation6], 1
    %33 = vsyncpa %s32, 0
    loop: start=0, step=1, limit=4
    $region2: #{tiny_cnn_forward.1} parent=1 // loop_pre_header
      _
    $region3: #{tiny_cnn_forward.1} parent=1 // loop_header
      %s35 = sphi 0, %s39
      %p36 = scmp.ge.s32.totalorder %s35, 4
      %s45 = sphi 0, %s47
      %s48 = sphi 0, %s45
      %s49 = sphi 0, %s48
      %s65 = sphi 0, %s49
      %s69 = sphi 0, %s69
      %s71 = sphi 0, %s69
      %s72 = sphi 0, %s71
      %s86 = sphi 0, %s72
      %s90 = sphi 0, %s90
      %s92 = sphi 0, %s90
      %s93 = sphi 0, %s92
      %s107 = sphi 0, %s93
      %s111 = sphi 0, %s111
      %s113 = sphi 0, %s111
      %s114 = sphi 0, %s113
      %s128 = sphi 0, %s114
      %s132 = sphi 0, %s132
      %s134 = sphi 0, %s132
      %s135 = sphi 0, %s134
      %s149 = sphi 0, %s135
      %s153 = sphi 0, %s153
      %s155 = sphi 0, %s153
      %s156 = sphi 0, %s155
      %s170 = sphi 0, %s156
      %s174 = sphi 0, %s174
      %s176 = sphi 0, %s174
      %s177 = sphi 0, %s176
      %s191 = sphi 0, %s177
      %s195 = sphi 0, %s195
      %s197 = sphi 0, %s195
      %s198 = sphi 0, %s197
      %s212 = sphi 0, %s198
      %s216 = sphi 0, %s216
      %s218 = sphi 0, %s216
      %s219 = sphi 0, %s218
      %s233 = sphi 0, %s219
      %s237 = sphi 0, %s237
      %s239 = sphi 0, %s237
      %s240 = sphi 0, %s239
      %s254 = sphi 0, %s240
      %s258 = sphi 0, %s258
      %s260 = sphi 0, %s258
      %s261 = sphi 0, %s260
      %s275 = sphi 0, %s261
      %s279 = sphi 0, %s279
      %s281 = sphi 0, %s279
      %s282 = sphi 0, %s281
      %s296 = sphi 0, %s282
      %s300 = sphi 0, %s300
      %s302 = sphi 0, %s300
      %s303 = sphi 0, %s302
      %s317 = sphi 0, %s303
      %s321 = sphi 0, %s321
      %s323 = sphi 0, %s321
      %s324 = sphi 0, %s323
      %s338 = sphi 0, %s324
      %s342 = sphi 0, %s342
      %s344 = sphi 0, %s342
      %s345 = sphi 0, %s344
      %s359 = sphi 0, %s345
      %s363 = sphi 0, %s363
      %s365 = sphi 0, %s363
      %s366 = sphi 0, %s365
      %s380 = sphi 0, %s366
      %s384 = sphi 0, %s384
      %s386 = sphi 0, %s384
      %s387 = sphi 0, %s386
      %s401 = sphi 0, %s387
      %s407 = sphi 0, %s409
      %s410 = sphi 0, %s407
      %s411 = sphi 0, %s410
      %s427 = sphi 0, %s411
    $region4: #{tiny_cnn_forward.1} parent=1 // loop_header_branch
      %38 = sbr.rel (%p36) target = $region8
    $region5: #{tiny_cnn_forward.1} parent=1 // loop_body
      %s40 = ssub.s32 %s35, 1
      %s41 = ssub.s32 %s35, 2
      %s42 = sadd.s32 %s35, 1
      %s43 = ssub.s32 %s35, %s42
      %p44 = scmp.eq.s32.totalorder %s43, 0
      %s46 = sadd.s32 %s45, 1
      %s47 = scalar_select %p44, %s45, %s46
      %p50 = pneg %p44
      %p51 = scmp.eq.s32.totalorder %s35, 1
      %p52 = por %p50, %p51
      %p53 = scmp.ne.s32.totalorder %s45, %s48
      %p54 = scmp.eq.s32.totalorder %s35, 0
      %p55 = por %p53, %p54
      %p56 = scmp.ne.s32.totalorder %s45, %s48
      %p57 = scmp.eq.s32.totalorder %s40, 1
      %p58 = por %p56, %p57
      %p59 = scmp.ne.s32.totalorder %s48, %s49
      %p60 = scmp.eq.s32.totalorder %s40, 0
      %p61 = por %p59, %p60
      %p62 = scmp.ne.s32.totalorder %s48, %s49
      %p63 = scmp.eq.s32.totalorder %s41, 1
      %p64 = por %p62, %p63
      %p66 = scmp.ne.s32.totalorder %s49, %s65
      %p67 = scmp.eq.s32.totalorder %s41, 0
      %p68 = por %p66, %p67
      %s70 = sadd.s32 %s69, 1
      %p73 = scmp.eq.s32.totalorder %s35, 1
      %p74 = scmp.ne.s32.totalorder %s69, %s71
      %p75 = scmp.eq.s32.totalorder %s35, 0
      %p76 = por %p74, %p75
      %p77 = scmp.ne.s32.totalorder %s69, %s71
      %p78 = scmp.eq.s32.totalorder %s40, 1
      %p79 = por %p77, %p78
      %p80 = scmp.ne.s32.totalorder %s71, %s72
      %p81 = scmp.eq.s32.totalorder %s40, 0
      %p82 = por %p80, %p81
      %p83 = scmp.ne.s32.totalorder %s71, %s72
      %p84 = scmp.eq.s32.totalorder %s41, 1
      %p85 = por %p83, %p84
      %p87 = scmp.ne.s32.totalorder %s72, %s86
      %p88 = scmp.eq.s32.totalorder %s41, 0
      %p89 = por %p87, %p88
      %s91 = sadd.s32 %s90, 1
      %p94 = scmp.eq.s32.totalorder %s35, 1
      %p95 = scmp.ne.s32.totalorder %s90, %s92
      %p96 = scmp.eq.s32.totalorder %s35, 0
      %p97 = por %p95, %p96
      %p98 = scmp.ne.s32.totalorder %s90, %s92
      %p99 = scmp.eq.s32.totalorder %s40, 1
      %p100 = por %p98, %p99
      %p101 = scmp.ne.s32.totalorder %s92, %s93
      %p102 = scmp.eq.s32.totalorder %s40, 0
      %p103 = por %p101, %p102
      %p104 = scmp.ne.s32.totalorder %s92, %s93
      %p105 = scmp.eq.s32.totalorder %s41, 1
      %p106 = por %p104, %p105
      %p108 = scmp.ne.s32.totalorder %s93, %s107
      %p109 = scmp.eq.s32.totalorder %s41, 0
      %p110 = por %p108, %p109
      %s112 = sadd.s32 %s111, 1
      %p115 = scmp.eq.s32.totalorder %s35, 1
      %p116 = scmp.ne.s32.totalorder %s111, %s113
      %p117 = scmp.eq.s32.totalorder %s35, 0
      %p118 = por %p116, %p117
      %p119 = scmp.ne.s32.totalorder %s111, %s113
      %p120 = scmp.eq.s32.totalorder %s40, 1
      %p121 = por %p119, %p120
      %p122 = scmp.ne.s32.totalorder %s113, %s114
      %p123 = scmp.eq.s32.totalorder %s40, 0
      %p124 = por %p122, %p123
      %p125 = scmp.ne.s32.totalorder %s113, %s114
      %p126 = scmp.eq.s32.totalorder %s41, 1
      %p127 = por %p125, %p126
      %p129 = scmp.ne.s32.totalorder %s114, %s128
      %p130 = scmp.eq.s32.totalorder %s41, 0
      %p131 = por %p129, %p130
      %s133 = sadd.s32 %s132, 1
      %p136 = scmp.eq.s32.totalorder %s35, 1
      %p137 = scmp.ne.s32.totalorder %s132, %s134
      %p138 = scmp.eq.s32.totalorder %s35, 0
      %p139 = por %p137, %p138
      %p140 = scmp.ne.s32.totalorder %s132, %s134
      %p141 = scmp.eq.s32.totalorder %s40, 1
      %p142 = por %p140, %p141
      %p143 = scmp.ne.s32.totalorder %s134, %s135
      %p144 = scmp.eq.s32.totalorder %s40, 0
      %p145 = por %p143, %p144
      %p146 = scmp.ne.s32.totalorder %s134, %s135
      %p147 = scmp.eq.s32.totalorder %s41, 1
      %p148 = por %p146, %p147
      %p150 = scmp.ne.s32.totalorder %s135, %s149
      %p151 = scmp.eq.s32.totalorder %s41, 0
      %p152 = por %p150, %p151
      %s154 = sadd.s32 %s153, 1
      %p157 = scmp.eq.s32.totalorder %s35, 1
      %p158 = scmp.ne.s32.totalorder %s153, %s155
      %p159 = scmp.eq.s32.totalorder %s35, 0
      %p160 = por %p158, %p159
      %p161 = scmp.ne.s32.totalorder %s153, %s155
      %p162 = scmp.eq.s32.totalorder %s40, 1
      %p163 = por %p161, %p162
      %p164 = scmp.ne.s32.totalorder %s155, %s156
      %p165 = scmp.eq.s32.totalorder %s40, 0
      %p166 = por %p164, %p165
      %p167 = scmp.ne.s32.totalorder %s155, %s156
      %p168 = scmp.eq.s32.totalorder %s41, 1
      %p169 = por %p167, %p168
      %p171 = scmp.ne.s32.totalorder %s156, %s170
      %p172 = scmp.eq.s32.totalorder %s41, 0
      %p173 = por %p171, %p172
      %s175 = sadd.s32 %s174, 1
      %p178 = scmp.eq.s32.totalorder %s35, 1
      %p179 = scmp.ne.s32.totalorder %s174, %s176
      %p180 = scmp.eq.s32.totalorder %s35, 0
      %p181 = por %p179, %p180
      %p182 = scmp.ne.s32.totalorder %s174, %s176
      %p183 = scmp.eq.s32.totalorder %s40, 1
      %p184 = por %p182, %p183
      %p185 = scmp.ne.s32.totalorder %s176, %s177
      %p186 = scmp.eq.s32.totalorder %s40, 0
      %p187 = por %p185, %p186
      %p188 = scmp.ne.s32.totalorder %s176, %s177
      %p189 = scmp.eq.s32.totalorder %s41, 1
      %p190 = por %p188, %p189
      %p192 = scmp.ne.s32.totalorder %s177, %s191
      %p193 = scmp.eq.s32.totalorder %s41, 0
      %p194 = por %p192, %p193
      %s196 = sadd.s32 %s195, 1
      %p199 = scmp.eq.s32.totalorder %s35, 1
      %p200 = scmp.ne.s32.totalorder %s195, %s197
      %p201 = scmp.eq.s32.totalorder %s35, 0
      %p202 = por %p200, %p201
      %p203 = scmp.ne.s32.totalorder %s195, %s197
      %p204 = scmp.eq.s32.totalorder %s40, 1
      %p205 = por %p203, %p204
      %p206 = scmp.ne.s32.totalorder %s197, %s198
      %p207 = scmp.eq.s32.totalorder %s40, 0
      %p208 = por %p206, %p207
      %p209 = scmp.ne.s32.totalorder %s197, %s198
      %p210 = scmp.eq.s32.totalorder %s41, 1
      %p211 = por %p209, %p210
      %p213 = scmp.ne.s32.totalorder %s198, %s212
      %p214 = scmp.eq.s32.totalorder %s41, 0
      %p215 = por %p213, %p214
      %s217 = sadd.s32 %s216, 1
      %p220 = scmp.eq.s32.totalorder %s35, 1
      %p221 = scmp.ne.s32.totalorder %s216, %s218
      %p222 = scmp.eq.s32.totalorder %s35, 0
      %p223 = por %p221, %p222
      %p224 = scmp.ne.s32.totalorder %s216, %s218
      %p225 = scmp.eq.s32.totalorder %s40, 1
      %p226 = por %p224, %p225
      %p227 = scmp.ne.s32.totalorder %s218, %s219
      %p228 = scmp.eq.s32.totalorder %s40, 0
      %p229 = por %p227, %p228
      %p230 = scmp.ne.s32.totalorder %s218, %s219
      %p231 = scmp.eq.s32.totalorder %s41, 1
      %p232 = por %p230, %p231
      %p234 = scmp.ne.s32.totalorder %s219, %s233
      %p235 = scmp.eq.s32.totalorder %s41, 0
      %p236 = por %p234, %p235
      %s238 = sadd.s32 %s237, 1
      %p241 = scmp.eq.s32.totalorder %s35, 1
      %p242 = scmp.ne.s32.totalorder %s237, %s239
      %p243 = scmp.eq.s32.totalorder %s35, 0
      %p244 = por %p242, %p243
      %p245 = scmp.ne.s32.totalorder %s237, %s239
      %p246 = scmp.eq.s32.totalorder %s40, 1
      %p247 = por %p245, %p246
      %p248 = scmp.ne.s32.totalorder %s239, %s240
      %p249 = scmp.eq.s32.totalorder %s40, 0
      %p250 = por %p248, %p249
      %p251 = scmp.ne.s32.totalorder %s239, %s240
      %p252 = scmp.eq.s32.totalorder %s41, 1
      %p253 = por %p251, %p252
      %p255 = scmp.ne.s32.totalorder %s240, %s254
      %p256 = scmp.eq.s32.totalorder %s41, 0
      %p257 = por %p255, %p256
      %s259 = sadd.s32 %s258, 1
      %p262 = scmp.eq.s32.totalorder %s35, 1
      %p263 = scmp.ne.s32.totalorder %s258, %s260
      %p264 = scmp.eq.s32.totalorder %s35, 0
      %p265 = por %p263, %p264
      %p266 = scmp.ne.s32.totalorder %s258, %s260
      %p267 = scmp.eq.s32.totalorder %s40, 1
      %p268 = por %p266, %p267
      %p269 = scmp.ne.s32.totalorder %s260, %s261
      %p270 = scmp.eq.s32.totalorder %s40, 0
      %p271 = por %p269, %p270
      %p272 = scmp.ne.s32.totalorder %s260, %s261
      %p273 = scmp.eq.s32.totalorder %s41, 1
      %p274 = por %p272, %p273
      %p276 = scmp.ne.s32.totalorder %s261, %s275
      %p277 = scmp.eq.s32.totalorder %s41, 0
      %p278 = por %p276, %p277
      %s280 = sadd.s32 %s279, 1
      %p283 = scmp.eq.s32.totalorder %s35, 1
      %p284 = scmp.ne.s32.totalorder %s279, %s281
      %p285 = scmp.eq.s32.totalorder %s35, 0
      %p286 = por %p284, %p285
      %p287 = scmp.ne.s32.totalorder %s279, %s281
      %p288 = scmp.eq.s32.totalorder %s40, 1
      %p289 = por %p287, %p288
      %p290 = scmp.ne.s32.totalorder %s281, %s282
      %p291 = scmp.eq.s32.totalorder %s40, 0
      %p292 = por %p290, %p291
      %p293 = scmp.ne.s32.totalorder %s281, %s282
      %p294 = scmp.eq.s32.totalorder %s41, 1
      %p295 = por %p293, %p294
      %p297 = scmp.ne.s32.totalorder %s282, %s296
      %p298 = scmp.eq.s32.totalorder %s41, 0
      %p299 = por %p297, %p298
      %s301 = sadd.s32 %s300, 1
      %p304 = scmp.eq.s32.totalorder %s35, 1
      %p305 = scmp.ne.s32.totalorder %s300, %s302
      %p306 = scmp.eq.s32.totalorder %s35, 0
      %p307 = por %p305, %p306
      %p308 = scmp.ne.s32.totalorder %s300, %s302
      %p309 = scmp.eq.s32.totalorder %s40, 1
      %p310 = por %p308, %p309
      %p311 = scmp.ne.s32.totalorder %s302, %s303
      %p312 = scmp.eq.s32.totalorder %s40, 0
      %p313 = por %p311, %p312
      %p314 = scmp.ne.s32.totalorder %s302, %s303
      %p315 = scmp.eq.s32.totalorder %s41, 1
      %p316 = por %p314, %p315
      %p318 = scmp.ne.s32.totalorder %s303, %s317
      %p319 = scmp.eq.s32.totalorder %s41, 0
      %p320 = por %p318, %p319
      %s322 = sadd.s32 %s321, 1
      %p325 = scmp.eq.s32.totalorder %s35, 1
      %p326 = scmp.ne.s32.totalorder %s321, %s323
      %p327 = scmp.eq.s32.totalorder %s35, 0
      %p328 = por %p326, %p327
      %p329 = scmp.ne.s32.totalorder %s321, %s323
      %p330 = scmp.eq.s32.totalorder %s40, 1
      %p331 = por %p329, %p330
      %p332 = scmp.ne.s32.totalorder %s323, %s324
      %p333 = scmp.eq.s32.totalorder %s40, 0
      %p334 = por %p332, %p333
      %p335 = scmp.ne.s32.totalorder %s323, %s324
      %p336 = scmp.eq.s32.totalorder %s41, 1
      %p337 = por %p335, %p336
      %p339 = scmp.ne.s32.totalorder %s324, %s338
      %p340 = scmp.eq.s32.totalorder %s41, 0
      %p341 = por %p339, %p340
      %s343 = sadd.s32 %s342, 1
      %p346 = scmp.eq.s32.totalorder %s35, 1
      %p347 = scmp.ne.s32.totalorder %s342, %s344
      %p348 = scmp.eq.s32.totalorder %s35, 0
      %p349 = por %p347, %p348
      %p350 = scmp.ne.s32.totalorder %s342, %s344
      %p351 = scmp.eq.s32.totalorder %s40, 1
      %p352 = por %p350, %p351
      %p353 = scmp.ne.s32.totalorder %s344, %s345
      %p354 = scmp.eq.s32.totalorder %s40, 0
      %p355 = por %p353, %p354
      %p356 = scmp.ne.s32.totalorder %s344, %s345
      %p357 = scmp.eq.s32.totalorder %s41, 1
      %p358 = por %p356, %p357
      %p360 = scmp.ne.s32.totalorder %s345, %s359
      %p361 = scmp.eq.s32.totalorder %s41, 0
      %p362 = por %p360, %p361
      %s364 = sadd.s32 %s363, 1
      %p367 = scmp.eq.s32.totalorder %s35, 1
      %p368 = scmp.ne.s32.totalorder %s363, %s365
      %p369 = scmp.eq.s32.totalorder %s35, 0
      %p370 = por %p368, %p369
      %p371 = scmp.ne.s32.totalorder %s363, %s365
      %p372 = scmp.eq.s32.totalorder %s40, 1
      %p373 = por %p371, %p372
      %p374 = scmp.ne.s32.totalorder %s365, %s366
      %p375 = scmp.eq.s32.totalorder %s40, 0
      %p376 = por %p374, %p375
      %p377 = scmp.ne.s32.totalorder %s365, %s366
      %p378 = scmp.eq.s32.totalorder %s41, 1
      %p379 = por %p377, %p378
      %p381 = scmp.ne.s32.totalorder %s366, %s380
      %p382 = scmp.eq.s32.totalorder %s41, 0
      %p383 = por %p381, %p382
      %s385 = sadd.s32 %s384, 1
      %p388 = scmp.eq.s32.totalorder %s35, 1
      %p389 = scmp.ne.s32.totalorder %s384, %s386
      %p390 = scmp.eq.s32.totalorder %s35, 0
      %p391 = por %p389, %p390
      %p392 = scmp.ne.s32.totalorder %s384, %s386
      %p393 = scmp.eq.s32.totalorder %s40, 1
      %p394 = por %p392, %p393
      %p395 = scmp.ne.s32.totalorder %s386, %s387
      %p396 = scmp.eq.s32.totalorder %s40, 0
      %p397 = por %p395, %p396
      %p398 = scmp.ne.s32.totalorder %s386, %s387
      %p399 = scmp.eq.s32.totalorder %s41, 1
      %p400 = por %p398, %p399
      %p402 = scmp.ne.s32.totalorder %s387, %s401
      %p403 = scmp.eq.s32.totalorder %s41, 0
      %p404 = por %p402, %p403
      %s405 = ssub.s32 %s35, %s42
      %p406 = scmp.eq.s32.totalorder %s405, 0
      %s408 = sadd.s32 %s407, 1
      %s409 = scalar_select %p406, %s407, %s408
      %p412 = pneg %p406
      %p413 = scmp.eq.s32.totalorder %s35, 1
      %p414 = por %p412, %p413
      %p415 = scmp.ne.s32.totalorder %s407, %s410
      %p416 = scmp.eq.s32.totalorder %s35, 0
      %p417 = por %p415, %p416
      %p418 = scmp.ne.s32.totalorder %s407, %s410
      %p419 = scmp.eq.s32.totalorder %s40, 1
      %p420 = por %p418, %p419
      %p421 = scmp.ne.s32.totalorder %s410, %s411
      %p422 = scmp.eq.s32.totalorder %s40, 0
      %p423 = por %p421, %p422
      %p424 = scmp.ne.s32.totalorder %s410, %s411
      %p425 = scmp.eq.s32.totalorder %s41, 1
      %p426 = por %p424, %p425
      %p428 = scmp.ne.s32.totalorder %s411, %s427
      %p429 = scmp.eq.s32.totalorder %s41, 0
      %p430 = por %p428, %p429
      %p431 = scmp.le.s32.totalorder 1, %s35
      %p432 = scmp.lt.s32.totalorder %s35, 3
      %p433 = pnand %p431, %p432
      %p434 = pneg %p433
      // Predicated region
      $region9: #{tiny_cnn_forward.1} parent=5 // pred_check
        _
      $region10: #{tiny_cnn_forward.1} parent=5 // pred_check_branch
        %436 = sbr.rel (%p433) target = $region12
      $region11: #{tiny_cnn_forward.1} parent=5 // pred_region
        %s437 = ssub.s32 %s35, 1
        // Predicated region
        $region13: #{tiny_cnn_forward.1} parent=11 // pred_check
          %p438 = pneg %p82
        $region14: #{tiny_cnn_forward.1} parent=11 // pred_check_branch
          %440 = sbr.rel (%p438) target = $region16
        $region15: #{tiny_cnn_forward.1} parent=11 // pred_region
          %442 = vsyncadd [#allocation8], 0
          %s443 = sshll.u32 %s1, 4
          %s444 = int_to_ptr.hbm [resolvable:$true] %s443
          %s445 = sshll.u32 [#allocation7], 4
          %s446 = int_to_ptr.vmem [resolvable:$true] %s445
          %451 = dma.hbm_to_vmem [thread:$0]  %s444, 1536, %s446, [#allocation8], 128, 128, 8
        $region16: #{tiny_cnn_forward.1} parent=11 // pred_fallthru
          _
        // Predicated region
        $region17: #{tiny_cnn_forward.1} parent=11 // pred_check
          %p452 = pneg %p103
        $region18: #{tiny_cnn_forward.1} parent=11 // pred_check_branch
          %454 = sbr.rel (%p452) target = $region20
        $region19: #{tiny_cnn_forward.1} parent=11 // pred_region
          _
        $region20: #{tiny_cnn_forward.1} parent=11 // pred_fallthru
          _
        // Predicated region
        $region21: #{tiny_cnn_forward.1} parent=11 // pred_check
          %p455 = pneg %p124
        $region22: #{tiny_cnn_forward.1} parent=11 // pred_check_branch
          %457 = sbr.rel (%p455) target = $region24
        $region23: #{tiny_cnn_forward.1} parent=11 // pred_region
          %459 = vsyncadd [#allocation8], 0
          %s460 = sshll.u32 %s3, 4
          %s461 = int_to_ptr.hbm [resolvable:$true] %s460
          %s462 = sshll.u32 [#allocation9], 4
          %s463 = int_to_ptr.vmem [resolvable:$true] %s462
          %468 = dma.hbm_to_vmem [thread:$0]  %s461, 2048, %s463, [#allocation8], 128, 128, 8
        $region24: #{tiny_cnn_forward.1} parent=11 // pred_fallthru
          _
        // Predicated region
        $region25: #{tiny_cnn_forward.1} parent=11 // pred_check
          %p469 = pneg %p145
        $region26: #{tiny_cnn_forward.1} parent=11 // pred_check_branch
          %471 = sbr.rel (%p469) target = $region28
        $region27: #{tiny_cnn_forward.1} parent=11 // pred_region
          %473 = vsyncadd [#allocation11], 0
          %s474 = sshll.u32 %s4, 4
          %s475 = int_to_ptr.hbm [resolvable:$true] %s474
          %s476 = sshll.u32 [#allocation10], 4
          %s477 = int_to_ptr.vmem [resolvable:$true] %s476
          %482 = dma.hbm_to_vmem [thread:$0]  %s475, 2048, %s477, [#allocation11], 128, 128, 8
        $region28: #{tiny_cnn_forward.1} parent=11 // pred_fallthru
          _
        // Predicated region
        $region29: #{tiny_cnn_forward.1} parent=11 // pred_check
          %p483 = pneg %p166
        $region30: #{tiny_cnn_forward.1} parent=11 // pred_check_branch
          %485 = sbr.rel (%p483) target = $region32
        $region31: #{tiny_cnn_forward.1} parent=11 // pred_region
          %487 = vsyncadd [#allocation11], 0
          %s488 = sshll.u32 %s5, 4
          %s489 = int_to_ptr.hbm [resolvable:$true] %s488
          %s490 = sshll.u32 [#allocation12], 4
          %s491 = int_to_ptr.vmem [resolvable:$true] %s490
          %496 = dma.hbm_to_vmem [thread:$0]  %s489, 2048, %s491, [#allocation11], 64, 64, 4
        $region32: #{tiny_cnn_forward.1} parent=11 // pred_fallthru
          _
        // Predicated region
        $region33: #{tiny_cnn_forward.1} parent=11 // pred_check
          %p497 = pneg %p187
        $region34: #{tiny_cnn_forward.1} parent=11 // pred_check_branch
          %499 = sbr.rel (%p497) target = $region36
        $region35: #{tiny_cnn_forward.1} parent=11 // pred_region
          %501 = vsyncadd [#allocation14], 0
          %s502 = sshll.u32 %s6, 4
          %s503 = int_to_ptr.hbm [resolvable:$true] %s502
          %s504 = sshll.u32 [#allocation13], 4
          %s505 = int_to_ptr.vmem [resolvable:$true] %s504
          %510 = dma.hbm_to_vmem [thread:$0]  %s503, 2048, %s505, [#allocation14], 64, 64, 4
        $region36: #{tiny_cnn_forward.1} parent=11 // pred_fallthru
          _
        // Predicated region
        $region37: #{tiny_cnn_forward.1} parent=11 // pred_check
          %p511 = pneg %p208
        $region38: #{tiny_cnn_forward.1} parent=11 // pred_check_branch
          %513 = sbr.rel (%p511) target = $region40
        $region39: #{tiny_cnn_forward.1} parent=11 // pred_region
          %515 = vsyncadd [#allocation14], 0
          %s516 = sshll.u32 %s7, 4
          %s517 = int_to_ptr.hbm [resolvable:$true] %s516
          %s518 = sshll.u32 [#allocation15], 4
          %s519 = int_to_ptr.vmem [resolvable:$true] %s518
          %524 = dma.hbm_to_vmem [thread:$0]  %s517, 6144, %s519, [#allocation14], 128, 128, 8
        $region40: #{tiny_cnn_forward.1} parent=11 // pred_fallthru
          _
        // Predicated region
        $region41: #{tiny_cnn_forward.1} parent=11 // pred_check
          %p525 = pneg %p229
        $region42: #{tiny_cnn_forward.1} parent=11 // pred_check_branch
          %527 = sbr.rel (%p525) target = $region44
        $region43: #{tiny_cnn_forward.1} parent=11 // pred_region
          _
        $region44: #{tiny_cnn_forward.1} parent=11 // pred_fallthru
          _
        // Predicated region
        $region45: #{tiny_cnn_forward.1} parent=11 // pred_check
          %p528 = pneg %p250
        $region46: #{tiny_cnn_forward.1} parent=11 // pred_check_branch
          %530 = sbr.rel (%p528) target = $region48
        $region47: #{tiny_cnn_forward.1} parent=11 // pred_region
          %532 = vsyncadd [#allocation17], 0
          %s533 = sshll.u32 %s9, 4
          %s534 = int_to_ptr.hbm [resolvable:$true] %s533
          %s535 = sshll.u32 [#allocation16], 4
          %s536 = int_to_ptr.vmem [resolvable:$true] %s535
          %541 = dma.hbm_to_vmem [thread:$0]  %s534, 512, %s536, [#allocation17], 64, 64, 4
        $region48: #{tiny_cnn_forward.1} parent=11 // pred_fallthru
          _
        // Predicated region
        $region49: #{tiny_cnn_forward.1} parent=11 // pred_check
          %p542 = pneg %p271
        $region50: #{tiny_cnn_forward.1} parent=11 // pred_check_branch
          %544 = sbr.rel (%p542) target = $region52
        $region51: #{tiny_cnn_forward.1} parent=11 // pred_region
          %546 = vsyncadd [#allocation17], 0
          %s547 = sshll.u32 %s10, 4
          %s548 = int_to_ptr.hbm [resolvable:$true] %s547
          %s549 = sshll.u32 [#allocation18], 4
          %s550 = int_to_ptr.vmem [resolvable:$true] %s549
          %555 = dma.hbm_to_vmem [thread:$0]  %s548, 512, %s550, [#allocation17], 64, 64, 4
        $region52: #{tiny_cnn_forward.1} parent=11 // pred_fallthru
          _
        // Predicated region
        $region53: #{tiny_cnn_forward.1} parent=11 // pred_check
          %p556 = pneg %p292
        $region54: #{tiny_cnn_forward.1} parent=11 // pred_check_branch
          %558 = sbr.rel (%p556) target = $region56
        $region55: #{tiny_cnn_forward.1} parent=11 // pred_region
          %560 = vsyncadd [#allocation20], 0
          %s561 = sshll.u32 %s11, 4
          %s562 = int_to_ptr.hbm [resolvable:$true] %s561
          %s563 = sshll.u32 [#allocation19], 4
          %s564 = int_to_ptr.vmem [resolvable:$true] %s563
          %569 = dma.hbm_to_vmem [thread:$0]  %s562, 2048, %s564, [#allocation20], 64, 64, 4
        $region56: #{tiny_cnn_forward.1} parent=11 // pred_fallthru
          _
        // Predicated region
        $region57: #{tiny_cnn_forward.1} parent=11 // pred_check
          %p570 = pneg %p313
        $region58: #{tiny_cnn_forward.1} parent=11 // pred_check_branch
          %572 = sbr.rel (%p570) target = $region60
        $region59: #{tiny_cnn_forward.1} parent=11 // pred_region
          %574 = vsyncadd [#allocation20], 0
          %s575 = sshll.u32 %s12, 4
          %s576 = int_to_ptr.hbm [resolvable:$true] %s575
          %s577 = sshll.u32 [#allocation21], 4
          %s578 = int_to_ptr.vmem [resolvable:$true] %s577
          %583 = dma.hbm_to_vmem [thread:$0]  %s576, 2048, %s578, [#allocation20], 64, 64, 4
        $region60: #{tiny_cnn_forward.1} parent=11 // pred_fallthru
          _
        // Predicated region
        $region61: #{tiny_cnn_forward.1} parent=11 // pred_check
          %p584 = pneg %p334
        $region62: #{tiny_cnn_forward.1} parent=11 // pred_check_branch
          %586 = sbr.rel (%p584) target = $region64
        $region63: #{tiny_cnn_forward.1} parent=11 // pred_region
          %588 = vsyncadd [#allocation23], 0
          %s589 = sshll.u32 %s13, 4
          %s590 = int_to_ptr.hbm [resolvable:$true] %s589
          %s591 = sshll.u32 [#allocation22], 4
          %s592 = int_to_ptr.vmem [resolvable:$true] %s591
          %597 = dma.hbm_to_vmem [thread:$0]  %s590, 8192, %s592, [#allocation23], 512, 512, 32
        $region64: #{tiny_cnn_forward.1} parent=11 // pred_fallthru
          _
        // Predicated region
        $region65: #{tiny_cnn_forward.1} parent=11 // pred_check
          %p598 = pneg %p355
        $region66: #{tiny_cnn_forward.1} parent=11 // pred_check_branch
          %600 = sbr.rel (%p598) target = $region68
        $region67: #{tiny_cnn_forward.1} parent=11 // pred_region
          _
        $region68: #{tiny_cnn_forward.1} parent=11 // pred_fallthru
          _
        // Predicated region
        $region69: #{tiny_cnn_forward.1} parent=11 // pred_check
          %p601 = pneg %p376
        $region70: #{tiny_cnn_forward.1} parent=11 // pred_check_branch
          %603 = sbr.rel (%p601) target = $region72
        $region71: #{tiny_cnn_forward.1} parent=11 // pred_region
          %605 = vsyncadd [#allocation23], 0
          %s606 = sshll.u32 %s15, 4
          %s607 = int_to_ptr.hbm [resolvable:$true] %s606
          %s608 = sshll.u32 [#allocation24], 4
          %s609 = int_to_ptr.vmem [resolvable:$true] %s608
          %614 = dma.hbm_to_vmem [thread:$0]  %s607, 512, %s609, [#allocation23], 64, 64, 4
        $region72: #{tiny_cnn_forward.1} parent=11 // pred_fallthru
          _
        // Predicated region
        $region73: #{tiny_cnn_forward.1} parent=11 // pred_check
          %p615 = pneg %p397
        $region74: #{tiny_cnn_forward.1} parent=11 // pred_check_branch
          %617 = sbr.rel (%p615) target = $region76
        $region75: #{tiny_cnn_forward.1} parent=11 // pred_region
          _
        $region76: #{tiny_cnn_forward.1} parent=11 // pred_fallthru
          _
      $region12: #{tiny_cnn_forward.1} parent=5 // pred_fallthru
        _
      %p618 = scmp.lt.s32.totalorder %s35, 2
      // Predicated region
      $region77: #{tiny_cnn_forward.1} parent=5 // pred_check
        %p619 = pneg %p618
      $region78: #{tiny_cnn_forward.1} parent=5 // pred_check_branch
        %621 = sbr.rel (%p619) target = $region80
      $region79: #{tiny_cnn_forward.1} parent=5 // pred_region
        // Predicated region
        $region81: #{tiny_cnn_forward.1} parent=79 // pred_check
          %p622 = pneg %p55
        $region82: #{tiny_cnn_forward.1} parent=79 // pred_check_branch
          %624 = sbr.rel (%p622) target = $region84
        $region83: #{tiny_cnn_forward.1} parent=79 // pred_region
          %s625 = sand.u32 %s45, 1
          %s626 = scalar_lea.sflag [#allocation5], %s625
          %s627 = sand.u32 %s45, 1
          %s628 = smul.addr %s627, 256
          %s629 = scalar_lea.vmem [#allocation4], %s628
          %s630 = smul.u32 8, %s35
          %632 = vsyncadd %s626, 0
          %s633 = smul.addr %s630, 4
          %s634 = smul.addr %s633, 8
          %s635 = scalar_lea.hbm %s0, %s634
          %s636 = sshll.u32 %s635, 4
          %s637 = int_to_ptr.hbm [resolvable:$true] %s636
          %s638 = sshll.u32 %s629, 4
          %s639 = int_to_ptr.vmem [resolvable:$true] %s638
          %644 = dma.hbm_to_vmem [thread:$0]  %s637, 4096, %s639, %s626, 128, 128, 8
        $region84: #{tiny_cnn_forward.1} parent=79 // pred_fallthru
          _
      $region80: #{tiny_cnn_forward.1} parent=5 // pred_fallthru
        _
      %p645 = scmp.le.s32.totalorder 1, %s35
      %p646 = scmp.lt.s32.totalorder %s35, 3
      %p647 = pnand %p645, %p646
      %p648 = pneg %p647
      // Predicated region
      $region85: #{tiny_cnn_forward.1} parent=5 // pred_check
        _
      $region86: #{tiny_cnn_forward.1} parent=5 // pred_check_branch
        %650 = sbr.rel (%p647) target = $region88
      $region87: #{tiny_cnn_forward.1} parent=5 // pred_region
        %s651 = ssub.s32 %s35, 1
        %s652 = sand.u32 %s48, 1
        %s653 = scalar_lea.sflag [#allocation5], %s652
        %s654 = sand.u32 %s48, 1
        %s655 = smul.addr %s654, 256
        %s656 = scalar_lea.vmem [#allocation4], %s655
        // Predicated region
        $region89: #{tiny_cnn_forward.1} parent=87 // pred_check
          %p657 = pneg %p61
        $region90: #{tiny_cnn_forward.1} parent=87 // pred_check_branch
          %659 = sbr.rel (%p657) target = $region92
        $region91: #{tiny_cnn_forward.1} parent=87 // pred_region
          %661 = dma.done %s653, 4096
        $region92: #{tiny_cnn_forward.1} parent=87 // pred_fallthru
          _
        // Predicated region
        $region93: #{tiny_cnn_forward.1} parent=87 // pred_check
          %p662 = pneg %p82
        $region94: #{tiny_cnn_forward.1} parent=87 // pred_check_branch
          %664 = sbr.rel (%p662) target = $region96
        $region95: #{tiny_cnn_forward.1} parent=87 // pred_region
          %666 = dma.done [#allocation8], 1536
        $region96: #{tiny_cnn_forward.1} parent=87 // pred_fallthru
          _
        // Predicated region
        $region97: #{tiny_cnn_forward.1} parent=87 // pred_check
          %p667 = pneg %p124
        $region98: #{tiny_cnn_forward.1} parent=87 // pred_check_branch
          %669 = sbr.rel (%p667) target = $region100
        $region99: #{tiny_cnn_forward.1} parent=87 // pred_region
          %671 = dma.done [#allocation8], 2048
        $region100: #{tiny_cnn_forward.1} parent=87 // pred_fallthru
          _
        // Predicated region
        $region101: #{tiny_cnn_forward.1} parent=87 // pred_check
          %p672 = pneg %p145
        $region102: #{tiny_cnn_forward.1} parent=87 // pred_check_branch
          %674 = sbr.rel (%p672) target = $region104
        $region103: #{tiny_cnn_forward.1} parent=87 // pred_region
          %676 = dma.done [#allocation11], 2048
        $region104: #{tiny_cnn_forward.1} parent=87 // pred_fallthru
          _
        // Predicated region
        $region105: #{tiny_cnn_forward.1} parent=87 // pred_check
          %p677 = pneg %p166
        $region106: #{tiny_cnn_forward.1} parent=87 // pred_check_branch
          %679 = sbr.rel (%p677) target = $region108
        $region107: #{tiny_cnn_forward.1} parent=87 // pred_region
          %681 = dma.done [#allocation11], 2048
        $region108: #{tiny_cnn_forward.1} parent=87 // pred_fallthru
          _
        // Predicated region
        $region109: #{tiny_cnn_forward.1} parent=87 // pred_check
          %p682 = pneg %p187
        $region110: #{tiny_cnn_forward.1} parent=87 // pred_check_branch
          %684 = sbr.rel (%p682) target = $region112
        $region111: #{tiny_cnn_forward.1} parent=87 // pred_region
          %686 = dma.done [#allocation14], 2048
        $region112: #{tiny_cnn_forward.1} parent=87 // pred_fallthru
          _
        // Predicated region
        $region113: #{tiny_cnn_forward.1} parent=87 // pred_check
          %p687 = pneg %p208
        $region114: #{tiny_cnn_forward.1} parent=87 // pred_check_branch
          %689 = sbr.rel (%p687) target = $region116
        $region115: #{tiny_cnn_forward.1} parent=87 // pred_region
          %691 = dma.done [#allocation14], 6144
        $region116: #{tiny_cnn_forward.1} parent=87 // pred_fallthru
          _
        // Predicated region
        $region117: #{tiny_cnn_forward.1} parent=87 // pred_check
          %p692 = pneg %p250
        $region118: #{tiny_cnn_forward.1} parent=87 // pred_check_branch
          %694 = sbr.rel (%p692) target = $region120
        $region119: #{tiny_cnn_forward.1} parent=87 // pred_region
          %696 = dma.done [#allocation17], 512
        $region120: #{tiny_cnn_forward.1} parent=87 // pred_fallthru
          _
        // Predicated region
        $region121: #{tiny_cnn_forward.1} parent=87 // pred_check
          %p697 = pneg %p271
        $region122: #{tiny_cnn_forward.1} parent=87 // pred_check_branch
          %699 = sbr.rel (%p697) target = $region124
        $region123: #{tiny_cnn_forward.1} parent=87 // pred_region
          %701 = dma.done [#allocation17], 512
        $region124: #{tiny_cnn_forward.1} parent=87 // pred_fallthru
          _
        // Predicated region
        $region125: #{tiny_cnn_forward.1} parent=87 // pred_check
          %p702 = pneg %p292
        $region126: #{tiny_cnn_forward.1} parent=87 // pred_check_branch
          %704 = sbr.rel (%p702) target = $region128
        $region127: #{tiny_cnn_forward.1} parent=87 // pred_region
          %706 = dma.done [#allocation20], 2048
        $region128: #{tiny_cnn_forward.1} parent=87 // pred_fallthru
          _
        // Predicated region
        $region129: #{tiny_cnn_forward.1} parent=87 // pred_check
          %p707 = pneg %p313
        $region130: #{tiny_cnn_forward.1} parent=87 // pred_check_branch
          %709 = sbr.rel (%p707) target = $region132
        $region131: #{tiny_cnn_forward.1} parent=87 // pred_region
          %711 = dma.done [#allocation20], 2048
        $region132: #{tiny_cnn_forward.1} parent=87 // pred_fallthru
          _
        // Predicated region
        $region133: #{tiny_cnn_forward.1} parent=87 // pred_check
          %p712 = pneg %p334
        $region134: #{tiny_cnn_forward.1} parent=87 // pred_check_branch
          %714 = sbr.rel (%p712) target = $region136
        $region135: #{tiny_cnn_forward.1} parent=87 // pred_region
          %716 = dma.done [#allocation23], 8192
        $region136: #{tiny_cnn_forward.1} parent=87 // pred_fallthru
          _
        // Predicated region
        $region137: #{tiny_cnn_forward.1} parent=87 // pred_check
          %p717 = pneg %p376
        $region138: #{tiny_cnn_forward.1} parent=87 // pred_check_branch
          %719 = sbr.rel (%p717) target = $region140
        $region139: #{tiny_cnn_forward.1} parent=87 // pred_region
          %721 = dma.done [#allocation23], 512
        $region140: #{tiny_cnn_forward.1} parent=87 // pred_fallthru
          _
        %s722 = sand.u32 %s48, 1
        %s723 = scalar_lea.sflag [#allocation5], %s722
        %s724 = sand.u32 %s48, 1
        %s725 = smul.addr %s724, 256
        %s726 = scalar_lea.vmem [#allocation4], %s725
        %p727 = pneg %p61
        %p728 = pneg %p58
        %p729 = pneg %p82
        %p730 = pneg %p79
        %p731 = pneg %p103
        %p732 = pneg %p100
        %p733 = pneg %p124
        %p734 = pneg %p121
        %p735 = pneg %p145
        %p736 = pneg %p142
        %p737 = pneg %p166
        %p738 = pneg %p163
        %p739 = pneg %p187
        %p740 = pneg %p184
        %p741 = pneg %p208
        %p742 = pneg %p205
        %p743 = pneg %p229
        %p744 = pneg %p226
        %p745 = pneg %p250
        %p746 = pneg %p247
        %p747 = pneg %p271
        %p748 = pneg %p268
        %p749 = pneg %p292
        %p750 = pneg %p289
        %p751 = pneg %p313
        %p752 = pneg %p310
        %p753 = pneg %p334
        %p754 = pneg %p331
        %p755 = pneg %p355
        %p756 = pneg %p352
        %p757 = pneg %p376
        %p758 = pneg %p373
        %p759 = pneg %p397
        %p760 = pneg %p394
        %p761 = pneg %p423
        %p762 = pneg %p420
        %s763 = sand.u32 %s410, 1
        %s764 = scalar_lea.sflag [#allocation6], %s763
        %s765 = sand.u32 %s410, 1
        %s766 = smul.addr %s765, 8
        %s767 = scalar_lea.vmem [#allocation25], %s766
        %s768 = smul.u32 8, %s40
        %vm770 = vcmask 253952
        %771 = vst.msk [vmem:[#allocation2] sm:$0x1] %vm770, 0.0
        %772 = vst.msk [vmem:[#allocation2 + $0x20] sm:$0x1] %vm770, 0.0
        %773 = vst.msk [vmem:[#allocation2 + $0x40] sm:$0x1] %vm770, 0.0
        %774 = vst.msk [vmem:[#allocation2 + $0x60] sm:$0x1] %vm770, 0.0
        %775 = vst.msk [vmem:[#allocation2 + $0x80] sm:$0x1] %vm770, 0.0
        %776 = vst.msk [vmem:[#allocation2 + $0xa0] sm:$0x1] %vm770, 0.0
        %777 = vst.msk [vmem:[#allocation2 + $0xc0] sm:$0x1] %vm770, 0.0
        %778 = vst.msk [vmem:[#allocation2 + $0xe0] sm:$0x1] %vm770, 0.0
        %vm779 = vcmask 778752
        %780 = vst.msk [vmem:[#allocation2 + $0x1f] sm:$0x1] %vm779, 0.0
        %781 = vst.msk [vmem:[#allocation2 + $0x3f] sm:$0x1] %vm779, 0.0
        %782 = vst.msk [vmem:[#allocation2 + $0x5f] sm:$0x1] %vm779, 0.0
        %783 = vst.msk [vmem:[#allocation2 + $0x7f] sm:$0x1] %vm779, 0.0
        %784 = vst.msk [vmem:[#allocation2 + $0x9f] sm:$0x1] %vm779, 0.0
        %785 = vst.msk [vmem:[#allocation2 + $0xbf] sm:$0x1] %vm779, 0.0
        %786 = vst.msk [vmem:[#allocation2 + $0xdf] sm:$0x1] %vm779, 0.0
        %787 = vst.msk [vmem:[#allocation2 + $0xff] sm:$0x1] %vm779, 0.0
        %v788 = vld [vmem:[%s656] sm:$0xff]
        %v789 = vld [vmem:[%s656 + $0x8] sm:$0xff]
        %v790 = vld [vmem:[%s656 + $0x10] sm:$0xff]
        %v791 = vld [vmem:[%s656 + $0x18] sm:$0x7f]
        %v792 = vld [vmem:[%s656 + $0x20] sm:$0xff]
        %v793 = vld [vmem:[%s656 + $0x28] sm:$0xff]
        %v794 = vld [vmem:[%s656 + $0x30] sm:$0xff]
        %v795 = vld [vmem:[%s656 + $0x38] sm:$0x7f]
        %v796 = vld [vmem:[%s656 + $0x40] sm:$0xff]
        %v797 = vld [vmem:[%s656 + $0x48] sm:$0xff]
        %v798 = vld [vmem:[%s656 + $0x50] sm:$0xff]
        %v799 = vld [vmem:[%s656 + $0x58] sm:$0x7f]
        %v800 = vld [vmem:[%s656 + $0x60] sm:$0xff]
        %v801 = vld [vmem:[%s656 + $0x68] sm:$0xff]
        %v802 = vld [vmem:[%s656 + $0x70] sm:$0xff]
        %v803 = vld [vmem:[%s656 + $0x78] sm:$0x7f]
        %v804 = vld [vmem:[%s656 + $0x80] sm:$0xff]
        %v805 = vld [vmem:[%s656 + $0x88] sm:$0xff]
        %v806 = vld [vmem:[%s656 + $0x90] sm:$0xff]
        %v807 = vld [vmem:[%s656 + $0x98] sm:$0x7f]
        %v808 = vld [vmem:[%s656 + $0xa0] sm:$0xff]
        %v809 = vld [vmem:[%s656 + $0xa8] sm:$0xff]
        %v810 = vld [vmem:[%s656 + $0xb0] sm:$0xff]
        %v811 = vld [vmem:[%s656 + $0xb8] sm:$0x7f]
        %v812 = vld [vmem:[%s656 + $0xc0] sm:$0xff]
        %v813 = vld [vmem:[%s656 + $0xc8] sm:$0xff]
        %v814 = vld [vmem:[%s656 + $0xd0] sm:$0xff]
        %v815 = vld [vmem:[%s656 + $0xd8] sm:$0x7f]
        %v816 = vld [vmem:[%s656 + $0xe0] sm:$0xff]
        %v817 = vld [vmem:[%s656 + $0xe8] sm:$0xff]
        %v818 = vld [vmem:[%s656 + $0xf0] sm:$0xff]
        %v819 = vld [vmem:[%s656 + $0xf8] sm:$0x7f]
        %vm820 = vcmask 261120
        %821 = vst.msk [vmem:[#allocation2 + $0x1] sm:$0xff] %vm820, %v788
        %822 = vst.msk [vmem:[#allocation2 + $0x9] sm:$0xff] %vm820, %v789
        %823 = vst.msk [vmem:[#allocation2 + $0x11] sm:$0xff] %vm820, %v790
        %vm824 = vcmask 260096
        %825 = vst.msk [vmem:[#allocation2 + $0x19] sm:$0x7f] %vm824, %v791
        %826 = vst.msk [vmem:[#allocation2 + $0x21] sm:$0xff] %vm820, %v792
        %827 = vst.msk [vmem:[#allocation2 + $0x29] sm:$0xff] %vm820, %v793
        %828 = vst.msk [vmem:[#allocation2 + $0x31] sm:$0xff] %vm820, %v794
        %829 = vst.msk [vmem:[#allocation2 + $0x39] sm:$0x7f] %vm824, %v795
        %830 = vst.msk [vmem:[#allocation2 + $0x41] sm:$0xff] %vm820, %v796
        %831 = vst.msk [vmem:[#allocation2 + $0x49] sm:$0xff] %vm820, %v797
        %832 = vst.msk [vmem:[#allocation2 + $0x51] sm:$0xff] %vm820, %v798
        %833 = vst.msk [vmem:[#allocation2 + $0x59] sm:$0x7f] %vm824, %v799
        %834 = vst.msk [vmem:[#allocation2 + $0x61] sm:$0xff] %vm820, %v800
        %835 = vst.msk [vmem:[#allocation2 + $0x69] sm:$0xff] %vm820, %v801
        %836 = vst.msk [vmem:[#allocation2 + $0x71] sm:$0xff] %vm820, %v802
        %837 = vst.msk [vmem:[#allocation2 + $0x79] sm:$0x7f] %vm824, %v803
        %838 = vst.msk [vmem:[#allocation2 + $0x81] sm:$0xff] %vm820, %v804
        %839 = vst.msk [vmem:[#allocation2 + $0x89] sm:$0xff] %vm820, %v805
        %840 = vst.msk [vmem:[#allocation2 + $0x91] sm:$0xff] %vm820, %v806
        %841 = vst.msk [vmem:[#allocation2 + $0x99] sm:$0x7f] %vm824, %v807
        %842 = vst.msk [vmem:[#allocation2 + $0xa1] sm:$0xff] %vm820, %v808
        %843 = vst.msk [vmem:[#allocation2 + $0xa9] sm:$0xff] %vm820, %v809
        %844 = vst.msk [vmem:[#allocation2 + $0xb1] sm:$0xff] %vm820, %v810
        %845 = vst.msk [vmem:[#allocation2 + $0xb9] sm:$0x7f] %vm824, %v811
        %846 = vst.msk [vmem:[#allocation2 + $0xc1] sm:$0xff] %vm820, %v812
        %847 = vst.msk [vmem:[#allocation2 + $0xc9] sm:$0xff] %vm820, %v813
        %848 = vst.msk [vmem:[#allocation2 + $0xd1] sm:$0xff] %vm820, %v814
        %849 = vst.msk [vmem:[#allocation2 + $0xd9] sm:$0x7f] %vm824, %v815
        %850 = vst.msk [vmem:[#allocation2 + $0xe1] sm:$0xff] %vm820, %v816
        %851 = vst.msk [vmem:[#allocation2 + $0xe9] sm:$0xff] %vm820, %v817
        %852 = vst.msk [vmem:[#allocation2 + $0xf1] sm:$0xff] %vm820, %v818
        %853 = vst.msk [vmem:[#allocation2 + $0xf9] sm:$0x7f] %vm824, %v819
        %v854 = vld [vmem:[%s656] sm:$0xff]
        %v855 = vld [vmem:[%s656 + $0x8] sm:$0xff]
        %v856 = vld [vmem:[%s656 + $0x10] sm:$0xff]
        %v857 = vld [vmem:[%s656 + $0x18] sm:$0xff]
        %v858 = vld [vmem:[%s656 + $0x20] sm:$0xff]
        %v859 = vld [vmem:[%s656 + $0x28] sm:$0xff]
        %v860 = vld [vmem:[%s656 + $0x30] sm:$0xff]
        %v861 = vld [vmem:[%s656 + $0x38] sm:$0xff]
        %v862 = vld [vmem:[%s656 + $0x40] sm:$0xff]
        %v863 = vld [vmem:[%s656 + $0x48] sm:$0xff]
        %v864 = vld [vmem:[%s656 + $0x50] sm:$0xff]
        %v865 = vld [vmem:[%s656 + $0x58] sm:$0xff]
        %v866 = vld [vmem:[%s656 + $0x60] sm:$0xff]
        %v867 = vld [vmem:[%s656 + $0x68] sm:$0xff]
        %v868 = vld [vmem:[%s656 + $0x70] sm:$0xff]
        %v869 = vld [vmem:[%s656 + $0x78] sm:$0xff]
        %v870 = vld [vmem:[%s656 + $0x80] sm:$0xff]
        %v871 = vld [vmem:[%s656 + $0x88] sm:$0xff]
        %v872 = vld [vmem:[%s656 + $0x90] sm:$0xff]
        %v873 = vld [vmem:[%s656 + $0x98] sm:$0xff]
        %v874 = vld [vmem:[%s656 + $0xa0] sm:$0xff]
        %v875 = vld [vmem:[%s656 + $0xa8] sm:$0xff]
        %v876 = vld [vmem:[%s656 + $0xb0] sm:$0xff]
        %v877 = vld [vmem:[%s656 + $0xb8] sm:$0xff]
        %v878 = vld [vmem:[%s656 + $0xc0] sm:$0xff]
        %v879 = vld [vmem:[%s656 + $0xc8] sm:$0xff]
        %v880 = vld [vmem:[%s656 + $0xd0] sm:$0xff]
        %v881 = vld [vmem:[%s656 + $0xd8] sm:$0xff]
        %v882 = vld [vmem:[%s656 + $0xe0] sm:$0xff]
        %v883 = vld [vmem:[%s656 + $0xe8] sm:$0xff]
        %v884 = vld [vmem:[%s656 + $0xf0] sm:$0xff]
        %v885 = vld [vmem:[%s656 + $0xf8] sm:$0xff]
        %918 = vrot.lane.b32.xlu0 %v854, 32
        %v919 = vpop.permute.xlu0 %918
        %920 = vrot.lane.b32.xlu0 %v855, 32
        %v921 = vpop.permute.xlu0 %920
        %922 = vrot.lane.b32.xlu0 %v856, 32
        %v923 = vpop.permute.xlu0 %922
        %924 = vrot.lane.b32.xlu0 %v857, 32
        %v925 = vpop.permute.xlu0 %924
        %926 = vrot.lane.b32.xlu0 %v858, 32
        %v927 = vpop.permute.xlu0 %926
        %928 = vrot.lane.b32.xlu0 %v859, 32
        %v929 = vpop.permute.xlu0 %928
        %930 = vrot.lane.b32.xlu0 %v860, 32
        %v931 = vpop.permute.xlu0 %930
        %932 = vrot.lane.b32.xlu0 %v861, 32
        %v933 = vpop.permute.xlu0 %932
        %934 = vrot.lane.b32.xlu0 %v862, 32
        %v935 = vpop.permute.xlu0 %934
        %936 = vrot.lane.b32.xlu0 %v863, 32
        %v937 = vpop.permute.xlu0 %936
        %938 = vrot.lane.b32.xlu0 %v864, 32
        %v939 = vpop.permute.xlu0 %938
        %940 = vrot.lane.b32.xlu0 %v865, 32
        %v941 = vpop.permute.xlu0 %940
        %942 = vrot.lane.b32.xlu0 %v866, 32
        %v943 = vpop.permute.xlu0 %942
        %944 = vrot.lane.b32.xlu0 %v867, 32
        %v945 = vpop.permute.xlu0 %944
        %946 = vrot.lane.b32.xlu0 %v868, 32
        %v947 = vpop.permute.xlu0 %946
        %948 = vrot.lane.b32.xlu0 %v869, 32
        %v949 = vpop.permute.xlu0 %948
        %950 = vrot.lane.b32.xlu0 %v870, 32
        %v951 = vpop.permute.xlu0 %950
        %952 = vrot.lane.b32.xlu0 %v871, 32
        %v953 = vpop.permute.xlu0 %952
        %954 = vrot.lane.b32.xlu0 %v872, 32
        %v955 = vpop.permute.xlu0 %954
        %956 = vrot.lane.b32.xlu0 %v873, 32
        %v957 = vpop.permute.xlu0 %956
        %958 = vrot.lane.b32.xlu0 %v874, 32
        %v959 = vpop.permute.xlu0 %958
        %960 = vrot.lane.b32.xlu0 %v875, 32
        %v961 = vpop.permute.xlu0 %960
        %962 = vrot.lane.b32.xlu0 %v876, 32
        %v963 = vpop.permute.xlu0 %962
        %964 = vrot.lane.b32.xlu0 %v877, 32
        %v965 = vpop.permute.xlu0 %964
        %966 = vrot.lane.b32.xlu0 %v878, 32
        %v967 = vpop.permute.xlu0 %966
        %968 = vrot.lane.b32.xlu0 %v879, 32
        %v969 = vpop.permute.xlu0 %968
        %970 = vrot.lane.b32.xlu0 %v880, 32
        %v971 = vpop.permute.xlu0 %970
        %972 = vrot.lane.b32.xlu0 %v881, 32
        %v973 = vpop.permute.xlu0 %972
        %974 = vrot.lane.b32.xlu0 %v882, 32
        %v975 = vpop.permute.xlu0 %974
        %976 = vrot.lane.b32.xlu0 %v883, 32
        %v977 = vpop.permute.xlu0 %976
        %978 = vrot.lane.b32.xlu0 %v884, 32
        %v979 = vpop.permute.xlu0 %978
        %980 = vrot.lane.b32.xlu0 %v885, 32
        %v981 = vpop.permute.xlu0 %980
        %vm1014 = vcmask 523520
        %1015 = vst.msk [vmem:[#allocation2] sm:$0xff] %vm1014, %v919
        %1016 = vst.msk [vmem:[#allocation2 + $0x8] sm:$0xff] %vm1014, %v921
        %1017 = vst.msk [vmem:[#allocation2 + $0x10] sm:$0xff] %vm1014, %v923
        %1018 = vst.msk [vmem:[#allocation2 + $0x18] sm:$0xff] %vm1014, %v925
        %1019 = vst.msk [vmem:[#allocation2 + $0x20] sm:$0xff] %vm1014, %v927
        %1020 = vst.msk [vmem:[#allocation2 + $0x28] sm:$0xff] %vm1014, %v929
        %1021 = vst.msk [vmem:[#allocation2 + $0x30] sm:$0xff] %vm1014, %v931
        %1022 = vst.msk [vmem:[#allocation2 + $0x38] sm:$0xff] %vm1014, %v933
        %1023 = vst.msk [vmem:[#allocation2 + $0x40] sm:$0xff] %vm1014, %v935
        %1024 = vst.msk [vmem:[#allocation2 + $0x48] sm:$0xff] %vm1014, %v937
        %1025 = vst.msk [vmem:[#allocation2 + $0x50] sm:$0xff] %vm1014, %v939
        %1026 = vst.msk [vmem:[#allocation2 + $0x58] sm:$0xff] %vm1014, %v941
        %1027 = vst.msk [vmem:[#allocation2 + $0x60] sm:$0xff] %vm1014, %v943
        %1028 = vst.msk [vmem:[#allocation2 + $0x68] sm:$0xff] %vm1014, %v945
        %1029 = vst.msk [vmem:[#allocation2 + $0x70] sm:$0xff] %vm1014, %v947
        %1030 = vst.msk [vmem:[#allocation2 + $0x78] sm:$0xff] %vm1014, %v949
        %1031 = vst.msk [vmem:[#allocation2 + $0x80] sm:$0xff] %vm1014, %v951
        %1032 = vst.msk [vmem:[#allocation2 + $0x88] sm:$0xff] %vm1014, %v953
        %1033 = vst.msk [vmem:[#allocation2 + $0x90] sm:$0xff] %vm1014, %v955
        %1034 = vst.msk [vmem:[#allocation2 + $0x98] sm:$0xff] %vm1014, %v957
        %1035 = vst.msk [vmem:[#allocation2 + $0xa0] sm:$0xff] %vm1014, %v959
        %1036 = vst.msk [vmem:[#allocation2 + $0xa8] sm:$0xff] %vm1014, %v961
        %1037 = vst.msk [vmem:[#allocation2 + $0xb0] sm:$0xff] %vm1014, %v963
        %1038 = vst.msk [vmem:[#allocation2 + $0xb8] sm:$0xff] %vm1014, %v965
        %1039 = vst.msk [vmem:[#allocation2 + $0xc0] sm:$0xff] %vm1014, %v967
        %1040 = vst.msk [vmem:[#allocation2 + $0xc8] sm:$0xff] %vm1014, %v969
        %1041 = vst.msk [vmem:[#allocation2 + $0xd0] sm:$0xff] %vm1014, %v971
        %1042 = vst.msk [vmem:[#allocation2 + $0xd8] sm:$0xff] %vm1014, %v973
        %1043 = vst.msk [vmem:[#allocation2 + $0xe0] sm:$0xff] %vm1014, %v975
        %1044 = vst.msk [vmem:[#allocation2 + $0xe8] sm:$0xff] %vm1014, %v977
        %1045 = vst.msk [vmem:[#allocation2 + $0xf0] sm:$0xff] %vm1014, %v979
        %1046 = vst.msk [vmem:[#allocation2 + $0xf8] sm:$0xff] %vm1014, %v981
        %v1047 = vld [vmem:[%s656 + $0x1] sm:$0xff]
        %v1048 = vld [vmem:[%s656 + $0x9] sm:$0xff]
        %v1049 = vld [vmem:[%s656 + $0x11] sm:$0xff]
        %v1050 = vld [vmem:[%s656 + $0x19] sm:$0x7f]
        %v1051 = vld [vmem:[%s656 + $0x21] sm:$0xff]
        %v1052 = vld [vmem:[%s656 + $0x29] sm:$0xff]
        %v1053 = vld [vmem:[%s656 + $0x31] sm:$0xff]
        %v1054 = vld [vmem:[%s656 + $0x39] sm:$0x7f]
        %v1055 = vld [vmem:[%s656 + $0x41] sm:$0xff]
        %v1056 = vld [vmem:[%s656 + $0x49] sm:$0xff]
        %v1057 = vld [vmem:[%s656 + $0x51] sm:$0xff]
        %v1058 = vld [vmem:[%s656 + $0x59] sm:$0x7f]
        %v1059 = vld [vmem:[%s656 + $0x61] sm:$0xff]
        %v1060 = vld [vmem:[%s656 + $0x69] sm:$0xff]
        %v1061 = vld [vmem:[%s656 + $0x71] sm:$0xff]
        %v1062 = vld [vmem:[%s656 + $0x79] sm:$0x7f]
        %v1063 = vld [vmem:[%s656 + $0x81] sm:$0xff]
        %v1064 = vld [vmem:[%s656 + $0x89] sm:$0xff]
        %v1065 = vld [vmem:[%s656 + $0x91] sm:$0xff]
        %v1066 = vld [vmem:[%s656 + $0x99] sm:$0x7f]
        %v1067 = vld [vmem:[%s656 + $0xa1] sm:$0xff]
        %v1068 = vld [vmem:[%s656 + $0xa9] sm:$0xff]
        %v1069 = vld [vmem:[%s656 + $0xb1] sm:$0xff]
        %v1070 = vld [vmem:[%s656 + $0xb9] sm:$0x7f]
        %v1071 = vld [vmem:[%s656 + $0xc1] sm:$0xff]
        %v1072 = vld [vmem:[%s656 + $0xc9] sm:$0xff]
        %v1073 = vld [vmem:[%s656 + $0xd1] sm:$0xff]
        %v1074 = vld [vmem:[%s656 + $0xd9] sm:$0x7f]
        %v1075 = vld [vmem:[%s656 + $0xe1] sm:$0xff]
        %v1076 = vld [vmem:[%s656 + $0xe9] sm:$0xff]
        %v1077 = vld [vmem:[%s656 + $0xf1] sm:$0xff]
        %v1078 = vld [vmem:[%s656 + $0xf9] sm:$0x7f]
        %1111 = vrot.lane.b32.xlu0 %v1047, 64
        %v1112 = vpop.permute.xlu0 %1111
        %1113 = vrot.lane.b32.xlu0 %v1048, 64
        %v1114 = vpop.permute.xlu0 %1113
        %1115 = vrot.lane.b32.xlu0 %v1049, 64
        %v1116 = vpop.permute.xlu0 %1115
        %1117 = vrot.lane.b32.xlu0 %v1050, 64
        %v1118 = vpop.permute.xlu0 %1117
        %1119 = vrot.lane.b32.xlu0 %v1051, 64
        %v1120 = vpop.permute.xlu0 %1119
        %1121 = vrot.lane.b32.xlu0 %v1052, 64
        %v1122 = vpop.permute.xlu0 %1121
        %1123 = vrot.lane.b32.xlu0 %v1053, 64
        %v1124 = vpop.permute.xlu0 %1123
        %1125 = vrot.lane.b32.xlu0 %v1054, 64
        %v1126 = vpop.permute.xlu0 %1125
        %1127 = vrot.lane.b32.xlu0 %v1055, 64
        %v1128 = vpop.permute.xlu0 %1127
        %1129 = vrot.lane.b32.xlu0 %v1056, 64
        %v1130 = vpop.permute.xlu0 %1129
        %1131 = vrot.lane.b32.xlu0 %v1057, 64
        %v1132 = vpop.permute.xlu0 %1131
        %1133 = vrot.lane.b32.xlu0 %v1058, 64
        %v1134 = vpop.permute.xlu0 %1133
        %1135 = vrot.lane.b32.xlu0 %v1059, 64
        %v1136 = vpop.permute.xlu0 %1135
        %1137 = vrot.lane.b32.xlu0 %v1060, 64
        %v1138 = vpop.permute.xlu0 %1137
        %1139 = vrot.lane.b32.xlu0 %v1061, 64
        %v1140 = vpop.permute.xlu0 %1139
        %1141 = vrot.lane.b32.xlu0 %v1062, 64
        %v1142 = vpop.permute.xlu0 %1141
        %1143 = vrot.lane.b32.xlu0 %v1063, 64
        %v1144 = vpop.permute.xlu0 %1143
        %1145 = vrot.lane.b32.xlu0 %v1064, 64
        %v1146 = vpop.permute.xlu0 %1145
        %1147 = vrot.lane.b32.xlu0 %v1065, 64
        %v1148 = vpop.permute.xlu0 %1147
        %1149 = vrot.lane.b32.xlu0 %v1066, 64
        %v1150 = vpop.permute.xlu0 %1149
        %1151 = vrot.lane.b32.xlu0 %v1067, 64
        %v1152 = vpop.permute.xlu0 %1151
        %1153 = vrot.lane.b32.xlu0 %v1068, 64
        %v1154 = vpop.permute.xlu0 %1153
        %1155 = vrot.lane.b32.xlu0 %v1069, 64
        %v1156 = vpop.permute.xlu0 %1155
        %1157 = vrot.lane.b32.xlu0 %v1070, 64
        %v1158 = vpop.permute.xlu0 %1157
        %1159 = vrot.lane.b32.xlu0 %v1071, 64
        %v1160 = vpop.permute.xlu0 %1159
        %1161 = vrot.lane.b32.xlu0 %v1072, 64
        %v1162 = vpop.permute.xlu0 %1161
        %1163 = vrot.lane.b32.xlu0 %v1073, 64
        %v1164 = vpop.permute.xlu0 %1163
        %1165 = vrot.lane.b32.xlu0 %v1074, 64
        %v1166 = vpop.permute.xlu0 %1165
        %1167 = vrot.lane.b32.xlu0 %v1075, 64
        %v1168 = vpop.permute.xlu0 %1167
        %1169 = vrot.lane.b32.xlu0 %v1076, 64
        %v1170 = vpop.permute.xlu0 %1169
        %1171 = vrot.lane.b32.xlu0 %v1077, 64
        %v1172 = vpop.permute.xlu0 %1171
        %1173 = vrot.lane.b32.xlu0 %v1078, 64
        %v1174 = vpop.permute.xlu0 %1173
        %vm1207 = vcmask 785920
        %1208 = vst.msk [vmem:[#allocation2] sm:$0xff] %vm1207, %v1112
        %1209 = vst.msk [vmem:[#allocation2 + $0x8] sm:$0xff] %vm1207, %v1114
        %1210 = vst.msk [vmem:[#allocation2 + $0x10] sm:$0xff] %vm1207, %v1116
        %vm1211 = vcmask 784896
        %1212 = vst.msk [vmem:[#allocation2 + $0x18] sm:$0x7f] %vm1211, %v1118
        %1213 = vst.msk [vmem:[#allocation2 + $0x20] sm:$0xff] %vm1207, %v1120
        %1214 = vst.msk [vmem:[#allocation2 + $0x28] sm:$0xff] %vm1207, %v1122
        %1215 = vst.msk [vmem:[#allocation2 + $0x30] sm:$0xff] %vm1207, %v1124
        %1216 = vst.msk [vmem:[#allocation2 + $0x38] sm:$0x7f] %vm1211, %v1126
        %1217 = vst.msk [vmem:[#allocation2 + $0x40] sm:$0xff] %vm1207, %v1128
        %1218 = vst.msk [vmem:[#allocation2 + $0x48] sm:$0xff] %vm1207, %v1130
        %1219 = vst.msk [vmem:[#allocation2 + $0x50] sm:$0xff] %vm1207, %v1132
        %1220 = vst.msk [vmem:[#allocation2 + $0x58] sm:$0x7f] %vm1211, %v1134
        %1221 = vst.msk [vmem:[#allocation2 + $0x60] sm:$0xff] %vm1207, %v1136
        %1222 = vst.msk [vmem:[#allocation2 + $0x68] sm:$0xff] %vm1207, %v1138
        %1223 = vst.msk [vmem:[#allocation2 + $0x70] sm:$0xff] %vm1207, %v1140
        %1224 = vst.msk [vmem:[#allocation2 + $0x78] sm:$0x7f] %vm1211, %v1142
        %1225 = vst.msk [vmem:[#allocation2 + $0x80] sm:$0xff] %vm1207, %v1144
        %1226 = vst.msk [vmem:[#allocation2 + $0x88] sm:$0xff] %vm1207, %v1146
        %1227 = vst.msk [vmem:[#allocation2 + $0x90] sm:$0xff] %vm1207, %v1148
        %1228 = vst.msk [vmem:[#allocation2 + $0x98] sm:$0x7f] %vm1211, %v1150
        %1229 = vst.msk [vmem:[#allocation2 + $0xa0] sm:$0xff] %vm1207, %v1152
        %1230 = vst.msk [vmem:[#allocation2 + $0xa8] sm:$0xff] %vm1207, %v1154
        %1231 = vst.msk [vmem:[#allocation2 + $0xb0] sm:$0xff] %vm1207, %v1156
        %1232 = vst.msk [vmem:[#allocation2 + $0xb8] sm:$0x7f] %vm1211, %v1158
        %1233 = vst.msk [vmem:[#allocation2 + $0xc0] sm:$0xff] %vm1207, %v1160
        %1234 = vst.msk [vmem:[#allocation2 + $0xc8] sm:$0xff] %vm1207, %v1162
        %1235 = vst.msk [vmem:[#allocation2 + $0xd0] sm:$0xff] %vm1207, %v1164
        %1236 = vst.msk [vmem:[#allocation2 + $0xd8] sm:$0x7f] %vm1211, %v1166
        %1237 = vst.msk [vmem:[#allocation2 + $0xe0] sm:$0xff] %vm1207, %v1168
        %1238 = vst.msk [vmem:[#allocation2 + $0xe8] sm:$0xff] %vm1207, %v1170
        %1239 = vst.msk [vmem:[#allocation2 + $0xf0] sm:$0xff] %vm1207, %v1172
        %1240 = vst.msk [vmem:[#allocation2 + $0xf8] sm:$0x7f] %vm1211, %v1174
        %v1241 = vld [vmem:[#allocation2] sm:$0xff]
        %v1242 = vld [vmem:[#allocation2 + $0x8] sm:$0xff]
        %v1243 = vld [vmem:[#allocation2 + $0x10] sm:$0xff]
        %v1244 = vld [vmem:[#allocation2 + $0x18] sm:$0xff]
        %v1245 = vld [vmem:[#allocation2 + $0x20] sm:$0xff]
        %v1246 = vld [vmem:[#allocation2 + $0x28] sm:$0xff]
        %v1247 = vld [vmem:[#allocation2 + $0x30] sm:$0xff]
        %v1248 = vld [vmem:[#allocation2 + $0x38] sm:$0xff]
        %v1249 = vld [vmem:[#allocation2 + $0x40] sm:$0xff]
        %v1250 = vld [vmem:[#allocation2 + $0x48] sm:$0xff]
        %v1251 = vld [vmem:[#allocation2 + $0x50] sm:$0xff]
        %v1252 = vld [vmem:[#allocation2 + $0x58] sm:$0xff]
        %v1253 = vld [vmem:[#allocation2 + $0x60] sm:$0xff]
        %v1254 = vld [vmem:[#allocation2 + $0x68] sm:$0xff]
        %v1255 = vld [vmem:[#allocation2 + $0x70] sm:$0xff]
        %v1256 = vld [vmem:[#allocation2 + $0x78] sm:$0xff]
        %v1257 = vld [vmem:[#allocation2 + $0x80] sm:$0xff]
        %v1258 = vld [vmem:[#allocation2 + $0x88] sm:$0xff]
        %v1259 = vld [vmem:[#allocation2 + $0x90] sm:$0xff]
        %v1260 = vld [vmem:[#allocation2 + $0x98] sm:$0xff]
        %v1261 = vld [vmem:[#allocation2 + $0xa0] sm:$0xff]
        %v1262 = vld [vmem:[#allocation2 + $0xa8] sm:$0xff]
        %v1263 = vld [vmem:[#allocation2 + $0xb0] sm:$0xff]
        %v1264 = vld [vmem:[#allocation2 + $0xb8] sm:$0xff]
        %v1265 = vld [vmem:[#allocation2 + $0xc0] sm:$0xff]
        %v1266 = vld [vmem:[#allocation2 + $0xc8] sm:$0xff]
        %v1267 = vld [vmem:[#allocation2 + $0xd0] sm:$0xff]
        %v1268 = vld [vmem:[#allocation2 + $0xd8] sm:$0xff]
        %v1269 = vld [vmem:[#allocation2 + $0xe0] sm:$0xff]
        %v1270 = vld [vmem:[#allocation2 + $0xe8] sm:$0xff]
        %v1271 = vld [vmem:[#allocation2 + $0xf0] sm:$0xff]
        %v1272 = vld [vmem:[#allocation2 + $0xf8] sm:$0xff]
        %v1273 = vpack.c.bf16 %v1241, %v1241
        %v1274 = vpack.c.bf16 %v1242, %v1242
        %v1275 = vpack.c.bf16 %v1243, %v1243
        %v1276 = vpack.c.bf16 %v1244, %v1244
        %v1277 = vpack.c.bf16 %v1245, %v1245
        %v1278 = vpack.c.bf16 %v1246, %v1246
        %v1279 = vpack.c.bf16 %v1247, %v1247
        %v1280 = vpack.c.bf16 %v1248, %v1248
        %v1281 = vpack.c.bf16 %v1249, %v1249
        %v1282 = vpack.c.bf16 %v1250, %v1250
        %v1283 = vpack.c.bf16 %v1251, %v1251
        %v1284 = vpack.c.bf16 %v1252, %v1252
        %v1285 = vpack.c.bf16 %v1253, %v1253
        %v1286 = vpack.c.bf16 %v1254, %v1254
        %v1287 = vpack.c.bf16 %v1255, %v1255
        %v1288 = vpack.c.bf16 %v1256, %v1256
        %v1289 = vpack.c.bf16 %v1257, %v1257
        %v1290 = vpack.c.bf16 %v1258, %v1258
        %v1291 = vpack.c.bf16 %v1259, %v1259
        %v1292 = vpack.c.bf16 %v1260, %v1260
        %v1293 = vpack.c.bf16 %v1261, %v1261
        %v1294 = vpack.c.bf16 %v1262, %v1262
        %v1295 = vpack.c.bf16 %v1263, %v1263
        %v1296 = vpack.c.bf16 %v1264, %v1264
        %v1297 = vpack.c.bf16 %v1265, %v1265
        %v1298 = vpack.c.bf16 %v1266, %v1266
        %v1299 = vpack.c.bf16 %v1267, %v1267
        %v1300 = vpack.c.bf16 %v1268, %v1268
        %v1301 = vpack.c.bf16 %v1269, %v1269
        %v1302 = vpack.c.bf16 %v1270, %v1270
        %v1303 = vpack.c.bf16 %v1271, %v1271
        %v1304 = vpack.c.bf16 %v1272, %v1272
        %v1305 = vld [vmem:[#allocation7] sm:$0xff]
        %v1306 = vld [vmem:[#allocation7 + $0x8] sm:$0xff]
        %v1307 = vld [vmem:[#allocation7 + $0x10] sm:$0xff]
        %v1308 = vld [vmem:[#allocation7 + $0x18] sm:$0xff]
        %v1309 = vld [vmem:[#allocation7 + $0x20] sm:$0xff]
        %v1310 = vld [vmem:[#allocation7 + $0x28] sm:$0xff]
        %v1311 = vld [vmem:[#allocation7 + $0x30] sm:$0xff]
        %v1312 = vld [vmem:[#allocation7 + $0x38] sm:$0xff]
        %v1313 = vld [vmem:[#allocation7 + $0x40] sm:$0xff]
        %v1314 = vld [vmem:[#allocation7 + $0x48] sm:$0xff]
        %v1315 = vld [vmem:[#allocation7 + $0x50] sm:$0xff]
        %v1316 = vld [vmem:[#allocation7 + $0x58] sm:$0xff]
        %v1317 = vld [vmem:[%s2] sm:$0x3]
        %v1319 = vperm.slane %v1317, 0
        %v1320 = vperm.slane %v1317, 1
        %v1355 = vunpack.c.l.b16 %v1273
        %v1356 = vunpack.c.l.b16 %v1274
        %v1357 = vunpack.c.l.b16 %v1275
        %v1358 = vunpack.c.l.b16 %v1276
        %v1359 = vunpack.c.l.b16 %v1277
        %v1360 = vunpack.c.l.b16 %v1278
        %v1361 = vunpack.c.l.b16 %v1279
        %v1362 = vunpack.c.l.b16 %v1280
        %v1363 = vunpack.c.l.b16 %v1281
        %v1364 = vunpack.c.l.b16 %v1282
        %v1365 = vunpack.c.l.b16 %v1283
        %v1366 = vunpack.c.l.b16 %v1284
        %v1367 = vunpack.c.l.b16 %v1285
        %v1368 = vunpack.c.l.b16 %v1286
        %v1369 = vunpack.c.l.b16 %v1287
        %v1370 = vunpack.c.l.b16 %v1288
        %v1371 = vunpack.c.l.b16 %v1289
        %v1372 = vunpack.c.l.b16 %v1290
        %v1373 = vunpack.c.l.b16 %v1291
        %v1374 = vunpack.c.l.b16 %v1292
        %v1375 = vunpack.c.l.b16 %v1293
        %v1376 = vunpack.c.l.b16 %v1294
        %v1377 = vunpack.c.l.b16 %v1295
        %v1378 = vunpack.c.l.b16 %v1296
        %v1379 = vunpack.c.l.b16 %v1297
        %v1380 = vunpack.c.l.b16 %v1298
        %v1381 = vunpack.c.l.b16 %v1299
        %v1382 = vunpack.c.l.b16 %v1300
        %v1383 = vunpack.c.l.b16 %v1301
        %v1384 = vunpack.c.l.b16 %v1302
        %v1385 = vunpack.c.l.b16 %v1303
        %v1386 = vunpack.c.l.b16 %v1304
        %v1387 = vpack.c.b16 %v1356, %v1355
        %v1388 = vpack.c.b16 %v1358, %v1357
        %v1389 = vpack.c.b16 %v1360, %v1359
        %v1390 = vpack.c.b16 %v1362, %v1361
        %v1391 = vpack.c.b16 %v1364, %v1363
        %v1392 = vpack.c.b16 %v1366, %v1365
        %v1393 = vpack.c.b16 %v1368, %v1367
        %v1394 = vpack.c.b16 %v1370, %v1369
        %v1395 = vpack.c.b16 %v1372, %v1371
        %v1396 = vpack.c.b16 %v1374, %v1373
        %v1397 = vpack.c.b16 %v1376, %v1375
        %v1398 = vpack.c.b16 %v1378, %v1377
        %v1399 = vpack.c.b16 %v1380, %v1379
        %v1400 = vpack.c.b16 %v1382, %v1381
        %v1401 = vpack.c.b16 %v1384, %v1383
        %v1402 = vpack.c.b16 %v1386, %v1385
        %v1415 = vunpack.c.l.b16 %v1305
        %v1416 = vunpack.c.h.b16 %v1305
        %v1417 = vunpack.c.l.b16 %v1306
        %v1418 = vunpack.c.h.b16 %v1306
        %v1419 = vunpack.c.l.b16 %v1307
        %v1420 = vunpack.c.h.b16 %v1307
        %v1421 = vunpack.c.l.b16 %v1308
        %v1422 = vunpack.c.h.b16 %v1308
        %v1423 = vunpack.c.l.b16 %v1309
        %v1424 = vunpack.c.h.b16 %v1309
        %v1425 = vunpack.c.l.b16 %v1310
        %v1426 = vunpack.c.h.b16 %v1310
        %v1427 = vunpack.c.l.b16 %v1311
        %v1428 = vunpack.c.h.b16 %v1311
        %v1429 = vunpack.c.l.b16 %v1312
        %v1430 = vunpack.c.h.b16 %v1312
        %v1431 = vunpack.c.l.b16 %v1313
        %v1432 = vunpack.c.h.b16 %v1313
        %v1433 = vunpack.c.l.b16 %v1314
        %v1434 = vunpack.c.h.b16 %v1314
        %v1435 = vunpack.c.l.b16 %v1315
        %v1436 = vunpack.c.h.b16 %v1315
        %v1437 = vunpack.c.l.b16 %v1316
        %v1438 = vunpack.c.h.b16 %v1316
        %v1439 = vpack.c.b16 %v1417, %v1415
        %v1440 = vpack.c.b16 %v1418, %v1416
        %v1441 = vpack.c.b16 %v1421, %v1419
        %v1442 = vpack.c.b16 %v1422, %v1420
        %v1443 = vpack.c.b16 %v1425, %v1423
        %v1444 = vpack.c.b16 %v1426, %v1424
        %v1445 = vpack.c.b16 %v1429, %v1427
        %v1446 = vpack.c.b16 %v1430, %v1428
        %v1447 = vpack.c.b16 %v1433, %v1431
        %v1448 = vpack.c.b16 %v1434, %v1432
        %v1449 = vpack.c.b16 %v1437, %v1435
        %v1450 = vpack.c.b16 %v1438, %v1436
        %vm1463 = vcmask 785408
        %v1465 = vsel %vm1463, %v1387, 0
        %v1468 = vsel %vm1463, %v1388, 0
        %v1471 = vsel %vm1463, %v1389, 0
        %v1474 = vsel %vm1463, %v1390, 0
        %v1477 = vsel %vm1463, %v1391, 0
        %v1480 = vsel %vm1463, %v1392, 0
        %v1483 = vsel %vm1463, %v1393, 0
        %v1486 = vsel %vm1463, %v1394, 0
        %v1489 = vsel %vm1463, %v1395, 0
        %v1492 = vsel %vm1463, %v1396, 0
        %v1495 = vsel %vm1463, %v1397, 0
        %v1498 = vsel %vm1463, %v1398, 0
        %v1501 = vsel %vm1463, %v1399, 0
        %v1504 = vsel %vm1463, %v1400, 0
        %v1507 = vsel %vm1463, %v1401, 0
        %v1510 = vsel %vm1463, %v1402, 0
        %1512 = vmatpush.bf16.msra.mxu0 0
        %1513 = vmatpush.bf16.msra.mxu0 0
        %1514 = vmatpush.bf16.msra.mxu0 %v1449
        %1515 = vmatpush.bf16.msra.mxu0 %v1447
        %1516 = vmatpush.bf16.msra.mxu0 %v1445
        %1517 = vmatpush.bf16.msra.mxu0 %v1443
        %1518 = vmatpush.bf16.msra.mxu0 %v1441
        %1519 = vmatpush.bf16.msra.mxu0 %v1439
        %1520 = vmatmul.bf16.gmra.mxu0 %v1465
        %v1521 = vpop.f32.mrf.mxu0
        %v1522 = vadd.f32 %v1319, %v1521
        %v1523 = vpop.f32.mrf.mxu0
        %v1524 = vadd.f32 %v1319, %v1523
        %1525 = vmatmul.bf16.gmra.mxu0 %v1468
        %v1526 = vpop.f32.mrf.mxu0
        %v1527 = vadd.f32 %v1319, %v1526
        %v1528 = vpop.f32.mrf.mxu0
        %v1529 = vadd.f32 %v1319, %v1528
        %1530 = vmatmul.bf16.gmra.mxu0 %v1471
        %v1531 = vpop.f32.mrf.mxu0
        %v1532 = vadd.f32 %v1319, %v1531
        %v1533 = vpop.f32.mrf.mxu0
        %v1534 = vadd.f32 %v1319, %v1533
        %1535 = vmatmul.bf16.gmra.mxu0 %v1474
        %v1536 = vpop.f32.mrf.mxu0
        %v1537 = vadd.f32 %v1319, %v1536
        %v1538 = vpop.f32.mrf.mxu0
        %v1539 = vadd.f32 %v1319, %v1538
        %1540 = vmatmul.bf16.gmra.mxu0 %v1477
        %v1541 = vpop.f32.mrf.mxu0
        %v1542 = vadd.f32 %v1319, %v1541
        %v1543 = vpop.f32.mrf.mxu0
        %v1544 = vadd.f32 %v1319, %v1543
        %1545 = vmatmul.bf16.gmra.mxu0 %v1480
        %v1546 = vpop.f32.mrf.mxu0
        %v1547 = vadd.f32 %v1319, %v1546
        %v1548 = vpop.f32.mrf.mxu0
        %v1549 = vadd.f32 %v1319, %v1548
        %1550 = vmatmul.bf16.gmra.mxu0 %v1483
        %v1551 = vpop.f32.mrf.mxu0
        %v1552 = vadd.f32 %v1319, %v1551
        %v1553 = vpop.f32.mrf.mxu0
        %v1554 = vadd.f32 %v1319, %v1553
        %1555 = vmatmul.bf16.gmra.mxu0 %v1486
        %v1556 = vpop.f32.mrf.mxu0
        %v1557 = vadd.f32 %v1319, %v1556
        %v1558 = vpop.f32.mrf.mxu0
        %v1559 = vadd.f32 %v1319, %v1558
        %1560 = vmatmul.bf16.gmra.mxu0 %v1489
        %v1561 = vpop.f32.mrf.mxu0
        %v1562 = vadd.f32 %v1319, %v1561
        %v1563 = vpop.f32.mrf.mxu0
        %v1564 = vadd.f32 %v1319, %v1563
        %1565 = vmatmul.bf16.gmra.mxu0 %v1492
        %v1566 = vpop.f32.mrf.mxu0
        %v1567 = vadd.f32 %v1319, %v1566
        %v1568 = vpop.f32.mrf.mxu0
        %v1569 = vadd.f32 %v1319, %v1568
        %1570 = vmatmul.bf16.gmra.mxu0 %v1495
        %v1571 = vpop.f32.mrf.mxu0
        %v1572 = vadd.f32 %v1319, %v1571
        %v1573 = vpop.f32.mrf.mxu0
        %v1574 = vadd.f32 %v1319, %v1573
        %1575 = vmatmul.bf16.gmra.mxu0 %v1498
        %v1576 = vpop.f32.mrf.mxu0
        %v1577 = vadd.f32 %v1319, %v1576
        %v1578 = vpop.f32.mrf.mxu0
        %v1579 = vadd.f32 %v1319, %v1578
        %1580 = vmatmul.bf16.gmra.mxu0 %v1501
        %v1581 = vpop.f32.mrf.mxu0
        %v1582 = vadd.f32 %v1319, %v1581
        %v1583 = vpop.f32.mrf.mxu0
        %v1584 = vadd.f32 %v1319, %v1583
        %1585 = vmatmul.bf16.gmra.mxu0 %v1504
        %v1586 = vpop.f32.mrf.mxu0
        %v1587 = vadd.f32 %v1319, %v1586
        %v1588 = vpop.f32.mrf.mxu0
        %v1589 = vadd.f32 %v1319, %v1588
        %1590 = vmatmul.bf16.gmra.mxu0 %v1507
        %v1591 = vpop.f32.mrf.mxu0
        %v1592 = vadd.f32 %v1319, %v1591
        %v1593 = vpop.f32.mrf.mxu0
        %v1594 = vadd.f32 %v1319, %v1593
        %1595 = vmatmul.bf16.gmra.mxu0 %v1510
        %v1596 = vpop.f32.mrf.mxu0
        %v1597 = vadd.f32 %v1319, %v1596
        %v1598 = vpop.f32.mrf.mxu0
        %v1599 = vadd.f32 %v1319, %v1598
        %1600 = vdwg.mxu0
        %1601 = vmatpush.bf16.msra.mxu0 0
        %1602 = vmatpush.bf16.msra.mxu0 0
        %1603 = vmatpush.bf16.msra.mxu0 %v1450
        %1604 = vmatpush.bf16.msra.mxu0 %v1448
        %1605 = vmatpush.bf16.msra.mxu0 %v1446
        %1606 = vmatpush.bf16.msra.mxu0 %v1444
        %1607 = vmatpush.bf16.msra.mxu0 %v1442
        %1608 = vmatpush.bf16.msra.mxu0 %v1440
        %1609 = vmatmul.bf16.gmra.mxu0 %v1465
        %v1610 = vpop.f32.mrf.mxu0
        %v1611 = vadd.f32 %v1320, %v1610
        %v1612 = vpop.f32.mrf.mxu0
        %v1613 = vadd.f32 %v1320, %v1612
        %1614 = vmatmul.bf16.gmra.mxu0 %v1468
        %v1615 = vpop.f32.mrf.mxu0
        %v1616 = vadd.f32 %v1320, %v1615
        %v1617 = vpop.f32.mrf.mxu0
        %v1618 = vadd.f32 %v1320, %v1617
        %1619 = vmatmul.bf16.gmra.mxu0 %v1471
        %v1620 = vpop.f32.mrf.mxu0
        %v1621 = vadd.f32 %v1320, %v1620
        %v1622 = vpop.f32.mrf.mxu0
        %v1623 = vadd.f32 %v1320, %v1622
        %1624 = vmatmul.bf16.gmra.mxu0 %v1474
        %v1625 = vpop.f32.mrf.mxu0
        %v1626 = vadd.f32 %v1320, %v1625
        %v1627 = vpop.f32.mrf.mxu0
        %v1628 = vadd.f32 %v1320, %v1627
        %1629 = vmatmul.bf16.gmra.mxu0 %v1477
        %v1630 = vpop.f32.mrf.mxu0
        %v1631 = vadd.f32 %v1320, %v1630
        %v1632 = vpop.f32.mrf.mxu0
        %v1633 = vadd.f32 %v1320, %v1632
        %1634 = vmatmul.bf16.gmra.mxu0 %v1480
        %v1635 = vpop.f32.mrf.mxu0
        %v1636 = vadd.f32 %v1320, %v1635
        %v1637 = vpop.f32.mrf.mxu0
        %v1638 = vadd.f32 %v1320, %v1637
        %1639 = vmatmul.bf16.gmra.mxu0 %v1483
        %v1640 = vpop.f32.mrf.mxu0
        %v1641 = vadd.f32 %v1320, %v1640
        %v1642 = vpop.f32.mrf.mxu0
        %v1643 = vadd.f32 %v1320, %v1642
        %1644 = vmatmul.bf16.gmra.mxu0 %v1486
        %v1645 = vpop.f32.mrf.mxu0
        %v1646 = vadd.f32 %v1320, %v1645
        %v1647 = vpop.f32.mrf.mxu0
        %v1648 = vadd.f32 %v1320, %v1647
        %1649 = vmatmul.bf16.gmra.mxu0 %v1489
        %v1650 = vpop.f32.mrf.mxu0
        %v1651 = vadd.f32 %v1320, %v1650
        %v1652 = vpop.f32.mrf.mxu0
        %v1653 = vadd.f32 %v1320, %v1652
        %1654 = vmatmul.bf16.gmra.mxu0 %v1492
        %v1655 = vpop.f32.mrf.mxu0
        %v1656 = vadd.f32 %v1320, %v1655
        %v1657 = vpop.f32.mrf.mxu0
        %v1658 = vadd.f32 %v1320, %v1657
        %1659 = vmatmul.bf16.gmra.mxu0 %v1495
        %v1660 = vpop.f32.mrf.mxu0
        %v1661 = vadd.f32 %v1320, %v1660
        %v1662 = vpop.f32.mrf.mxu0
        %v1663 = vadd.f32 %v1320, %v1662
        %1664 = vmatmul.bf16.gmra.mxu0 %v1498
        %v1665 = vpop.f32.mrf.mxu0
        %v1666 = vadd.f32 %v1320, %v1665
        %v1667 = vpop.f32.mrf.mxu0
        %v1668 = vadd.f32 %v1320, %v1667
        %1669 = vmatmul.bf16.gmra.mxu0 %v1501
        %v1670 = vpop.f32.mrf.mxu0
        %v1671 = vadd.f32 %v1320, %v1670
        %v1672 = vpop.f32.mrf.mxu0
        %v1673 = vadd.f32 %v1320, %v1672
        %1674 = vmatmul.bf16.gmra.mxu0 %v1504
        %v1675 = vpop.f32.mrf.mxu0
        %v1676 = vadd.f32 %v1320, %v1675
        %v1677 = vpop.f32.mrf.mxu0
        %v1678 = vadd.f32 %v1320, %v1677
        %1679 = vmatmul.bf16.gmra.mxu0 %v1507
        %v1680 = vpop.f32.mrf.mxu0
        %v1681 = vadd.f32 %v1320, %v1680
        %v1682 = vpop.f32.mrf.mxu0
        %v1683 = vadd.f32 %v1320, %v1682
        %1684 = vmatmul.bf16.gmra.mxu0 %v1510
        %v1685 = vpop.f32.mrf.mxu0
        %v1686 = vadd.f32 %v1320, %v1685
        %v1687 = vpop.f32.mrf.mxu0
        %v1688 = vadd.f32 %v1320, %v1687
        %1689 = vdwg.mxu0
        %v1690 = vmax.f32 %v1522, 0.0
        %v1691 = vmax.f32 %v1611, 0.0
        %v1692 = vmax.f32 %v1524, 0.0
        %v1693 = vmax.f32 %v1613, 0.0
        %v1694 = vmax.f32 %v1527, 0.0
        %v1695 = vmax.f32 %v1616, 0.0
        %v1696 = vmax.f32 %v1529, 0.0
        %v1697 = vmax.f32 %v1618, 0.0
        %v1698 = vmax.f32 %v1532, 0.0
        %v1699 = vmax.f32 %v1621, 0.0
        %v1700 = vmax.f32 %v1534, 0.0
        %v1701 = vmax.f32 %v1623, 0.0
        %v1702 = vmax.f32 %v1537, 0.0
        %v1703 = vmax.f32 %v1626, 0.0
        %v1704 = vmax.f32 %v1539, 0.0
        %v1705 = vmax.f32 %v1628, 0.0
        %v1706 = vmax.f32 %v1542, 0.0
        %v1707 = vmax.f32 %v1631, 0.0
        %v1708 = vmax.f32 %v1544, 0.0
        %v1709 = vmax.f32 %v1633, 0.0
        %v1710 = vmax.f32 %v1547, 0.0
        %v1711 = vmax.f32 %v1636, 0.0
        %v1712 = vmax.f32 %v1549, 0.0
        %v1713 = vmax.f32 %v1638, 0.0
        %v1714 = vmax.f32 %v1552, 0.0
        %v1715 = vmax.f32 %v1641, 0.0
        %v1716 = vmax.f32 %v1554, 0.0
        %v1717 = vmax.f32 %v1643, 0.0
        %v1718 = vmax.f32 %v1557, 0.0
        %v1719 = vmax.f32 %v1646, 0.0
        %v1720 = vmax.f32 %v1559, 0.0
        %v1721 = vmax.f32 %v1648, 0.0
        %v1722 = vmax.f32 %v1562, 0.0
        %v1723 = vmax.f32 %v1651, 0.0
        %v1724 = vmax.f32 %v1564, 0.0
        %v1725 = vmax.f32 %v1653, 0.0
        %v1726 = vmax.f32 %v1567, 0.0
        %v1727 = vmax.f32 %v1656, 0.0
        %v1728 = vmax.f32 %v1569, 0.0
        %v1729 = vmax.f32 %v1658, 0.0
        %v1730 = vmax.f32 %v1572, 0.0
        %v1731 = vmax.f32 %v1661, 0.0
        %v1732 = vmax.f32 %v1574, 0.0
        %v1733 = vmax.f32 %v1663, 0.0
        %v1734 = vmax.f32 %v1577, 0.0
        %v1735 = vmax.f32 %v1666, 0.0
        %v1736 = vmax.f32 %v1579, 0.0
        %v1737 = vmax.f32 %v1668, 0.0
        %v1738 = vmax.f32 %v1582, 0.0
        %v1739 = vmax.f32 %v1671, 0.0
        %v1740 = vmax.f32 %v1584, 0.0
        %v1741 = vmax.f32 %v1673, 0.0
        %v1742 = vmax.f32 %v1587, 0.0
        %v1743 = vmax.f32 %v1676, 0.0
        %v1744 = vmax.f32 %v1589, 0.0
        %v1745 = vmax.f32 %v1678, 0.0
        %v1746 = vmax.f32 %v1592, 0.0
        %v1747 = vmax.f32 %v1681, 0.0
        %v1748 = vmax.f32 %v1594, 0.0
        %v1749 = vmax.f32 %v1683, 0.0
        %v1750 = vmax.f32 %v1597, 0.0
        %v1751 = vmax.f32 %v1686, 0.0
        %v1752 = vmax.f32 %v1599, 0.0
        %v1753 = vmax.f32 %v1688, 0.0
        %v1754 = vpack.c.bf16 %v1692, %v1690
        %v1755 = vpack.c.bf16 %v1693, %v1691
        %v1756 = vpack.c.bf16 %v1696, %v1694
        %v1757 = vpack.c.bf16 %v1697, %v1695
        %v1758 = vpack.c.bf16 %v1700, %v1698
        %v1759 = vpack.c.bf16 %v1701, %v1699
        %v1760 = vpack.c.bf16 %v1704, %v1702
        %v1761 = vpack.c.bf16 %v1705, %v1703
        %v1762 = vpack.c.bf16 %v1708, %v1706
        %v1763 = vpack.c.bf16 %v1709, %v1707
        %v1764 = vpack.c.bf16 %v1712, %v1710
        %v1765 = vpack.c.bf16 %v1713, %v1711
        %v1766 = vpack.c.bf16 %v1716, %v1714
        %v1767 = vpack.c.bf16 %v1717, %v1715
        %v1768 = vpack.c.bf16 %v1720, %v1718
        %v1769 = vpack.c.bf16 %v1721, %v1719
        %v1770 = vpack.c.bf16 %v1724, %v1722
        %v1771 = vpack.c.bf16 %v1725, %v1723
        %v1772 = vpack.c.bf16 %v1728, %v1726
        %v1773 = vpack.c.bf16 %v1729, %v1727
        %v1774 = vpack.c.bf16 %v1732, %v1730
        %v1775 = vpack.c.bf16 %v1733, %v1731
        %v1776 = vpack.c.bf16 %v1736, %v1734
        %v1777 = vpack.c.bf16 %v1737, %v1735
        %v1778 = vpack.c.bf16 %v1740, %v1738
        %v1779 = vpack.c.bf16 %v1741, %v1739
        %v1780 = vpack.c.bf16 %v1744, %v1742
        %v1781 = vpack.c.bf16 %v1745, %v1743
        %v1782 = vpack.c.bf16 %v1748, %v1746
        %v1783 = vpack.c.bf16 %v1749, %v1747
        %v1784 = vpack.c.bf16 %v1752, %v1750
        %v1785 = vpack.c.bf16 %v1753, %v1751
        %v1786 = vld [vmem:[#allocation9] sm:$0xff]
        %v1787 = vld [vmem:[#allocation9 + $0x8] sm:$0xff]
        %v1788 = vld [vmem:[#allocation9 + $0x10] sm:$0xff]
        %v1789 = vld [vmem:[#allocation9 + $0x18] sm:$0xff]
        %v1790 = vld [vmem:[#allocation9 + $0x20] sm:$0xff]
        %v1791 = vld [vmem:[#allocation9 + $0x28] sm:$0xff]
        %v1792 = vld [vmem:[#allocation9 + $0x30] sm:$0xff]
        %v1793 = vld [vmem:[#allocation9 + $0x38] sm:$0xff]
        %v1794 = vld [vmem:[#allocation9 + $0x40] sm:$0xff]
        %v1795 = vld [vmem:[#allocation9 + $0x48] sm:$0xff]
        %v1796 = vld [vmem:[#allocation9 + $0x50] sm:$0xff]
        %v1797 = vld [vmem:[#allocation9 + $0x58] sm:$0xff]
        %v1798 = vld [vmem:[#allocation9 + $0x60] sm:$0xff]
        %v1799 = vld [vmem:[#allocation9 + $0x68] sm:$0xff]
        %v1800 = vld [vmem:[#allocation9 + $0x70] sm:$0xff]
        %v1801 = vld [vmem:[#allocation9 + $0x78] sm:$0xff]
        %v1818 = vunpack.c.l.b16 %v1786
        %v1819 = vunpack.c.h.b16 %v1786
        %v1820 = vunpack.c.l.b16 %v1787
        %v1821 = vunpack.c.h.b16 %v1787
        %v1822 = vunpack.c.l.b16 %v1788
        %v1823 = vunpack.c.h.b16 %v1788
        %v1824 = vunpack.c.l.b16 %v1789
        %v1825 = vunpack.c.h.b16 %v1789
        %v1826 = vunpack.c.l.b16 %v1790
        %v1827 = vunpack.c.h.b16 %v1790
        %v1828 = vunpack.c.l.b16 %v1791
        %v1829 = vunpack.c.h.b16 %v1791
        %v1830 = vunpack.c.l.b16 %v1792
        %v1831 = vunpack.c.h.b16 %v1792
        %v1832 = vunpack.c.l.b16 %v1793
        %v1833 = vunpack.c.h.b16 %v1793
        %v1834 = vunpack.c.l.b16 %v1794
        %v1835 = vunpack.c.h.b16 %v1794
        %v1836 = vunpack.c.l.b16 %v1795
        %v1837 = vunpack.c.h.b16 %v1795
        %v1838 = vunpack.c.l.b16 %v1796
        %v1839 = vunpack.c.h.b16 %v1796
        %v1840 = vunpack.c.l.b16 %v1797
        %v1841 = vunpack.c.h.b16 %v1797
        %v1842 = vunpack.c.l.b16 %v1798
        %v1843 = vunpack.c.h.b16 %v1798
        %v1844 = vunpack.c.l.b16 %v1799
        %v1845 = vunpack.c.h.b16 %v1799
        %v1846 = vunpack.c.l.b16 %v1800
        %v1847 = vunpack.c.h.b16 %v1800
        %v1848 = vunpack.c.l.b16 %v1801
        %v1849 = vunpack.c.h.b16 %v1801
        %v1850 = vpack.c.b16 %v1820, %v1818
        %v1851 = vpack.c.b16 %v1821, %v1819
        %v1852 = vpack.c.b16 %v1824, %v1822
        %v1853 = vpack.c.b16 %v1825, %v1823
        %v1854 = vpack.c.b16 %v1828, %v1826
        %v1855 = vpack.c.b16 %v1829, %v1827
        %v1856 = vpack.c.b16 %v1832, %v1830
        %v1857 = vpack.c.b16 %v1833, %v1831
        %v1858 = vpack.c.b16 %v1836, %v1834
        %v1859 = vpack.c.b16 %v1837, %v1835
        %v1860 = vpack.c.b16 %v1840, %v1838
        %v1861 = vpack.c.b16 %v1841, %v1839
        %v1862 = vpack.c.b16 %v1844, %v1842
        %v1863 = vpack.c.b16 %v1845, %v1843
        %v1864 = vpack.c.b16 %v1848, %v1846
        %v1865 = vpack.c.b16 %v1849, %v1847
        %1882 = vmatpush.bf16.msra.mxu0 %v1768
        %1883 = vmatpush.bf16.msra.mxu0 %v1766
        %1884 = vmatpush.bf16.msra.mxu0 %v1764
        %1885 = vmatpush.bf16.msra.mxu0 %v1762
        %1886 = vmatpush.bf16.msra.mxu0 %v1760
        %1887 = vmatpush.bf16.msra.mxu0 %v1758
        %1888 = vmatpush.bf16.msra.mxu0 %v1756
        %1889 = vmatpush.bf16.msra.mxu0 %v1754
        %1890 = vmatmul.bf16.gmra.mxu0 %v1850
        %v1891 = vpop.f32.mrf.mxu0
        %v1892 = vadd.f32 0.0, %v1891
        %v1893 = vpop.f32.mrf.mxu0
        %v1894 = vadd.f32 0.0, %v1893
        %1895 = vmatmul.bf16.gmra.mxu0 %v1852
        %v1896 = vpop.f32.mrf.mxu0
        %v1897 = vadd.f32 0.0, %v1896
        %v1898 = vpop.f32.mrf.mxu0
        %v1899 = vadd.f32 0.0, %v1898
        %1900 = vmatmul.bf16.gmra.mxu0 %v1854
        %v1901 = vpop.f32.mrf.mxu0
        %v1902 = vadd.f32 0.0, %v1901
        %v1903 = vpop.f32.mrf.mxu0
        %v1904 = vadd.f32 0.0, %v1903
        %1905 = vmatmul.bf16.gmra.mxu0 %v1856
        %v1906 = vpop.f32.mrf.mxu0
        %v1907 = vadd.f32 0.0, %v1906
        %v1908 = vpop.f32.mrf.mxu0
        %v1909 = vadd.f32 0.0, %v1908
        %1910 = vmatmul.bf16.gmra.mxu0 %v1858
        %v1911 = vpop.f32.mrf.mxu0
        %v1912 = vadd.f32 0.0, %v1911
        %v1913 = vpop.f32.mrf.mxu0
        %v1914 = vadd.f32 0.0, %v1913
        %1915 = vmatmul.bf16.gmra.mxu0 %v1860
        %v1916 = vpop.f32.mrf.mxu0
        %v1917 = vadd.f32 0.0, %v1916
        %v1918 = vpop.f32.mrf.mxu0
        %v1919 = vadd.f32 0.0, %v1918
        %1920 = vmatmul.bf16.gmra.mxu0 %v1862
        %v1921 = vpop.f32.mrf.mxu0
        %v1922 = vadd.f32 0.0, %v1921
        %v1923 = vpop.f32.mrf.mxu0
        %v1924 = vadd.f32 0.0, %v1923
        %1925 = vmatmul.bf16.gmra.mxu0 %v1864
        %v1926 = vpop.f32.mrf.mxu0
        %v1927 = vadd.f32 0.0, %v1926
        %v1928 = vpop.f32.mrf.mxu0
        %v1929 = vadd.f32 0.0, %v1928
        %1930 = vdwg.mxu0
        %1931 = vmatpush.bf16.msra.mxu0 %v1784
        %1932 = vmatpush.bf16.msra.mxu0 %v1782
        %1933 = vmatpush.bf16.msra.mxu0 %v1780
        %1934 = vmatpush.bf16.msra.mxu0 %v1778
        %1935 = vmatpush.bf16.msra.mxu0 %v1776
        %1936 = vmatpush.bf16.msra.mxu0 %v1774
        %1937 = vmatpush.bf16.msra.mxu0 %v1772
        %1938 = vmatpush.bf16.msra.mxu0 %v1770
        %1939 = vmatmul.bf16.gmra.mxu0 %v1851
        %v1940 = vpop.f32.mrf.mxu0
        %v1941 = vadd.f32 %v1892, %v1940
        %v1942 = vpop.f32.mrf.mxu0
        %v1943 = vadd.f32 %v1894, %v1942
        %1944 = vmatmul.bf16.gmra.mxu0 %v1853
        %v1945 = vpop.f32.mrf.mxu0
        %v1946 = vadd.f32 %v1897, %v1945
        %v1947 = vpop.f32.mrf.mxu0
        %v1948 = vadd.f32 %v1899, %v1947
        %1949 = vmatmul.bf16.gmra.mxu0 %v1855
        %v1950 = vpop.f32.mrf.mxu0
        %v1951 = vadd.f32 %v1902, %v1950
        %v1952 = vpop.f32.mrf.mxu0
        %v1953 = vadd.f32 %v1904, %v1952
        %1954 = vmatmul.bf16.gmra.mxu0 %v1857
        %v1955 = vpop.f32.mrf.mxu0
        %v1956 = vadd.f32 %v1907, %v1955
        %v1957 = vpop.f32.mrf.mxu0
        %v1958 = vadd.f32 %v1909, %v1957
        %1959 = vmatmul.bf16.gmra.mxu0 %v1859
        %v1960 = vpop.f32.mrf.mxu0
        %v1961 = vadd.f32 %v1912, %v1960
        %v1962 = vpop.f32.mrf.mxu0
        %v1963 = vadd.f32 %v1914, %v1962
        %1964 = vmatmul.bf16.gmra.mxu0 %v1861
        %v1965 = vpop.f32.mrf.mxu0
        %v1966 = vadd.f32 %v1917, %v1965
        %v1967 = vpop.f32.mrf.mxu0
        %v1968 = vadd.f32 %v1919, %v1967
        %1969 = vmatmul.bf16.gmra.mxu0 %v1863
        %v1970 = vpop.f32.mrf.mxu0
        %v1971 = vadd.f32 %v1922, %v1970
        %v1972 = vpop.f32.mrf.mxu0
        %v1973 = vadd.f32 %v1924, %v1972
        %1974 = vmatmul.bf16.gmra.mxu0 %v1865
        %v1975 = vpop.f32.mrf.mxu0
        %v1976 = vadd.f32 %v1927, %v1975
        %v1977 = vpop.f32.mrf.mxu0
        %v1978 = vadd.f32 %v1929, %v1977
        %1979 = vdwg.mxu0
        %1980 = vmatpush.bf16.msra.mxu0 %v1769
        %1981 = vmatpush.bf16.msra.mxu0 %v1767
        %1982 = vmatpush.bf16.msra.mxu0 %v1765
        %1983 = vmatpush.bf16.msra.mxu0 %v1763
        %1984 = vmatpush.bf16.msra.mxu0 %v1761
        %1985 = vmatpush.bf16.msra.mxu0 %v1759
        %1986 = vmatpush.bf16.msra.mxu0 %v1757
        %1987 = vmatpush.bf16.msra.mxu0 %v1755
        %1988 = vmatmul.bf16.gmra.mxu0 %v1850
        %v1989 = vpop.f32.mrf.mxu0
        %v1990 = vadd.f32 0.0, %v1989
        %v1991 = vpop.f32.mrf.mxu0
        %v1992 = vadd.f32 0.0, %v1991
        %1993 = vmatmul.bf16.gmra.mxu0 %v1852
        %v1994 = vpop.f32.mrf.mxu0
        %v1995 = vadd.f32 0.0, %v1994
        %v1996 = vpop.f32.mrf.mxu0
        %v1997 = vadd.f32 0.0, %v1996
        %1998 = vmatmul.bf16.gmra.mxu0 %v1854
        %v1999 = vpop.f32.mrf.mxu0
        %v2000 = vadd.f32 0.0, %v1999
        %v2001 = vpop.f32.mrf.mxu0
        %v2002 = vadd.f32 0.0, %v2001
        %2003 = vmatmul.bf16.gmra.mxu0 %v1856
        %v2004 = vpop.f32.mrf.mxu0
        %v2005 = vadd.f32 0.0, %v2004
        %v2006 = vpop.f32.mrf.mxu0
        %v2007 = vadd.f32 0.0, %v2006
        %2008 = vmatmul.bf16.gmra.mxu0 %v1858
        %v2009 = vpop.f32.mrf.mxu0
        %v2010 = vadd.f32 0.0, %v2009
        %v2011 = vpop.f32.mrf.mxu0
        %v2012 = vadd.f32 0.0, %v2011
        %2013 = vmatmul.bf16.gmra.mxu0 %v1860
        %v2014 = vpop.f32.mrf.mxu0
        %v2015 = vadd.f32 0.0, %v2014
        %v2016 = vpop.f32.mrf.mxu0
        %v2017 = vadd.f32 0.0, %v2016
        %2018 = vmatmul.bf16.gmra.mxu0 %v1862
        %v2019 = vpop.f32.mrf.mxu0
        %v2020 = vadd.f32 0.0, %v2019
        %v2021 = vpop.f32.mrf.mxu0
        %v2022 = vadd.f32 0.0, %v2021
        %2023 = vmatmul.bf16.gmra.mxu0 %v1864
        %v2024 = vpop.f32.mrf.mxu0
        %v2025 = vadd.f32 0.0, %v2024
        %v2026 = vpop.f32.mrf.mxu0
        %v2027 = vadd.f32 0.0, %v2026
        %2028 = vdwg.mxu0
        %2029 = vmatpush.bf16.msra.mxu0 %v1785
        %2030 = vmatpush.bf16.msra.mxu0 %v1783
        %2031 = vmatpush.bf16.msra.mxu0 %v1781
        %2032 = vmatpush.bf16.msra.mxu0 %v1779
        %2033 = vmatpush.bf16.msra.mxu0 %v1777
        %2034 = vmatpush.bf16.msra.mxu0 %v1775
        %2035 = vmatpush.bf16.msra.mxu0 %v1773
        %2036 = vmatpush.bf16.msra.mxu0 %v1771
        %2037 = vmatmul.bf16.gmra.mxu0 %v1851
        %v2038 = vpop.f32.mrf.mxu0
        %v2039 = vadd.f32 %v1990, %v2038
        %v2040 = vpop.f32.mrf.mxu0
        %v2041 = vadd.f32 %v1992, %v2040
        %2042 = vmatmul.bf16.gmra.mxu0 %v1853
        %v2043 = vpop.f32.mrf.mxu0
        %v2044 = vadd.f32 %v1995, %v2043
        %v2045 = vpop.f32.mrf.mxu0
        %v2046 = vadd.f32 %v1997, %v2045
        %2047 = vmatmul.bf16.gmra.mxu0 %v1855
        %v2048 = vpop.f32.mrf.mxu0
        %v2049 = vadd.f32 %v2000, %v2048
        %v2050 = vpop.f32.mrf.mxu0
        %v2051 = vadd.f32 %v2002, %v2050
        %2052 = vmatmul.bf16.gmra.mxu0 %v1857
        %v2053 = vpop.f32.mrf.mxu0
        %v2054 = vadd.f32 %v2005, %v2053
        %v2055 = vpop.f32.mrf.mxu0
        %v2056 = vadd.f32 %v2007, %v2055
        %2057 = vmatmul.bf16.gmra.mxu0 %v1859
        %v2058 = vpop.f32.mrf.mxu0
        %v2059 = vadd.f32 %v2010, %v2058
        %v2060 = vpop.f32.mrf.mxu0
        %v2061 = vadd.f32 %v2012, %v2060
        %2062 = vmatmul.bf16.gmra.mxu0 %v1861
        %v2063 = vpop.f32.mrf.mxu0
        %v2064 = vadd.f32 %v2015, %v2063
        %v2065 = vpop.f32.mrf.mxu0
        %v2066 = vadd.f32 %v2017, %v2065
        %2067 = vmatmul.bf16.gmra.mxu0 %v1863
        %v2068 = vpop.f32.mrf.mxu0
        %v2069 = vadd.f32 %v2020, %v2068
        %v2070 = vpop.f32.mrf.mxu0
        %v2071 = vadd.f32 %v2022, %v2070
        %2072 = vmatmul.bf16.gmra.mxu0 %v1865
        %v2073 = vpop.f32.mrf.mxu0
        %v2074 = vadd.f32 %v2025, %v2073
        %v2075 = vpop.f32.mrf.mxu0
        %v2076 = vadd.f32 %v2027, %v2075
        %2077 = vdwg.mxu0
        %v2078 = vld [vmem:[#allocation10] sm:$0xff]
        %v2079 = vld [vmem:[#allocation10 + $0x8] sm:$0xff]
        %v2080 = vld [vmem:[#allocation10 + $0x10] sm:$0xff]
        %v2081 = vld [vmem:[#allocation10 + $0x18] sm:$0xff]
        %v2082 = vld [vmem:[#allocation10 + $0x20] sm:$0xff]
        %v2083 = vld [vmem:[#allocation10 + $0x28] sm:$0xff]
        %v2084 = vld [vmem:[#allocation10 + $0x30] sm:$0xff]
        %v2085 = vld [vmem:[#allocation10 + $0x38] sm:$0xff]
        %v2086 = vld [vmem:[#allocation10 + $0x40] sm:$0xff]
        %v2087 = vld [vmem:[#allocation10 + $0x48] sm:$0xff]
        %v2088 = vld [vmem:[#allocation10 + $0x50] sm:$0xff]
        %v2089 = vld [vmem:[#allocation10 + $0x58] sm:$0xff]
        %v2090 = vld [vmem:[#allocation10 + $0x60] sm:$0xff]
        %v2091 = vld [vmem:[#allocation10 + $0x68] sm:$0xff]
        %v2092 = vld [vmem:[#allocation10 + $0x70] sm:$0xff]
        %v2093 = vld [vmem:[#allocation10 + $0x78] sm:$0xff]
        %v2110 = vunpack.c.l.b16 %v2078
        %v2111 = vunpack.c.h.b16 %v2078
        %v2112 = vunpack.c.l.b16 %v2079
        %v2113 = vunpack.c.h.b16 %v2079
        %v2114 = vunpack.c.l.b16 %v2080
        %v2115 = vunpack.c.h.b16 %v2080
        %v2116 = vunpack.c.l.b16 %v2081
        %v2117 = vunpack.c.h.b16 %v2081
        %v2118 = vunpack.c.l.b16 %v2082
        %v2119 = vunpack.c.h.b16 %v2082
        %v2120 = vunpack.c.l.b16 %v2083
        %v2121 = vunpack.c.h.b16 %v2083
        %v2122 = vunpack.c.l.b16 %v2084
        %v2123 = vunpack.c.h.b16 %v2084
        %v2124 = vunpack.c.l.b16 %v2085
        %v2125 = vunpack.c.h.b16 %v2085
        %v2126 = vunpack.c.l.b16 %v2086
        %v2127 = vunpack.c.h.b16 %v2086
        %v2128 = vunpack.c.l.b16 %v2087
        %v2129 = vunpack.c.h.b16 %v2087
        %v2130 = vunpack.c.l.b16 %v2088
        %v2131 = vunpack.c.h.b16 %v2088
        %v2132 = vunpack.c.l.b16 %v2089
        %v2133 = vunpack.c.h.b16 %v2089
        %v2134 = vunpack.c.l.b16 %v2090
        %v2135 = vunpack.c.h.b16 %v2090
        %v2136 = vunpack.c.l.b16 %v2091
        %v2137 = vunpack.c.h.b16 %v2091
        %v2138 = vunpack.c.l.b16 %v2092
        %v2139 = vunpack.c.h.b16 %v2092
        %v2140 = vunpack.c.l.b16 %v2093
        %v2141 = vunpack.c.h.b16 %v2093
        %v2142 = vpack.c.b16 %v2112, %v2110
        %v2143 = vpack.c.b16 %v2113, %v2111
        %v2144 = vpack.c.b16 %v2116, %v2114
        %v2145 = vpack.c.b16 %v2117, %v2115
        %v2146 = vpack.c.b16 %v2120, %v2118
        %v2147 = vpack.c.b16 %v2121, %v2119
        %v2148 = vpack.c.b16 %v2124, %v2122
        %v2149 = vpack.c.b16 %v2125, %v2123
        %v2150 = vpack.c.b16 %v2128, %v2126
        %v2151 = vpack.c.b16 %v2129, %v2127
        %v2152 = vpack.c.b16 %v2132, %v2130
        %v2153 = vpack.c.b16 %v2133, %v2131
        %v2154 = vpack.c.b16 %v2136, %v2134
        %v2155 = vpack.c.b16 %v2137, %v2135
        %v2156 = vpack.c.b16 %v2140, %v2138
        %v2157 = vpack.c.b16 %v2141, %v2139
        %2174 = vmatpush.bf16.msra.mxu0 %v1768
        %2175 = vmatpush.bf16.msra.mxu0 %v1766
        %2176 = vmatpush.bf16.msra.mxu0 %v1764
        %2177 = vmatpush.bf16.msra.mxu0 %v1762
        %2178 = vmatpush.bf16.msra.mxu0 %v1760
        %2179 = vmatpush.bf16.msra.mxu0 %v1758
        %2180 = vmatpush.bf16.msra.mxu0 %v1756
        %2181 = vmatpush.bf16.msra.mxu0 %v1754
        %2182 = vmatmul.bf16.gmra.mxu0 %v2142
        %v2183 = vpop.f32.mrf.mxu0
        %v2184 = vadd.f32 0.0, %v2183
        %v2185 = vpop.f32.mrf.mxu0
        %v2186 = vadd.f32 0.0, %v2185
        %2187 = vmatmul.bf16.gmra.mxu0 %v2144
        %v2188 = vpop.f32.mrf.mxu0
        %v2189 = vadd.f32 0.0, %v2188
        %v2190 = vpop.f32.mrf.mxu0
        %v2191 = vadd.f32 0.0, %v2190
        %2192 = vmatmul.bf16.gmra.mxu0 %v2146
        %v2193 = vpop.f32.mrf.mxu0
        %v2194 = vadd.f32 0.0, %v2193
        %v2195 = vpop.f32.mrf.mxu0
        %v2196 = vadd.f32 0.0, %v2195
        %2197 = vmatmul.bf16.gmra.mxu0 %v2148
        %v2198 = vpop.f32.mrf.mxu0
        %v2199 = vadd.f32 0.0, %v2198
        %v2200 = vpop.f32.mrf.mxu0
        %v2201 = vadd.f32 0.0, %v2200
        %2202 = vmatmul.bf16.gmra.mxu0 %v2150
        %v2203 = vpop.f32.mrf.mxu0
        %v2204 = vadd.f32 0.0, %v2203
        %v2205 = vpop.f32.mrf.mxu0
        %v2206 = vadd.f32 0.0, %v2205
        %2207 = vmatmul.bf16.gmra.mxu0 %v2152
        %v2208 = vpop.f32.mrf.mxu0
        %v2209 = vadd.f32 0.0, %v2208
        %v2210 = vpop.f32.mrf.mxu0
        %v2211 = vadd.f32 0.0, %v2210
        %2212 = vmatmul.bf16.gmra.mxu0 %v2154
        %v2213 = vpop.f32.mrf.mxu0
        %v2214 = vadd.f32 0.0, %v2213
        %v2215 = vpop.f32.mrf.mxu0
        %v2216 = vadd.f32 0.0, %v2215
        %2217 = vmatmul.bf16.gmra.mxu0 %v2156
        %v2218 = vpop.f32.mrf.mxu0
        %v2219 = vadd.f32 0.0, %v2218
        %v2220 = vpop.f32.mrf.mxu0
        %v2221 = vadd.f32 0.0, %v2220
        %2222 = vdwg.mxu0
        %2223 = vmatpush.bf16.msra.mxu0 %v1784
        %2224 = vmatpush.bf16.msra.mxu0 %v1782
        %2225 = vmatpush.bf16.msra.mxu0 %v1780
        %2226 = vmatpush.bf16.msra.mxu0 %v1778
        %2227 = vmatpush.bf16.msra.mxu0 %v1776
        %2228 = vmatpush.bf16.msra.mxu0 %v1774
        %2229 = vmatpush.bf16.msra.mxu0 %v1772
        %2230 = vmatpush.bf16.msra.mxu0 %v1770
        %2231 = vmatmul.bf16.gmra.mxu0 %v2143
        %v2232 = vpop.f32.mrf.mxu0
        %v2233 = vadd.f32 %v2184, %v2232
        %v2234 = vpop.f32.mrf.mxu0
        %v2235 = vadd.f32 %v2186, %v2234
        %2236 = vmatmul.bf16.gmra.mxu0 %v2145
        %v2237 = vpop.f32.mrf.mxu0
        %v2238 = vadd.f32 %v2189, %v2237
        %v2239 = vpop.f32.mrf.mxu0
        %v2240 = vadd.f32 %v2191, %v2239
        %2241 = vmatmul.bf16.gmra.mxu0 %v2147
        %v2242 = vpop.f32.mrf.mxu0
        %v2243 = vadd.f32 %v2194, %v2242
        %v2244 = vpop.f32.mrf.mxu0
        %v2245 = vadd.f32 %v2196, %v2244
        %2246 = vmatmul.bf16.gmra.mxu0 %v2149
        %v2247 = vpop.f32.mrf.mxu0
        %v2248 = vadd.f32 %v2199, %v2247
        %v2249 = vpop.f32.mrf.mxu0
        %v2250 = vadd.f32 %v2201, %v2249
        %2251 = vmatmul.bf16.gmra.mxu0 %v2151
        %v2252 = vpop.f32.mrf.mxu0
        %v2253 = vadd.f32 %v2204, %v2252
        %v2254 = vpop.f32.mrf.mxu0
        %v2255 = vadd.f32 %v2206, %v2254
        %2256 = vmatmul.bf16.gmra.mxu0 %v2153
        %v2257 = vpop.f32.mrf.mxu0
        %v2258 = vadd.f32 %v2209, %v2257
        %v2259 = vpop.f32.mrf.mxu0
        %v2260 = vadd.f32 %v2211, %v2259
        %2261 = vmatmul.bf16.gmra.mxu0 %v2155
        %v2262 = vpop.f32.mrf.mxu0
        %v2263 = vadd.f32 %v2214, %v2262
        %v2264 = vpop.f32.mrf.mxu0
        %v2265 = vadd.f32 %v2216, %v2264
        %2266 = vmatmul.bf16.gmra.mxu0 %v2157
        %v2267 = vpop.f32.mrf.mxu0
        %v2268 = vadd.f32 %v2219, %v2267
        %v2269 = vpop.f32.mrf.mxu0
        %v2270 = vadd.f32 %v2221, %v2269
        %2271 = vdwg.mxu0
        %2272 = vmatpush.bf16.msra.mxu0 %v1769
        %2273 = vmatpush.bf16.msra.mxu0 %v1767
        %2274 = vmatpush.bf16.msra.mxu0 %v1765
        %2275 = vmatpush.bf16.msra.mxu0 %v1763
        %2276 = vmatpush.bf16.msra.mxu0 %v1761
        %2277 = vmatpush.bf16.msra.mxu0 %v1759
        %2278 = vmatpush.bf16.msra.mxu0 %v1757
        %2279 = vmatpush.bf16.msra.mxu0 %v1755
        %2280 = vmatmul.bf16.gmra.mxu0 %v2142
        %v2281 = vpop.f32.mrf.mxu0
        %v2282 = vadd.f32 0.0, %v2281
        %v2283 = vpop.f32.mrf.mxu0
        %v2284 = vadd.f32 0.0, %v2283
        %2285 = vmatmul.bf16.gmra.mxu0 %v2144
        %v2286 = vpop.f32.mrf.mxu0
        %v2287 = vadd.f32 0.0, %v2286
        %v2288 = vpop.f32.mrf.mxu0
        %v2289 = vadd.f32 0.0, %v2288
        %2290 = vmatmul.bf16.gmra.mxu0 %v2146
        %v2291 = vpop.f32.mrf.mxu0
        %v2292 = vadd.f32 0.0, %v2291
        %v2293 = vpop.f32.mrf.mxu0
        %v2294 = vadd.f32 0.0, %v2293
        %2295 = vmatmul.bf16.gmra.mxu0 %v2148
        %v2296 = vpop.f32.mrf.mxu0
        %v2297 = vadd.f32 0.0, %v2296
        %v2298 = vpop.f32.mrf.mxu0
        %v2299 = vadd.f32 0.0, %v2298
        %2300 = vmatmul.bf16.gmra.mxu0 %v2150
        %v2301 = vpop.f32.mrf.mxu0
        %v2302 = vadd.f32 0.0, %v2301
        %v2303 = vpop.f32.mrf.mxu0
        %v2304 = vadd.f32 0.0, %v2303
        %2305 = vmatmul.bf16.gmra.mxu0 %v2152
        %v2306 = vpop.f32.mrf.mxu0
        %v2307 = vadd.f32 0.0, %v2306
        %v2308 = vpop.f32.mrf.mxu0
        %v2309 = vadd.f32 0.0, %v2308
        %2310 = vmatmul.bf16.gmra.mxu0 %v2154
        %v2311 = vpop.f32.mrf.mxu0
        %v2312 = vadd.f32 0.0, %v2311
        %v2313 = vpop.f32.mrf.mxu0
        %v2314 = vadd.f32 0.0, %v2313
        %2315 = vmatmul.bf16.gmra.mxu0 %v2156
        %v2316 = vpop.f32.mrf.mxu0
        %v2317 = vadd.f32 0.0, %v2316
        %v2318 = vpop.f32.mrf.mxu0
        %v2319 = vadd.f32 0.0, %v2318
        %2320 = vdwg.mxu0
        %2321 = vmatpush.bf16.msra.mxu0 %v1785
        %2322 = vmatpush.bf16.msra.mxu0 %v1783
        %2323 = vmatpush.bf16.msra.mxu0 %v1781
        %2324 = vmatpush.bf16.msra.mxu0 %v1779
        %2325 = vmatpush.bf16.msra.mxu0 %v1777
        %2326 = vmatpush.bf16.msra.mxu0 %v1775
        %2327 = vmatpush.bf16.msra.mxu0 %v1773
        %2328 = vmatpush.bf16.msra.mxu0 %v1771
        %2329 = vmatmul.bf16.gmra.mxu0 %v2143
        %v2330 = vpop.f32.mrf.mxu0
        %v2331 = vadd.f32 %v2282, %v2330
        %v2332 = vpop.f32.mrf.mxu0
        %v2333 = vadd.f32 %v2284, %v2332
        %2334 = vmatmul.bf16.gmra.mxu0 %v2145
        %v2335 = vpop.f32.mrf.mxu0
        %v2336 = vadd.f32 %v2287, %v2335
        %v2337 = vpop.f32.mrf.mxu0
        %v2338 = vadd.f32 %v2289, %v2337
        %2339 = vmatmul.bf16.gmra.mxu0 %v2147
        %v2340 = vpop.f32.mrf.mxu0
        %v2341 = vadd.f32 %v2292, %v2340
        %v2342 = vpop.f32.mrf.mxu0
        %v2343 = vadd.f32 %v2294, %v2342
        %2344 = vmatmul.bf16.gmra.mxu0 %v2149
        %v2345 = vpop.f32.mrf.mxu0
        %v2346 = vadd.f32 %v2297, %v2345
        %v2347 = vpop.f32.mrf.mxu0
        %v2348 = vadd.f32 %v2299, %v2347
        %2349 = vmatmul.bf16.gmra.mxu0 %v2151
        %v2350 = vpop.f32.mrf.mxu0
        %v2351 = vadd.f32 %v2302, %v2350
        %v2352 = vpop.f32.mrf.mxu0
        %v2353 = vadd.f32 %v2304, %v2352
        %2354 = vmatmul.bf16.gmra.mxu0 %v2153
        %v2355 = vpop.f32.mrf.mxu0
        %v2356 = vadd.f32 %v2307, %v2355
        %v2357 = vpop.f32.mrf.mxu0
        %v2358 = vadd.f32 %v2309, %v2357
        %2359 = vmatmul.bf16.gmra.mxu0 %v2155
        %v2360 = vpop.f32.mrf.mxu0
        %v2361 = vadd.f32 %v2312, %v2360
        %v2362 = vpop.f32.mrf.mxu0
        %v2363 = vadd.f32 %v2314, %v2362
        %2364 = vmatmul.bf16.gmra.mxu0 %v2157
        %v2365 = vpop.f32.mrf.mxu0
        %v2366 = vadd.f32 %v2317, %v2365
        %v2367 = vpop.f32.mrf.mxu0
        %v2368 = vadd.f32 %v2319, %v2367
        %2369 = vdwg.mxu0
        %v2370 = vmax.f32 %v1941, %v2233
        %v2371 = vmax.f32 %v2039, %v2331
        %v2372 = vmax.f32 %v1943, %v2235
        %v2373 = vmax.f32 %v2041, %v2333
        %v2374 = vmax.f32 %v1946, %v2238
        %v2375 = vmax.f32 %v2044, %v2336
        %v2376 = vmax.f32 %v1948, %v2240
        %v2377 = vmax.f32 %v2046, %v2338
        %v2378 = vmax.f32 %v1951, %v2243
        %v2379 = vmax.f32 %v2049, %v2341
        %v2380 = vmax.f32 %v1953, %v2245
        %v2381 = vmax.f32 %v2051, %v2343
        %v2382 = vmax.f32 %v1956, %v2248
        %v2383 = vmax.f32 %v2054, %v2346
        %v2384 = vmax.f32 %v1958, %v2250
        %v2385 = vmax.f32 %v2056, %v2348
        %v2386 = vmax.f32 %v1961, %v2253
        %v2387 = vmax.f32 %v2059, %v2351
        %v2388 = vmax.f32 %v1963, %v2255
        %v2389 = vmax.f32 %v2061, %v2353
        %v2390 = vmax.f32 %v1966, %v2258
        %v2391 = vmax.f32 %v2064, %v2356
        %v2392 = vmax.f32 %v1968, %v2260
        %v2393 = vmax.f32 %v2066, %v2358
        %v2394 = vmax.f32 %v1971, %v2263
        %v2395 = vmax.f32 %v2069, %v2361
        %v2396 = vmax.f32 %v1973, %v2265
        %v2397 = vmax.f32 %v2071, %v2363
        %v2398 = vmax.f32 %v1976, %v2268
        %v2399 = vmax.f32 %v2074, %v2366
        %v2400 = vmax.f32 %v1978, %v2270
        %v2401 = vmax.f32 %v2076, %v2368
        %v2402 = vpack.c.bf16 %v2372, %v2370
        %v2403 = vpack.c.bf16 %v2373, %v2371
        %v2404 = vpack.c.bf16 %v2376, %v2374
        %v2405 = vpack.c.bf16 %v2377, %v2375
        %v2406 = vpack.c.bf16 %v2380, %v2378
        %v2407 = vpack.c.bf16 %v2381, %v2379
        %v2408 = vpack.c.bf16 %v2384, %v2382
        %v2409 = vpack.c.bf16 %v2385, %v2383
        %v2410 = vpack.c.bf16 %v2388, %v2386
        %v2411 = vpack.c.bf16 %v2389, %v2387
        %v2412 = vpack.c.bf16 %v2392, %v2390
        %v2413 = vpack.c.bf16 %v2393, %v2391
        %v2414 = vpack.c.bf16 %v2396, %v2394
        %v2415 = vpack.c.bf16 %v2397, %v2395
        %v2416 = vpack.c.bf16 %v2400, %v2398
        %v2417 = vpack.c.bf16 %v2401, %v2399
        %v2418 = vld [vmem:[#allocation12] sm:$0xf]
        %v2419 = vld [vmem:[#allocation12 + $0x4] sm:$0xf]
        %v2420 = vld [vmem:[#allocation12 + $0x8] sm:$0xf]
        %v2421 = vld [vmem:[#allocation12 + $0xc] sm:$0xf]
        %v2422 = vld [vmem:[#allocation12 + $0x10] sm:$0xf]
        %v2423 = vld [vmem:[#allocation12 + $0x14] sm:$0xf]
        %v2424 = vld [vmem:[#allocation12 + $0x18] sm:$0xf]
        %v2425 = vld [vmem:[#allocation12 + $0x1c] sm:$0xf]
        %v2426 = vld [vmem:[#allocation12 + $0x20] sm:$0xf]
        %v2427 = vld [vmem:[#allocation12 + $0x24] sm:$0xf]
        %v2428 = vld [vmem:[#allocation12 + $0x28] sm:$0xf]
        %v2429 = vld [vmem:[#allocation12 + $0x2c] sm:$0xf]
        %v2430 = vld [vmem:[#allocation12 + $0x30] sm:$0xf]
        %v2431 = vld [vmem:[#allocation12 + $0x34] sm:$0xf]
        %v2432 = vld [vmem:[#allocation12 + $0x38] sm:$0xf]
        %v2433 = vld [vmem:[#allocation12 + $0x3c] sm:$0xf]
        %v2434 = vld [vmem:[#allocation12 + $0x40] sm:$0xf]
        %v2435 = vld [vmem:[#allocation12 + $0x44] sm:$0xf]
        %v2436 = vld [vmem:[#allocation12 + $0x48] sm:$0xf]
        %v2437 = vld [vmem:[#allocation12 + $0x4c] sm:$0xf]
        %v2438 = vld [vmem:[#allocation12 + $0x50] sm:$0xf]
        %v2439 = vld [vmem:[#allocation12 + $0x54] sm:$0xf]
        %v2440 = vld [vmem:[#allocation12 + $0x58] sm:$0xf]
        %v2441 = vld [vmem:[#allocation12 + $0x5c] sm:$0xf]
        %v2442 = vld [vmem:[#allocation12 + $0x60] sm:$0xf]
        %v2443 = vld [vmem:[#allocation12 + $0x64] sm:$0xf]
        %v2444 = vld [vmem:[#allocation12 + $0x68] sm:$0xf]
        %v2445 = vld [vmem:[#allocation12 + $0x6c] sm:$0xf]
        %v2446 = vld [vmem:[#allocation12 + $0x70] sm:$0xf]
        %v2447 = vld [vmem:[#allocation12 + $0x74] sm:$0xf]
        %v2448 = vld [vmem:[#allocation12 + $0x78] sm:$0xf]
        %v2449 = vld [vmem:[#allocation12 + $0x7c] sm:$0xf]
        %v2482 = vunpack.c.l.b16 %v2418
        %v2483 = vunpack.c.l.b16 %v2419
        %v2484 = vunpack.c.l.b16 %v2420
        %v2485 = vunpack.c.l.b16 %v2421
        %v2486 = vunpack.c.l.b16 %v2422
        %v2487 = vunpack.c.l.b16 %v2423
        %v2488 = vunpack.c.l.b16 %v2424
        %v2489 = vunpack.c.l.b16 %v2425
        %v2490 = vunpack.c.l.b16 %v2426
        %v2491 = vunpack.c.l.b16 %v2427
        %v2492 = vunpack.c.l.b16 %v2428
        %v2493 = vunpack.c.l.b16 %v2429
        %v2494 = vunpack.c.l.b16 %v2430
        %v2495 = vunpack.c.l.b16 %v2431
        %v2496 = vunpack.c.l.b16 %v2432
        %v2497 = vunpack.c.l.b16 %v2433
        %v2498 = vunpack.c.l.b16 %v2434
        %v2499 = vunpack.c.l.b16 %v2435
        %v2500 = vunpack.c.l.b16 %v2436
        %v2501 = vunpack.c.l.b16 %v2437
        %v2502 = vunpack.c.l.b16 %v2438
        %v2503 = vunpack.c.l.b16 %v2439
        %v2504 = vunpack.c.l.b16 %v2440
        %v2505 = vunpack.c.l.b16 %v2441
        %v2506 = vunpack.c.l.b16 %v2442
        %v2507 = vunpack.c.l.b16 %v2443
        %v2508 = vunpack.c.l.b16 %v2444
        %v2509 = vunpack.c.l.b16 %v2445
        %v2510 = vunpack.c.l.b16 %v2446
        %v2511 = vunpack.c.l.b16 %v2447
        %v2512 = vunpack.c.l.b16 %v2448
        %v2513 = vunpack.c.l.b16 %v2449
        %v2514 = vpack.c.b16 %v2483, %v2482
        %v2515 = vpack.c.b16 %v2485, %v2484
        %v2516 = vpack.c.b16 %v2487, %v2486
        %v2517 = vpack.c.b16 %v2489, %v2488
        %v2518 = vpack.c.b16 %v2491, %v2490
        %v2519 = vpack.c.b16 %v2493, %v2492
        %v2520 = vpack.c.b16 %v2495, %v2494
        %v2521 = vpack.c.b16 %v2497, %v2496
        %v2522 = vpack.c.b16 %v2499, %v2498
        %v2523 = vpack.c.b16 %v2501, %v2500
        %v2524 = vpack.c.b16 %v2503, %v2502
        %v2525 = vpack.c.b16 %v2505, %v2504
        %v2526 = vpack.c.b16 %v2507, %v2506
        %v2527 = vpack.c.b16 %v2509, %v2508
        %v2528 = vpack.c.b16 %v2511, %v2510
        %v2529 = vpack.c.b16 %v2513, %v2512
        %2546 = vmatpush.bf16.msra.mxu0 %v2521
        %2547 = vmatpush.bf16.msra.mxu0 %v2520
        %2548 = vmatpush.bf16.msra.mxu0 %v2519
        %2549 = vmatpush.bf16.msra.mxu0 %v2518
        %2550 = vmatpush.bf16.msra.mxu0 %v2517
        %2551 = vmatpush.bf16.msra.mxu0 %v2516
        %2552 = vmatpush.bf16.msra.mxu0 %v2515
        %2553 = vmatpush.bf16.msra.mxu0 %v2514
        %2554 = vmatmul.bf16.gmra.mxu0 %v2402
        %v2555 = vpop.f32.mrf.mxu0
        %v2556 = vadd.f32 0.0, %v2555
        %v2557 = vpop.f32.mrf.mxu0
        %v2558 = vadd.f32 0.0, %v2557
        %2559 = vmatmul.bf16.gmra.mxu0 %v2404
        %v2560 = vpop.f32.mrf.mxu0
        %v2561 = vadd.f32 0.0, %v2560
        %v2562 = vpop.f32.mrf.mxu0
        %v2563 = vadd.f32 0.0, %v2562
        %2564 = vmatmul.bf16.gmra.mxu0 %v2406
        %v2565 = vpop.f32.mrf.mxu0
        %v2566 = vadd.f32 0.0, %v2565
        %v2567 = vpop.f32.mrf.mxu0
        %v2568 = vadd.f32 0.0, %v2567
        %2569 = vmatmul.bf16.gmra.mxu0 %v2408
        %v2570 = vpop.f32.mrf.mxu0
        %v2571 = vadd.f32 0.0, %v2570
        %v2572 = vpop.f32.mrf.mxu0
        %v2573 = vadd.f32 0.0, %v2572
        %2574 = vmatmul.bf16.gmra.mxu0 %v2410
        %v2575 = vpop.f32.mrf.mxu0
        %v2576 = vadd.f32 0.0, %v2575
        %v2577 = vpop.f32.mrf.mxu0
        %v2578 = vadd.f32 0.0, %v2577
        %2579 = vmatmul.bf16.gmra.mxu0 %v2412
        %v2580 = vpop.f32.mrf.mxu0
        %v2581 = vadd.f32 0.0, %v2580
        %v2582 = vpop.f32.mrf.mxu0
        %v2583 = vadd.f32 0.0, %v2582
        %2584 = vmatmul.bf16.gmra.mxu0 %v2414
        %v2585 = vpop.f32.mrf.mxu0
        %v2586 = vadd.f32 0.0, %v2585
        %v2587 = vpop.f32.mrf.mxu0
        %v2588 = vadd.f32 0.0, %v2587
        %2589 = vmatmul.bf16.gmra.mxu0 %v2416
        %v2590 = vpop.f32.mrf.mxu0
        %v2591 = vadd.f32 0.0, %v2590
        %v2592 = vpop.f32.mrf.mxu0
        %v2593 = vadd.f32 0.0, %v2592
        %2594 = vdwg.mxu0
        %2595 = vmatpush.bf16.msra.mxu0 %v2529
        %2596 = vmatpush.bf16.msra.mxu0 %v2528
        %2597 = vmatpush.bf16.msra.mxu0 %v2527
        %2598 = vmatpush.bf16.msra.mxu0 %v2526
        %2599 = vmatpush.bf16.msra.mxu0 %v2525
        %2600 = vmatpush.bf16.msra.mxu0 %v2524
        %2601 = vmatpush.bf16.msra.mxu0 %v2523
        %2602 = vmatpush.bf16.msra.mxu0 %v2522
        %2603 = vmatmul.bf16.gmra.mxu0 %v2403
        %v2604 = vpop.f32.mrf.mxu0
        %v2605 = vadd.f32 %v2556, %v2604
        %v2606 = vpop.f32.mrf.mxu0
        %v2607 = vadd.f32 %v2558, %v2606
        %2608 = vmatmul.bf16.gmra.mxu0 %v2405
        %v2609 = vpop.f32.mrf.mxu0
        %v2610 = vadd.f32 %v2561, %v2609
        %v2611 = vpop.f32.mrf.mxu0
        %v2612 = vadd.f32 %v2563, %v2611
        %2613 = vmatmul.bf16.gmra.mxu0 %v2407
        %v2614 = vpop.f32.mrf.mxu0
        %v2615 = vadd.f32 %v2566, %v2614
        %v2616 = vpop.f32.mrf.mxu0
        %v2617 = vadd.f32 %v2568, %v2616
        %2618 = vmatmul.bf16.gmra.mxu0 %v2409
        %v2619 = vpop.f32.mrf.mxu0
        %v2620 = vadd.f32 %v2571, %v2619
        %v2621 = vpop.f32.mrf.mxu0
        %v2622 = vadd.f32 %v2573, %v2621
        %2623 = vmatmul.bf16.gmra.mxu0 %v2411
        %v2624 = vpop.f32.mrf.mxu0
        %v2625 = vadd.f32 %v2576, %v2624
        %v2626 = vpop.f32.mrf.mxu0
        %v2627 = vadd.f32 %v2578, %v2626
        %2628 = vmatmul.bf16.gmra.mxu0 %v2413
        %v2629 = vpop.f32.mrf.mxu0
        %v2630 = vadd.f32 %v2581, %v2629
        %v2631 = vpop.f32.mrf.mxu0
        %v2632 = vadd.f32 %v2583, %v2631
        %2633 = vmatmul.bf16.gmra.mxu0 %v2415
        %v2634 = vpop.f32.mrf.mxu0
        %v2635 = vadd.f32 %v2586, %v2634
        %v2636 = vpop.f32.mrf.mxu0
        %v2637 = vadd.f32 %v2588, %v2636
        %2638 = vmatmul.bf16.gmra.mxu0 %v2417
        %v2639 = vpop.f32.mrf.mxu0
        %v2640 = vadd.f32 %v2591, %v2639
        %v2641 = vpop.f32.mrf.mxu0
        %v2642 = vadd.f32 %v2593, %v2641
        %2643 = vdwg.mxu0
        %v2644 = vld [vmem:[#allocation13] sm:$0xf]
        %v2645 = vld [vmem:[#allocation13 + $0x4] sm:$0xf]
        %v2646 = vld [vmem:[#allocation13 + $0x8] sm:$0xf]
        %v2647 = vld [vmem:[#allocation13 + $0xc] sm:$0xf]
        %v2648 = vld [vmem:[#allocation13 + $0x10] sm:$0xf]
        %v2649 = vld [vmem:[#allocation13 + $0x14] sm:$0xf]
        %v2650 = vld [vmem:[#allocation13 + $0x18] sm:$0xf]
        %v2651 = vld [vmem:[#allocation13 + $0x1c] sm:$0xf]
        %v2652 = vld [vmem:[#allocation13 + $0x20] sm:$0xf]
        %v2653 = vld [vmem:[#allocation13 + $0x24] sm:$0xf]
        %v2654 = vld [vmem:[#allocation13 + $0x28] sm:$0xf]
        %v2655 = vld [vmem:[#allocation13 + $0x2c] sm:$0xf]
        %v2656 = vld [vmem:[#allocation13 + $0x30] sm:$0xf]
        %v2657 = vld [vmem:[#allocation13 + $0x34] sm:$0xf]
        %v2658 = vld [vmem:[#allocation13 + $0x38] sm:$0xf]
        %v2659 = vld [vmem:[#allocation13 + $0x3c] sm:$0xf]
        %v2660 = vld [vmem:[#allocation13 + $0x40] sm:$0xf]
        %v2661 = vld [vmem:[#allocation13 + $0x44] sm:$0xf]
        %v2662 = vld [vmem:[#allocation13 + $0x48] sm:$0xf]
        %v2663 = vld [vmem:[#allocation13 + $0x4c] sm:$0xf]
        %v2664 = vld [vmem:[#allocation13 + $0x50] sm:$0xf]
        %v2665 = vld [vmem:[#allocation13 + $0x54] sm:$0xf]
        %v2666 = vld [vmem:[#allocation13 + $0x58] sm:$0xf]
        %v2667 = vld [vmem:[#allocation13 + $0x5c] sm:$0xf]
        %v2668 = vld [vmem:[#allocation13 + $0x60] sm:$0xf]
        %v2669 = vld [vmem:[#allocation13 + $0x64] sm:$0xf]
        %v2670 = vld [vmem:[#allocation13 + $0x68] sm:$0xf]
        %v2671 = vld [vmem:[#allocation13 + $0x6c] sm:$0xf]
        %v2672 = vld [vmem:[#allocation13 + $0x70] sm:$0xf]
        %v2673 = vld [vmem:[#allocation13 + $0x74] sm:$0xf]
        %v2674 = vld [vmem:[#allocation13 + $0x78] sm:$0xf]
        %v2675 = vld [vmem:[#allocation13 + $0x7c] sm:$0xf]
        %v2708 = vunpack.c.l.b16 %v2644
        %v2709 = vunpack.c.l.b16 %v2645
        %v2710 = vunpack.c.l.b16 %v2646
        %v2711 = vunpack.c.l.b16 %v2647
        %v2712 = vunpack.c.l.b16 %v2648
        %v2713 = vunpack.c.l.b16 %v2649
        %v2714 = vunpack.c.l.b16 %v2650
        %v2715 = vunpack.c.l.b16 %v2651
        %v2716 = vunpack.c.l.b16 %v2652
        %v2717 = vunpack.c.l.b16 %v2653
        %v2718 = vunpack.c.l.b16 %v2654
        %v2719 = vunpack.c.l.b16 %v2655
        %v2720 = vunpack.c.l.b16 %v2656
        %v2721 = vunpack.c.l.b16 %v2657
        %v2722 = vunpack.c.l.b16 %v2658
        %v2723 = vunpack.c.l.b16 %v2659
        %v2724 = vunpack.c.l.b16 %v2660
        %v2725 = vunpack.c.l.b16 %v2661
        %v2726 = vunpack.c.l.b16 %v2662
        %v2727 = vunpack.c.l.b16 %v2663
        %v2728 = vunpack.c.l.b16 %v2664
        %v2729 = vunpack.c.l.b16 %v2665
        %v2730 = vunpack.c.l.b16 %v2666
        %v2731 = vunpack.c.l.b16 %v2667
        %v2732 = vunpack.c.l.b16 %v2668
        %v2733 = vunpack.c.l.b16 %v2669
        %v2734 = vunpack.c.l.b16 %v2670
        %v2735 = vunpack.c.l.b16 %v2671
        %v2736 = vunpack.c.l.b16 %v2672
        %v2737 = vunpack.c.l.b16 %v2673
        %v2738 = vunpack.c.l.b16 %v2674
        %v2739 = vunpack.c.l.b16 %v2675
        %v2740 = vpack.c.b16 %v2709, %v2708
        %v2741 = vpack.c.b16 %v2711, %v2710
        %v2742 = vpack.c.b16 %v2713, %v2712
        %v2743 = vpack.c.b16 %v2715, %v2714
        %v2744 = vpack.c.b16 %v2717, %v2716
        %v2745 = vpack.c.b16 %v2719, %v2718
        %v2746 = vpack.c.b16 %v2721, %v2720
        %v2747 = vpack.c.b16 %v2723, %v2722
        %v2748 = vpack.c.b16 %v2725, %v2724
        %v2749 = vpack.c.b16 %v2727, %v2726
        %v2750 = vpack.c.b16 %v2729, %v2728
        %v2751 = vpack.c.b16 %v2731, %v2730
        %v2752 = vpack.c.b16 %v2733, %v2732
        %v2753 = vpack.c.b16 %v2735, %v2734
        %v2754 = vpack.c.b16 %v2737, %v2736
        %v2755 = vpack.c.b16 %v2739, %v2738
        %2772 = vmatpush.bf16.msra.mxu0 %v2747
        %2773 = vmatpush.bf16.msra.mxu0 %v2746
        %2774 = vmatpush.bf16.msra.mxu0 %v2745
        %2775 = vmatpush.bf16.msra.mxu0 %v2744
        %2776 = vmatpush.bf16.msra.mxu0 %v2743
        %2777 = vmatpush.bf16.msra.mxu0 %v2742
        %2778 = vmatpush.bf16.msra.mxu0 %v2741
        %2779 = vmatpush.bf16.msra.mxu0 %v2740
        %2780 = vmatmul.bf16.gmra.mxu0 %v2402
        %v2781 = vpop.f32.mrf.mxu0
        %v2782 = vadd.f32 0.0, %v2781
        %v2783 = vpop.f32.mrf.mxu0
        %v2784 = vadd.f32 0.0, %v2783
        %2785 = vmatmul.bf16.gmra.mxu0 %v2404
        %v2786 = vpop.f32.mrf.mxu0
        %v2787 = vadd.f32 0.0, %v2786
        %v2788 = vpop.f32.mrf.mxu0
        %v2789 = vadd.f32 0.0, %v2788
        %2790 = vmatmul.bf16.gmra.mxu0 %v2406
        %v2791 = vpop.f32.mrf.mxu0
        %v2792 = vadd.f32 0.0, %v2791
        %v2793 = vpop.f32.mrf.mxu0
        %v2794 = vadd.f32 0.0, %v2793
        %2795 = vmatmul.bf16.gmra.mxu0 %v2408
        %v2796 = vpop.f32.mrf.mxu0
        %v2797 = vadd.f32 0.0, %v2796
        %v2798 = vpop.f32.mrf.mxu0
        %v2799 = vadd.f32 0.0, %v2798
        %2800 = vmatmul.bf16.gmra.mxu0 %v2410
        %v2801 = vpop.f32.mrf.mxu0
        %v2802 = vadd.f32 0.0, %v2801
        %v2803 = vpop.f32.mrf.mxu0
        %v2804 = vadd.f32 0.0, %v2803
        %2805 = vmatmul.bf16.gmra.mxu0 %v2412
        %v2806 = vpop.f32.mrf.mxu0
        %v2807 = vadd.f32 0.0, %v2806
        %v2808 = vpop.f32.mrf.mxu0
        %v2809 = vadd.f32 0.0, %v2808
        %2810 = vmatmul.bf16.gmra.mxu0 %v2414
        %v2811 = vpop.f32.mrf.mxu0
        %v2812 = vadd.f32 0.0, %v2811
        %v2813 = vpop.f32.mrf.mxu0
        %v2814 = vadd.f32 0.0, %v2813
        %2815 = vmatmul.bf16.gmra.mxu0 %v2416
        %v2816 = vpop.f32.mrf.mxu0
        %v2817 = vadd.f32 0.0, %v2816
        %v2818 = vpop.f32.mrf.mxu0
        %v2819 = vadd.f32 0.0, %v2818
        %2820 = vdwg.mxu0
        %2821 = vmatpush.bf16.msra.mxu0 %v2755
        %2822 = vmatpush.bf16.msra.mxu0 %v2754
        %2823 = vmatpush.bf16.msra.mxu0 %v2753
        %2824 = vmatpush.bf16.msra.mxu0 %v2752
        %2825 = vmatpush.bf16.msra.mxu0 %v2751
        %2826 = vmatpush.bf16.msra.mxu0 %v2750
        %2827 = vmatpush.bf16.msra.mxu0 %v2749
        %2828 = vmatpush.bf16.msra.mxu0 %v2748
        %2829 = vmatmul.bf16.gmra.mxu0 %v2403
        %v2830 = vpop.f32.mrf.mxu0
        %v2831 = vadd.f32 %v2782, %v2830
        %v2832 = vpop.f32.mrf.mxu0
        %v2833 = vadd.f32 %v2784, %v2832
        %2834 = vmatmul.bf16.gmra.mxu0 %v2405
        %v2835 = vpop.f32.mrf.mxu0
        %v2836 = vadd.f32 %v2787, %v2835
        %v2837 = vpop.f32.mrf.mxu0
        %v2838 = vadd.f32 %v2789, %v2837
        %2839 = vmatmul.bf16.gmra.mxu0 %v2407
        %v2840 = vpop.f32.mrf.mxu0
        %v2841 = vadd.f32 %v2792, %v2840
        %v2842 = vpop.f32.mrf.mxu0
        %v2843 = vadd.f32 %v2794, %v2842
        %2844 = vmatmul.bf16.gmra.mxu0 %v2409
        %v2845 = vpop.f32.mrf.mxu0
        %v2846 = vadd.f32 %v2797, %v2845
        %v2847 = vpop.f32.mrf.mxu0
        %v2848 = vadd.f32 %v2799, %v2847
        %2849 = vmatmul.bf16.gmra.mxu0 %v2411
        %v2850 = vpop.f32.mrf.mxu0
        %v2851 = vadd.f32 %v2802, %v2850
        %v2852 = vpop.f32.mrf.mxu0
        %v2853 = vadd.f32 %v2804, %v2852
        %2854 = vmatmul.bf16.gmra.mxu0 %v2413
        %v2855 = vpop.f32.mrf.mxu0
        %v2856 = vadd.f32 %v2807, %v2855
        %v2857 = vpop.f32.mrf.mxu0
        %v2858 = vadd.f32 %v2809, %v2857
        %2859 = vmatmul.bf16.gmra.mxu0 %v2415
        %v2860 = vpop.f32.mrf.mxu0
        %v2861 = vadd.f32 %v2812, %v2860
        %v2862 = vpop.f32.mrf.mxu0
        %v2863 = vadd.f32 %v2814, %v2862
        %2864 = vmatmul.bf16.gmra.mxu0 %v2417
        %v2865 = vpop.f32.mrf.mxu0
        %v2866 = vadd.f32 %v2817, %v2865
        %v2867 = vpop.f32.mrf.mxu0
        %v2868 = vadd.f32 %v2819, %v2867
        %2869 = vdwg.mxu0
        %v2870 = vmax.f32 %v2605, %v2831
        %v2871 = vmax.f32 %v2607, %v2833
        %v2872 = vmax.f32 %v2610, %v2836
        %v2873 = vmax.f32 %v2612, %v2838
        %v2874 = vmax.f32 %v2615, %v2841
        %v2875 = vmax.f32 %v2617, %v2843
        %v2876 = vmax.f32 %v2620, %v2846
        %v2877 = vmax.f32 %v2622, %v2848
        %v2878 = vmax.f32 %v2625, %v2851
        %v2879 = vmax.f32 %v2627, %v2853
        %v2880 = vmax.f32 %v2630, %v2856
        %v2881 = vmax.f32 %v2632, %v2858
        %v2882 = vmax.f32 %v2635, %v2861
        %v2883 = vmax.f32 %v2637, %v2863
        %v2884 = vmax.f32 %v2640, %v2866
        %v2885 = vmax.f32 %v2642, %v2868
        %2886 = vst [vmem:[#allocation3] sm:$0x1] 0.0
        %2887 = vst [vmem:[#allocation3 + $0x18] sm:$0x1] 0.0
        %2888 = vst [vmem:[#allocation3 + $0x30] sm:$0x1] 0.0
        %2889 = vst [vmem:[#allocation3 + $0x48] sm:$0x1] 0.0
        %2890 = vst [vmem:[#allocation3 + $0x60] sm:$0x1] 0.0
        %2891 = vst [vmem:[#allocation3 + $0x78] sm:$0x1] 0.0
        %2892 = vst [vmem:[#allocation3 + $0x90] sm:$0x1] 0.0
        %2893 = vst [vmem:[#allocation3 + $0xa8] sm:$0x1] 0.0
        %2894 = vst [vmem:[#allocation3 + $0x11] sm:$0x1] 0.0
        %2895 = vst [vmem:[#allocation3 + $0x29] sm:$0x1] 0.0
        %2896 = vst [vmem:[#allocation3 + $0x41] sm:$0x1] 0.0
        %2897 = vst [vmem:[#allocation3 + $0x59] sm:$0x1] 0.0
        %2898 = vst [vmem:[#allocation3 + $0x71] sm:$0x1] 0.0
        %2899 = vst [vmem:[#allocation3 + $0x89] sm:$0x1] 0.0
        %2900 = vst [vmem:[#allocation3 + $0xa1] sm:$0x1] 0.0
        %2901 = vst [vmem:[#allocation3 + $0xb9] sm:$0x1] 0.0
        %2902 = vst [vmem:[#allocation3 + $0x1] sm:$0xff] %v2870
        %2903 = vst [vmem:[#allocation3 + $0x9] sm:$0xff] %v2871
        %2904 = vst [vmem:[#allocation3 + $0x19] sm:$0xff] %v2872
        %2905 = vst [vmem:[#allocation3 + $0x21] sm:$0xff] %v2873
        %2906 = vst [vmem:[#allocation3 + $0x31] sm:$0xff] %v2874
        %2907 = vst [vmem:[#allocation3 + $0x39] sm:$0xff] %v2875
        %2908 = vst [vmem:[#allocation3 + $0x49] sm:$0xff] %v2876
        %2909 = vst [vmem:[#allocation3 + $0x51] sm:$0xff] %v2877
        %2910 = vst [vmem:[#allocation3 + $0x61] sm:$0xff] %v2878
        %2911 = vst [vmem:[#allocation3 + $0x69] sm:$0xff] %v2879
        %2912 = vst [vmem:[#allocation3 + $0x79] sm:$0xff] %v2880
        %2913 = vst [vmem:[#allocation3 + $0x81] sm:$0xff] %v2881
        %2914 = vst [vmem:[#allocation3 + $0x91] sm:$0xff] %v2882
        %2915 = vst [vmem:[#allocation3 + $0x99] sm:$0xff] %v2883
        %2916 = vst [vmem:[#allocation3 + $0xa9] sm:$0xff] %v2884
        %2917 = vst [vmem:[#allocation3 + $0xb1] sm:$0xff] %v2885
        %v2918 = vld [vmem:[#allocation3] sm:$0xff]
        %v2919 = vld [vmem:[#allocation3 + $0x8] sm:$0xff]
        %v2920 = vld [vmem:[#allocation3 + $0x18] sm:$0xff]
        %v2921 = vld [vmem:[#allocation3 + $0x20] sm:$0xff]
        %v2922 = vld [vmem:[#allocation3 + $0x30] sm:$0xff]
        %v2923 = vld [vmem:[#allocation3 + $0x38] sm:$0xff]
        %v2924 = vld [vmem:[#allocation3 + $0x48] sm:$0xff]
        %v2925 = vld [vmem:[#allocation3 + $0x50] sm:$0xff]
        %v2926 = vld [vmem:[#allocation3 + $0x60] sm:$0xff]
        %v2927 = vld [vmem:[#allocation3 + $0x68] sm:$0xff]
        %v2928 = vld [vmem:[#allocation3 + $0x78] sm:$0xff]
        %v2929 = vld [vmem:[#allocation3 + $0x80] sm:$0xff]
        %v2930 = vld [vmem:[#allocation3 + $0x90] sm:$0xff]
        %v2931 = vld [vmem:[#allocation3 + $0x98] sm:$0xff]
        %v2932 = vld [vmem:[#allocation3 + $0xa8] sm:$0xff]
        %v2933 = vld [vmem:[#allocation3 + $0xb0] sm:$0xff]
        %v2934 = vpack.c.bf16 %v2918, %v2918
        %v2935 = vpack.c.bf16 %v2919, %v2919
        %v2936 = vpack.c.bf16 %v2920, %v2920
        %v2937 = vpack.c.bf16 %v2921, %v2921
        %v2938 = vpack.c.bf16 %v2922, %v2922
        %v2939 = vpack.c.bf16 %v2923, %v2923
        %v2940 = vpack.c.bf16 %v2924, %v2924
        %v2941 = vpack.c.bf16 %v2925, %v2925
        %v2942 = vpack.c.bf16 %v2926, %v2926
        %v2943 = vpack.c.bf16 %v2927, %v2927
        %v2944 = vpack.c.bf16 %v2928, %v2928
        %v2945 = vpack.c.bf16 %v2929, %v2929
        %v2946 = vpack.c.bf16 %v2930, %v2930
        %v2947 = vpack.c.bf16 %v2931, %v2931
        %v2948 = vpack.c.bf16 %v2932, %v2932
        %v2949 = vpack.c.bf16 %v2933, %v2933
        %v2950 = vld [vmem:[#allocation15] sm:$0xff]
        %v2951 = vld [vmem:[#allocation15 + $0x8] sm:$0xff]
        %v2952 = vld [vmem:[#allocation15 + $0x10] sm:$0xff]
        %v2953 = vld [vmem:[#allocation15 + $0x18] sm:$0xff]
        %v2954 = vld [vmem:[#allocation15 + $0x20] sm:$0xff]
        %v2955 = vld [vmem:[#allocation15 + $0x28] sm:$0xff]
        %v2956 = vld [vmem:[#allocation15 + $0x30] sm:$0xff]
        %v2957 = vld [vmem:[#allocation15 + $0x38] sm:$0xff]
        %v2958 = vld [vmem:[#allocation15 + $0x40] sm:$0xff]
        %v2959 = vld [vmem:[#allocation15 + $0x48] sm:$0xff]
        %v2960 = vld [vmem:[#allocation15 + $0x50] sm:$0xff]
        %v2961 = vld [vmem:[#allocation15 + $0x58] sm:$0xff]
        %v2962 = vld [vmem:[#allocation15 + $0x60] sm:$0xff]
        %v2963 = vld [vmem:[#allocation15 + $0x68] sm:$0xff]
        %v2964 = vld [vmem:[#allocation15 + $0x70] sm:$0xff]
        %v2965 = vld [vmem:[#allocation15 + $0x78] sm:$0xff]
        %v2966 = vld [vmem:[#allocation3 + $0x1] sm:$0xff]
        %v2967 = vld [vmem:[#allocation3 + $0x9] sm:$0xff]
        %v2968 = vld [vmem:[#allocation3 + $0x19] sm:$0xff]
        %v2969 = vld [vmem:[#allocation3 + $0x21] sm:$0xff]
        %v2970 = vld [vmem:[#allocation3 + $0x31] sm:$0xff]
        %v2971 = vld [vmem:[#allocation3 + $0x39] sm:$0xff]
        %v2972 = vld [vmem:[#allocation3 + $0x49] sm:$0xff]
        %v2973 = vld [vmem:[#allocation3 + $0x51] sm:$0xff]
        %v2974 = vld [vmem:[#allocation3 + $0x61] sm:$0xff]
        %v2975 = vld [vmem:[#allocation3 + $0x69] sm:$0xff]
        %v2976 = vld [vmem:[#allocation3 + $0x79] sm:$0xff]
        %v2977 = vld [vmem:[#allocation3 + $0x81] sm:$0xff]
        %v2978 = vld [vmem:[#allocation3 + $0x91] sm:$0xff]
        %v2979 = vld [vmem:[#allocation3 + $0x99] sm:$0xff]
        %v2980 = vld [vmem:[#allocation3 + $0xa9] sm:$0xff]
        %v2981 = vld [vmem:[#allocation3 + $0xb1] sm:$0xff]
        %v2982 = vpack.c.bf16 %v2966, %v2966
        %v2983 = vpack.c.bf16 %v2967, %v2967
        %v2984 = vpack.c.bf16 %v2968, %v2968
        %v2985 = vpack.c.bf16 %v2969, %v2969
        %v2986 = vpack.c.bf16 %v2970, %v2970
        %v2987 = vpack.c.bf16 %v2971, %v2971
        %v2988 = vpack.c.bf16 %v2972, %v2972
        %v2989 = vpack.c.bf16 %v2973, %v2973
        %v2990 = vpack.c.bf16 %v2974, %v2974
        %v2991 = vpack.c.bf16 %v2975, %v2975
        %v2992 = vpack.c.bf16 %v2976, %v2976
        %v2993 = vpack.c.bf16 %v2977, %v2977
        %v2994 = vpack.c.bf16 %v2978, %v2978
        %v2995 = vpack.c.bf16 %v2979, %v2979
        %v2996 = vpack.c.bf16 %v2980, %v2980
        %v2997 = vpack.c.bf16 %v2981, %v2981
        %s2998 = scalar_lea.vmem [#allocation15], 128
        %v2999 = vld [vmem:[%s2998] sm:$0xff]
        %v3000 = vld [vmem:[%s2998 + $0x8] sm:$0xff]
        %v3001 = vld [vmem:[%s2998 + $0x10] sm:$0xff]
        %v3002 = vld [vmem:[%s2998 + $0x18] sm:$0xff]
        %v3003 = vld [vmem:[%s2998 + $0x20] sm:$0xff]
        %v3004 = vld [vmem:[%s2998 + $0x28] sm:$0xff]
        %v3005 = vld [vmem:[%s2998 + $0x30] sm:$0xff]
        %v3006 = vld [vmem:[%s2998 + $0x38] sm:$0xff]
        %v3007 = vld [vmem:[%s2998 + $0x40] sm:$0xff]
        %v3008 = vld [vmem:[%s2998 + $0x48] sm:$0xff]
        %v3009 = vld [vmem:[%s2998 + $0x50] sm:$0xff]
        %v3010 = vld [vmem:[%s2998 + $0x58] sm:$0xff]
        %v3011 = vld [vmem:[%s2998 + $0x60] sm:$0xff]
        %v3012 = vld [vmem:[%s2998 + $0x68] sm:$0xff]
        %v3013 = vld [vmem:[%s2998 + $0x70] sm:$0xff]
        %v3014 = vld [vmem:[%s2998 + $0x78] sm:$0xff]
        %v3031 = vunpack.c.l.b16 %v2982
        %v3032 = vunpack.c.l.b16 %v2983
        %v3033 = vunpack.c.l.b16 %v2984
        %v3034 = vunpack.c.l.b16 %v2985
        %v3035 = vunpack.c.l.b16 %v2986
        %v3036 = vunpack.c.l.b16 %v2987
        %v3037 = vunpack.c.l.b16 %v2988
        %v3038 = vunpack.c.l.b16 %v2989
        %v3039 = vunpack.c.l.b16 %v2990
        %v3040 = vunpack.c.l.b16 %v2991
        %v3041 = vunpack.c.l.b16 %v2992
        %v3042 = vunpack.c.l.b16 %v2993
        %v3043 = vunpack.c.l.b16 %v2994
        %v3044 = vunpack.c.l.b16 %v2995
        %v3045 = vunpack.c.l.b16 %v2996
        %v3046 = vunpack.c.l.b16 %v2997
        %v3047 = vpack.c.b16 %v3032, %v3031
        %v3048 = vpack.c.b16 %v3034, %v3033
        %v3049 = vpack.c.b16 %v3036, %v3035
        %v3050 = vpack.c.b16 %v3038, %v3037
        %v3051 = vpack.c.b16 %v3040, %v3039
        %v3052 = vpack.c.b16 %v3042, %v3041
        %v3053 = vpack.c.b16 %v3044, %v3043
        %v3054 = vpack.c.b16 %v3046, %v3045
        %v3079 = vunpack.c.l.b16 %v2999
        %v3080 = vunpack.c.h.b16 %v2999
        %v3081 = vunpack.c.l.b16 %v3000
        %v3082 = vunpack.c.h.b16 %v3000
        %v3083 = vunpack.c.l.b16 %v3001
        %v3084 = vunpack.c.h.b16 %v3001
        %v3085 = vunpack.c.l.b16 %v3002
        %v3086 = vunpack.c.h.b16 %v3002
        %v3087 = vunpack.c.l.b16 %v3003
        %v3088 = vunpack.c.h.b16 %v3003
        %v3089 = vunpack.c.l.b16 %v3004
        %v3090 = vunpack.c.h.b16 %v3004
        %v3091 = vunpack.c.l.b16 %v3005
        %v3092 = vunpack.c.h.b16 %v3005
        %v3093 = vunpack.c.l.b16 %v3006
        %v3094 = vunpack.c.h.b16 %v3006
        %v3095 = vunpack.c.l.b16 %v3007
        %v3096 = vunpack.c.h.b16 %v3007
        %v3097 = vunpack.c.l.b16 %v3008
        %v3098 = vunpack.c.h.b16 %v3008
        %v3099 = vunpack.c.l.b16 %v3009
        %v3100 = vunpack.c.h.b16 %v3009
        %v3101 = vunpack.c.l.b16 %v3010
        %v3102 = vunpack.c.h.b16 %v3010
        %v3103 = vunpack.c.l.b16 %v3011
        %v3104 = vunpack.c.h.b16 %v3011
        %v3105 = vunpack.c.l.b16 %v3012
        %v3106 = vunpack.c.h.b16 %v3012
        %v3107 = vunpack.c.l.b16 %v3013
        %v3108 = vunpack.c.h.b16 %v3013
        %v3109 = vunpack.c.l.b16 %v3014
        %v3110 = vunpack.c.h.b16 %v3014
        %v3111 = vpack.c.b16 %v3081, %v3079
        %v3112 = vpack.c.b16 %v3082, %v3080
        %v3113 = vpack.c.b16 %v3085, %v3083
        %v3114 = vpack.c.b16 %v3086, %v3084
        %v3115 = vpack.c.b16 %v3089, %v3087
        %v3116 = vpack.c.b16 %v3090, %v3088
        %v3117 = vpack.c.b16 %v3093, %v3091
        %v3118 = vpack.c.b16 %v3094, %v3092
        %v3119 = vpack.c.b16 %v3097, %v3095
        %v3120 = vpack.c.b16 %v3098, %v3096
        %v3121 = vpack.c.b16 %v3101, %v3099
        %v3122 = vpack.c.b16 %v3102, %v3100
        %v3123 = vpack.c.b16 %v3105, %v3103
        %v3124 = vpack.c.b16 %v3106, %v3104
        %v3125 = vpack.c.b16 %v3109, %v3107
        %v3126 = vpack.c.b16 %v3110, %v3108
        %3143 = vmatpush.bf16.msra.mxu0 %v3125
        %3144 = vmatpush.bf16.msra.mxu0 %v3123
        %3145 = vmatpush.bf16.msra.mxu0 %v3121
        %3146 = vmatpush.bf16.msra.mxu0 %v3119
        %3147 = vmatpush.bf16.msra.mxu0 %v3117
        %3148 = vmatpush.bf16.msra.mxu0 %v3115
        %3149 = vmatpush.bf16.msra.mxu0 %v3113
        %3150 = vmatpush.bf16.msra.mxu0 %v3111
        %3151 = vmatmul.bf16.gmra.mxu0 %v3047
        %v3152 = vpop.f32.mrf.mxu0
        %v3153 = vadd.f32 0.0, %v3152
        %v3154 = vpop.f32.mrf.mxu0
        %v3155 = vadd.f32 0.0, %v3154
        %3156 = vmatmul.bf16.gmra.mxu0 %v3048
        %v3157 = vpop.f32.mrf.mxu0
        %v3158 = vadd.f32 0.0, %v3157
        %v3159 = vpop.f32.mrf.mxu0
        %v3160 = vadd.f32 0.0, %v3159
        %3161 = vmatmul.bf16.gmra.mxu0 %v3049
        %v3162 = vpop.f32.mrf.mxu0
        %v3163 = vadd.f32 0.0, %v3162
        %v3164 = vpop.f32.mrf.mxu0
        %v3165 = vadd.f32 0.0, %v3164
        %3166 = vmatmul.bf16.gmra.mxu0 %v3050
        %v3167 = vpop.f32.mrf.mxu0
        %v3168 = vadd.f32 0.0, %v3167
        %v3169 = vpop.f32.mrf.mxu0
        %v3170 = vadd.f32 0.0, %v3169
        %3171 = vmatmul.bf16.gmra.mxu0 %v3051
        %v3172 = vpop.f32.mrf.mxu0
        %v3173 = vadd.f32 0.0, %v3172
        %v3174 = vpop.f32.mrf.mxu0
        %v3175 = vadd.f32 0.0, %v3174
        %3176 = vmatmul.bf16.gmra.mxu0 %v3052
        %v3177 = vpop.f32.mrf.mxu0
        %v3178 = vadd.f32 0.0, %v3177
        %v3179 = vpop.f32.mrf.mxu0
        %v3180 = vadd.f32 0.0, %v3179
        %3181 = vmatmul.bf16.gmra.mxu0 %v3053
        %v3182 = vpop.f32.mrf.mxu0
        %v3183 = vadd.f32 0.0, %v3182
        %v3184 = vpop.f32.mrf.mxu0
        %v3185 = vadd.f32 0.0, %v3184
        %3186 = vmatmul.bf16.gmra.mxu0 %v3054
        %v3187 = vpop.f32.mrf.mxu0
        %v3188 = vadd.f32 0.0, %v3187
        %v3189 = vpop.f32.mrf.mxu0
        %v3190 = vadd.f32 0.0, %v3189
        %3191 = vdwg.mxu0
        %3192 = vmatpush.bf16.msra.mxu0 %v3126
        %3193 = vmatpush.bf16.msra.mxu0 %v3124
        %3194 = vmatpush.bf16.msra.mxu0 %v3122
        %3195 = vmatpush.bf16.msra.mxu0 %v3120
        %3196 = vmatpush.bf16.msra.mxu0 %v3118
        %3197 = vmatpush.bf16.msra.mxu0 %v3116
        %3198 = vmatpush.bf16.msra.mxu0 %v3114
        %3199 = vmatpush.bf16.msra.mxu0 %v3112
        %3200 = vmatmul.bf16.gmra.mxu0 %v3047
        %v3201 = vpop.f32.mrf.mxu0
        %v3202 = vadd.f32 0.0, %v3201
        %v3203 = vpop.f32.mrf.mxu0
        %v3204 = vadd.f32 0.0, %v3203
        %3205 = vmatmul.bf16.gmra.mxu0 %v3048
        %v3206 = vpop.f32.mrf.mxu0
        %v3207 = vadd.f32 0.0, %v3206
        %v3208 = vpop.f32.mrf.mxu0
        %v3209 = vadd.f32 0.0, %v3208
        %3210 = vmatmul.bf16.gmra.mxu0 %v3049
        %v3211 = vpop.f32.mrf.mxu0
        %v3212 = vadd.f32 0.0, %v3211
        %v3213 = vpop.f32.mrf.mxu0
        %v3214 = vadd.f32 0.0, %v3213
        %3215 = vmatmul.bf16.gmra.mxu0 %v3050
        %v3216 = vpop.f32.mrf.mxu0
        %v3217 = vadd.f32 0.0, %v3216
        %v3218 = vpop.f32.mrf.mxu0
        %v3219 = vadd.f32 0.0, %v3218
        %3220 = vmatmul.bf16.gmra.mxu0 %v3051
        %v3221 = vpop.f32.mrf.mxu0
        %v3222 = vadd.f32 0.0, %v3221
        %v3223 = vpop.f32.mrf.mxu0
        %v3224 = vadd.f32 0.0, %v3223
        %3225 = vmatmul.bf16.gmra.mxu0 %v3052
        %v3226 = vpop.f32.mrf.mxu0
        %v3227 = vadd.f32 0.0, %v3226
        %v3228 = vpop.f32.mrf.mxu0
        %v3229 = vadd.f32 0.0, %v3228
        %3230 = vmatmul.bf16.gmra.mxu0 %v3053
        %v3231 = vpop.f32.mrf.mxu0
        %v3232 = vadd.f32 0.0, %v3231
        %v3233 = vpop.f32.mrf.mxu0
        %v3234 = vadd.f32 0.0, %v3233
        %3235 = vmatmul.bf16.gmra.mxu0 %v3054
        %v3236 = vpop.f32.mrf.mxu0
        %v3237 = vadd.f32 0.0, %v3236
        %v3238 = vpop.f32.mrf.mxu0
        %v3239 = vadd.f32 0.0, %v3238
        %3240 = vdwg.mxu0
        %v3257 = vunpack.c.l.b16 %v2934
        %v3258 = vunpack.c.l.b16 %v2935
        %v3259 = vunpack.c.l.b16 %v2936
        %v3260 = vunpack.c.l.b16 %v2937
        %v3261 = vunpack.c.l.b16 %v2938
        %v3262 = vunpack.c.l.b16 %v2939
        %v3263 = vunpack.c.l.b16 %v2940
        %v3264 = vunpack.c.l.b16 %v2941
        %v3265 = vunpack.c.l.b16 %v2942
        %v3266 = vunpack.c.l.b16 %v2943
        %v3267 = vunpack.c.l.b16 %v2944
        %v3268 = vunpack.c.l.b16 %v2945
        %v3269 = vunpack.c.l.b16 %v2946
        %v3270 = vunpack.c.l.b16 %v2947
        %v3271 = vunpack.c.l.b16 %v2948
        %v3272 = vunpack.c.l.b16 %v2949
        %v3273 = vpack.c.b16 %v3258, %v3257
        %v3274 = vpack.c.b16 %v3260, %v3259
        %v3275 = vpack.c.b16 %v3262, %v3261
        %v3276 = vpack.c.b16 %v3264, %v3263
        %v3277 = vpack.c.b16 %v3266, %v3265
        %v3278 = vpack.c.b16 %v3268, %v3267
        %v3279 = vpack.c.b16 %v3270, %v3269
        %v3280 = vpack.c.b16 %v3272, %v3271
        %v3305 = vunpack.c.l.b16 %v2950
        %v3306 = vunpack.c.h.b16 %v2950
        %v3307 = vunpack.c.l.b16 %v2951
        %v3308 = vunpack.c.h.b16 %v2951
        %v3309 = vunpack.c.l.b16 %v2952
        %v3310 = vunpack.c.h.b16 %v2952
        %v3311 = vunpack.c.l.b16 %v2953
        %v3312 = vunpack.c.h.b16 %v2953
        %v3313 = vunpack.c.l.b16 %v2954
        %v3314 = vunpack.c.h.b16 %v2954
        %v3315 = vunpack.c.l.b16 %v2955
        %v3316 = vunpack.c.h.b16 %v2955
        %v3317 = vunpack.c.l.b16 %v2956
        %v3318 = vunpack.c.h.b16 %v2956
        %v3319 = vunpack.c.l.b16 %v2957
        %v3320 = vunpack.c.h.b16 %v2957
        %v3321 = vunpack.c.l.b16 %v2958
        %v3322 = vunpack.c.h.b16 %v2958
        %v3323 = vunpack.c.l.b16 %v2959
        %v3324 = vunpack.c.h.b16 %v2959
        %v3325 = vunpack.c.l.b16 %v2960
        %v3326 = vunpack.c.h.b16 %v2960
        %v3327 = vunpack.c.l.b16 %v2961
        %v3328 = vunpack.c.h.b16 %v2961
        %v3329 = vunpack.c.l.b16 %v2962
        %v3330 = vunpack.c.h.b16 %v2962
        %v3331 = vunpack.c.l.b16 %v2963
        %v3332 = vunpack.c.h.b16 %v2963
        %v3333 = vunpack.c.l.b16 %v2964
        %v3334 = vunpack.c.h.b16 %v2964
        %v3335 = vunpack.c.l.b16 %v2965
        %v3336 = vunpack.c.h.b16 %v2965
        %v3337 = vpack.c.b16 %v3307, %v3305
        %v3338 = vpack.c.b16 %v3308, %v3306
        %v3339 = vpack.c.b16 %v3311, %v3309
        %v3340 = vpack.c.b16 %v3312, %v3310
        %v3341 = vpack.c.b16 %v3315, %v3313
        %v3342 = vpack.c.b16 %v3316, %v3314
        %v3343 = vpack.c.b16 %v3319, %v3317
        %v3344 = vpack.c.b16 %v3320, %v3318
        %v3345 = vpack.c.b16 %v3323, %v3321
        %v3346 = vpack.c.b16 %v3324, %v3322
        %v3347 = vpack.c.b16 %v3327, %v3325
        %v3348 = vpack.c.b16 %v3328, %v3326
        %v3349 = vpack.c.b16 %v3331, %v3329
        %v3350 = vpack.c.b16 %v3332, %v3330
        %v3351 = vpack.c.b16 %v3335, %v3333
        %v3352 = vpack.c.b16 %v3336, %v3334
        %3369 = vmatpush.bf16.msra.mxu0 %v3351
        %3370 = vmatpush.bf16.msra.mxu0 %v3349
        %3371 = vmatpush.bf16.msra.mxu0 %v3347
        %3372 = vmatpush.bf16.msra.mxu0 %v3345
        %3373 = vmatpush.bf16.msra.mxu0 %v3343
        %3374 = vmatpush.bf16.msra.mxu0 %v3341
        %3375 = vmatpush.bf16.msra.mxu0 %v3339
        %3376 = vmatpush.bf16.msra.mxu0 %v3337
        %3377 = vmatmul.bf16.gmra.mxu0 %v3273
        %v3378 = vpop.f32.mrf.mxu0
        %v3379 = vadd.f32 %v3153, %v3378
        %v3380 = vpop.f32.mrf.mxu0
        %v3381 = vadd.f32 %v3155, %v3380
        %3382 = vmatmul.bf16.gmra.mxu0 %v3274
        %v3383 = vpop.f32.mrf.mxu0
        %v3384 = vadd.f32 %v3158, %v3383
        %v3385 = vpop.f32.mrf.mxu0
        %v3386 = vadd.f32 %v3160, %v3385
        %3387 = vmatmul.bf16.gmra.mxu0 %v3275
        %v3388 = vpop.f32.mrf.mxu0
        %v3389 = vadd.f32 %v3163, %v3388
        %v3390 = vpop.f32.mrf.mxu0
        %v3391 = vadd.f32 %v3165, %v3390
        %3392 = vmatmul.bf16.gmra.mxu0 %v3276
        %v3393 = vpop.f32.mrf.mxu0
        %v3394 = vadd.f32 %v3168, %v3393
        %v3395 = vpop.f32.mrf.mxu0
        %v3396 = vadd.f32 %v3170, %v3395
        %3397 = vmatmul.bf16.gmra.mxu0 %v3277
        %v3398 = vpop.f32.mrf.mxu0
        %v3399 = vadd.f32 %v3173, %v3398
        %v3400 = vpop.f32.mrf.mxu0
        %v3401 = vadd.f32 %v3175, %v3400
        %3402 = vmatmul.bf16.gmra.mxu0 %v3278
        %v3403 = vpop.f32.mrf.mxu0
        %v3404 = vadd.f32 %v3178, %v3403
        %v3405 = vpop.f32.mrf.mxu0
        %v3406 = vadd.f32 %v3180, %v3405
        %3407 = vmatmul.bf16.gmra.mxu0 %v3279
        %v3408 = vpop.f32.mrf.mxu0
        %v3409 = vadd.f32 %v3183, %v3408
        %v3410 = vpop.f32.mrf.mxu0
        %v3411 = vadd.f32 %v3185, %v3410
        %3412 = vmatmul.bf16.gmra.mxu0 %v3280
        %v3413 = vpop.f32.mrf.mxu0
        %v3414 = vadd.f32 %v3188, %v3413
        %v3415 = vpop.f32.mrf.mxu0
        %v3416 = vadd.f32 %v3190, %v3415
        %3417 = vdwg.mxu0
        %3418 = vmatpush.bf16.msra.mxu0 %v3352
        %3419 = vmatpush.bf16.msra.mxu0 %v3350
        %3420 = vmatpush.bf16.msra.mxu0 %v3348
        %3421 = vmatpush.bf16.msra.mxu0 %v3346
        %3422 = vmatpush.bf16.msra.mxu0 %v3344
        %3423 = vmatpush.bf16.msra.mxu0 %v3342
        %3424 = vmatpush.bf16.msra.mxu0 %v3340
        %3425 = vmatpush.bf16.msra.mxu0 %v3338
        %3426 = vmatmul.bf16.gmra.mxu0 %v3273
        %v3427 = vpop.f32.mrf.mxu0
        %v3428 = vadd.f32 %v3202, %v3427
        %v3429 = vpop.f32.mrf.mxu0
        %v3430 = vadd.f32 %v3204, %v3429
        %3431 = vmatmul.bf16.gmra.mxu0 %v3274
        %v3432 = vpop.f32.mrf.mxu0
        %v3433 = vadd.f32 %v3207, %v3432
        %v3434 = vpop.f32.mrf.mxu0
        %v3435 = vadd.f32 %v3209, %v3434
        %3436 = vmatmul.bf16.gmra.mxu0 %v3275
        %v3437 = vpop.f32.mrf.mxu0
        %v3438 = vadd.f32 %v3212, %v3437
        %v3439 = vpop.f32.mrf.mxu0
        %v3440 = vadd.f32 %v3214, %v3439
        %3441 = vmatmul.bf16.gmra.mxu0 %v3276
        %v3442 = vpop.f32.mrf.mxu0
        %v3443 = vadd.f32 %v3217, %v3442
        %v3444 = vpop.f32.mrf.mxu0
        %v3445 = vadd.f32 %v3219, %v3444
        %3446 = vmatmul.bf16.gmra.mxu0 %v3277
        %v3447 = vpop.f32.mrf.mxu0
        %v3448 = vadd.f32 %v3222, %v3447
        %v3449 = vpop.f32.mrf.mxu0
        %v3450 = vadd.f32 %v3224, %v3449
        %3451 = vmatmul.bf16.gmra.mxu0 %v3278
        %v3452 = vpop.f32.mrf.mxu0
        %v3453 = vadd.f32 %v3227, %v3452
        %v3454 = vpop.f32.mrf.mxu0
        %v3455 = vadd.f32 %v3229, %v3454
        %3456 = vmatmul.bf16.gmra.mxu0 %v3279
        %v3457 = vpop.f32.mrf.mxu0
        %v3458 = vadd.f32 %v3232, %v3457
        %v3459 = vpop.f32.mrf.mxu0
        %v3460 = vadd.f32 %v3234, %v3459
        %3461 = vmatmul.bf16.gmra.mxu0 %v3280
        %v3462 = vpop.f32.mrf.mxu0
        %v3463 = vadd.f32 %v3237, %v3462
        %v3464 = vpop.f32.mrf.mxu0
        %v3465 = vadd.f32 %v3239, %v3464
        %3466 = vdwg.mxu0
        %v3467 = vld [vmem:[#allocation3 + $0x2] sm:$0xff]
        %v3468 = vld [vmem:[#allocation3 + $0xa] sm:$0xff]
        %v3469 = vld [vmem:[#allocation3 + $0x1a] sm:$0xff]
        %v3470 = vld [vmem:[#allocation3 + $0x22] sm:$0xff]
        %v3471 = vld [vmem:[#allocation3 + $0x32] sm:$0xff]
        %v3472 = vld [vmem:[#allocation3 + $0x3a] sm:$0xff]
        %v3473 = vld [vmem:[#allocation3 + $0x4a] sm:$0xff]
        %v3474 = vld [vmem:[#allocation3 + $0x52] sm:$0xff]
        %v3475 = vld [vmem:[#allocation3 + $0x62] sm:$0xff]
        %v3476 = vld [vmem:[#allocation3 + $0x6a] sm:$0xff]
        %v3477 = vld [vmem:[#allocation3 + $0x7a] sm:$0xff]
        %v3478 = vld [vmem:[#allocation3 + $0x82] sm:$0xff]
        %v3479 = vld [vmem:[#allocation3 + $0x92] sm:$0xff]
        %v3480 = vld [vmem:[#allocation3 + $0x9a] sm:$0xff]
        %v3481 = vld [vmem:[#allocation3 + $0xaa] sm:$0xff]
        %v3482 = vld [vmem:[#allocation3 + $0xb2] sm:$0xff]
        %v3483 = vpack.c.bf16 %v3467, %v3467
        %v3484 = vpack.c.bf16 %v3468, %v3468
        %v3485 = vpack.c.bf16 %v3469, %v3469
        %v3486 = vpack.c.bf16 %v3470, %v3470
        %v3487 = vpack.c.bf16 %v3471, %v3471
        %v3488 = vpack.c.bf16 %v3472, %v3472
        %v3489 = vpack.c.bf16 %v3473, %v3473
        %v3490 = vpack.c.bf16 %v3474, %v3474
        %v3491 = vpack.c.bf16 %v3475, %v3475
        %v3492 = vpack.c.bf16 %v3476, %v3476
        %v3493 = vpack.c.bf16 %v3477, %v3477
        %v3494 = vpack.c.bf16 %v3478, %v3478
        %v3495 = vpack.c.bf16 %v3479, %v3479
        %v3496 = vpack.c.bf16 %v3480, %v3480
        %v3497 = vpack.c.bf16 %v3481, %v3481
        %v3498 = vpack.c.bf16 %v3482, %v3482
        %s3499 = scalar_lea.vmem [#allocation15], 256
        %v3500 = vld [vmem:[%s3499] sm:$0xff]
        %v3501 = vld [vmem:[%s3499 + $0x8] sm:$0xff]
        %v3502 = vld [vmem:[%s3499 + $0x10] sm:$0xff]
        %v3503 = vld [vmem:[%s3499 + $0x18] sm:$0xff]
        %v3504 = vld [vmem:[%s3499 + $0x20] sm:$0xff]
        %v3505 = vld [vmem:[%s3499 + $0x28] sm:$0xff]
        %v3506 = vld [vmem:[%s3499 + $0x30] sm:$0xff]
        %v3507 = vld [vmem:[%s3499 + $0x38] sm:$0xff]
        %v3508 = vld [vmem:[%s3499 + $0x40] sm:$0xff]
        %v3509 = vld [vmem:[%s3499 + $0x48] sm:$0xff]
        %v3510 = vld [vmem:[%s3499 + $0x50] sm:$0xff]
        %v3511 = vld [vmem:[%s3499 + $0x58] sm:$0xff]
        %v3512 = vld [vmem:[%s3499 + $0x60] sm:$0xff]
        %v3513 = vld [vmem:[%s3499 + $0x68] sm:$0xff]
        %v3514 = vld [vmem:[%s3499 + $0x70] sm:$0xff]
        %v3515 = vld [vmem:[%s3499 + $0x78] sm:$0xff]
        %v3532 = vunpack.c.l.b16 %v3483
        %v3533 = vunpack.c.l.b16 %v3484
        %v3534 = vunpack.c.l.b16 %v3485
        %v3535 = vunpack.c.l.b16 %v3486
        %v3536 = vunpack.c.l.b16 %v3487
        %v3537 = vunpack.c.l.b16 %v3488
        %v3538 = vunpack.c.l.b16 %v3489
        %v3539 = vunpack.c.l.b16 %v3490
        %v3540 = vunpack.c.l.b16 %v3491
        %v3541 = vunpack.c.l.b16 %v3492
        %v3542 = vunpack.c.l.b16 %v3493
        %v3543 = vunpack.c.l.b16 %v3494
        %v3544 = vunpack.c.l.b16 %v3495
        %v3545 = vunpack.c.l.b16 %v3496
        %v3546 = vunpack.c.l.b16 %v3497
        %v3547 = vunpack.c.l.b16 %v3498
        %v3548 = vpack.c.b16 %v3533, %v3532
        %v3549 = vpack.c.b16 %v3535, %v3534
        %v3550 = vpack.c.b16 %v3537, %v3536
        %v3551 = vpack.c.b16 %v3539, %v3538
        %v3552 = vpack.c.b16 %v3541, %v3540
        %v3553 = vpack.c.b16 %v3543, %v3542
        %v3554 = vpack.c.b16 %v3545, %v3544
        %v3555 = vpack.c.b16 %v3547, %v3546
        %v3580 = vunpack.c.l.b16 %v3500
        %v3581 = vunpack.c.h.b16 %v3500
        %v3582 = vunpack.c.l.b16 %v3501
        %v3583 = vunpack.c.h.b16 %v3501
        %v3584 = vunpack.c.l.b16 %v3502
        %v3585 = vunpack.c.h.b16 %v3502
        %v3586 = vunpack.c.l.b16 %v3503
        %v3587 = vunpack.c.h.b16 %v3503
        %v3588 = vunpack.c.l.b16 %v3504
        %v3589 = vunpack.c.h.b16 %v3504
        %v3590 = vunpack.c.l.b16 %v3505
        %v3591 = vunpack.c.h.b16 %v3505
        %v3592 = vunpack.c.l.b16 %v3506
        %v3593 = vunpack.c.h.b16 %v3506
        %v3594 = vunpack.c.l.b16 %v3507
        %v3595 = vunpack.c.h.b16 %v3507
        %v3596 = vunpack.c.l.b16 %v3508
        %v3597 = vunpack.c.h.b16 %v3508
        %v3598 = vunpack.c.l.b16 %v3509
        %v3599 = vunpack.c.h.b16 %v3509
        %v3600 = vunpack.c.l.b16 %v3510
        %v3601 = vunpack.c.h.b16 %v3510
        %v3602 = vunpack.c.l.b16 %v3511
        %v3603 = vunpack.c.h.b16 %v3511
        %v3604 = vunpack.c.l.b16 %v3512
        %v3605 = vunpack.c.h.b16 %v3512
        %v3606 = vunpack.c.l.b16 %v3513
        %v3607 = vunpack.c.h.b16 %v3513
        %v3608 = vunpack.c.l.b16 %v3514
        %v3609 = vunpack.c.h.b16 %v3514
        %v3610 = vunpack.c.l.b16 %v3515
        %v3611 = vunpack.c.h.b16 %v3515
        %v3612 = vpack.c.b16 %v3582, %v3580
        %v3613 = vpack.c.b16 %v3583, %v3581
        %v3614 = vpack.c.b16 %v3586, %v3584
        %v3615 = vpack.c.b16 %v3587, %v3585
        %v3616 = vpack.c.b16 %v3590, %v3588
        %v3617 = vpack.c.b16 %v3591, %v3589
        %v3618 = vpack.c.b16 %v3594, %v3592
        %v3619 = vpack.c.b16 %v3595, %v3593
        %v3620 = vpack.c.b16 %v3598, %v3596
        %v3621 = vpack.c.b16 %v3599, %v3597
        %v3622 = vpack.c.b16 %v3602, %v3600
        %v3623 = vpack.c.b16 %v3603, %v3601
        %v3624 = vpack.c.b16 %v3606, %v3604
        %v3625 = vpack.c.b16 %v3607, %v3605
        %v3626 = vpack.c.b16 %v3610, %v3608
        %v3627 = vpack.c.b16 %v3611, %v3609
        %3644 = vmatpush.bf16.msra.mxu0 %v3626
        %3645 = vmatpush.bf16.msra.mxu0 %v3624
        %3646 = vmatpush.bf16.msra.mxu0 %v3622
        %3647 = vmatpush.bf16.msra.mxu0 %v3620
        %3648 = vmatpush.bf16.msra.mxu0 %v3618
        %3649 = vmatpush.bf16.msra.mxu0 %v3616
        %3650 = vmatpush.bf16.msra.mxu0 %v3614
        %3651 = vmatpush.bf16.msra.mxu0 %v3612
        %3652 = vmatmul.bf16.gmra.mxu0 %v3548
        %v3653 = vpop.f32.mrf.mxu0
        %v3654 = vadd.f32 0.0, %v3653
        %v3655 = vpop.f32.mrf.mxu0
        %v3656 = vadd.f32 0.0, %v3655
        %3657 = vmatmul.bf16.gmra.mxu0 %v3549
        %v3658 = vpop.f32.mrf.mxu0
        %v3659 = vadd.f32 0.0, %v3658
        %v3660 = vpop.f32.mrf.mxu0
        %v3661 = vadd.f32 0.0, %v3660
        %3662 = vmatmul.bf16.gmra.mxu0 %v3550
        %v3663 = vpop.f32.mrf.mxu0
        %v3664 = vadd.f32 0.0, %v3663
        %v3665 = vpop.f32.mrf.mxu0
        %v3666 = vadd.f32 0.0, %v3665
        %3667 = vmatmul.bf16.gmra.mxu0 %v3551
        %v3668 = vpop.f32.mrf.mxu0
        %v3669 = vadd.f32 0.0, %v3668
        %v3670 = vpop.f32.mrf.mxu0
        %v3671 = vadd.f32 0.0, %v3670
        %3672 = vmatmul.bf16.gmra.mxu0 %v3552
        %v3673 = vpop.f32.mrf.mxu0
        %v3674 = vadd.f32 0.0, %v3673
        %v3675 = vpop.f32.mrf.mxu0
        %v3676 = vadd.f32 0.0, %v3675
        %3677 = vmatmul.bf16.gmra.mxu0 %v3553
        %v3678 = vpop.f32.mrf.mxu0
        %v3679 = vadd.f32 0.0, %v3678
        %v3680 = vpop.f32.mrf.mxu0
        %v3681 = vadd.f32 0.0, %v3680
        %3682 = vmatmul.bf16.gmra.mxu0 %v3554
        %v3683 = vpop.f32.mrf.mxu0
        %v3684 = vadd.f32 0.0, %v3683
        %v3685 = vpop.f32.mrf.mxu0
        %v3686 = vadd.f32 0.0, %v3685
        %3687 = vmatmul.bf16.gmra.mxu0 %v3555
        %v3688 = vpop.f32.mrf.mxu0
        %v3689 = vadd.f32 0.0, %v3688
        %v3690 = vpop.f32.mrf.mxu0
        %v3691 = vadd.f32 0.0, %v3690
        %3692 = vdwg.mxu0
        %3693 = vmatpush.bf16.msra.mxu0 %v3627
        %3694 = vmatpush.bf16.msra.mxu0 %v3625
        %3695 = vmatpush.bf16.msra.mxu0 %v3623
        %3696 = vmatpush.bf16.msra.mxu0 %v3621
        %3697 = vmatpush.bf16.msra.mxu0 %v3619
        %3698 = vmatpush.bf16.msra.mxu0 %v3617
        %3699 = vmatpush.bf16.msra.mxu0 %v3615
        %3700 = vmatpush.bf16.msra.mxu0 %v3613
        %3701 = vmatmul.bf16.gmra.mxu0 %v3548
        %v3702 = vpop.f32.mrf.mxu0
        %v3703 = vadd.f32 0.0, %v3702
        %v3704 = vpop.f32.mrf.mxu0
        %v3705 = vadd.f32 0.0, %v3704
        %3706 = vmatmul.bf16.gmra.mxu0 %v3549
        %v3707 = vpop.f32.mrf.mxu0
        %v3708 = vadd.f32 0.0, %v3707
        %v3709 = vpop.f32.mrf.mxu0
        %v3710 = vadd.f32 0.0, %v3709
        %3711 = vmatmul.bf16.gmra.mxu0 %v3550
        %v3712 = vpop.f32.mrf.mxu0
        %v3713 = vadd.f32 0.0, %v3712
        %v3714 = vpop.f32.mrf.mxu0
        %v3715 = vadd.f32 0.0, %v3714
        %3716 = vmatmul.bf16.gmra.mxu0 %v3551
        %v3717 = vpop.f32.mrf.mxu0
        %v3718 = vadd.f32 0.0, %v3717
        %v3719 = vpop.f32.mrf.mxu0
        %v3720 = vadd.f32 0.0, %v3719
        %3721 = vmatmul.bf16.gmra.mxu0 %v3552
        %v3722 = vpop.f32.mrf.mxu0
        %v3723 = vadd.f32 0.0, %v3722
        %v3724 = vpop.f32.mrf.mxu0
        %v3725 = vadd.f32 0.0, %v3724
        %3726 = vmatmul.bf16.gmra.mxu0 %v3553
        %v3727 = vpop.f32.mrf.mxu0
        %v3728 = vadd.f32 0.0, %v3727
        %v3729 = vpop.f32.mrf.mxu0
        %v3730 = vadd.f32 0.0, %v3729
        %3731 = vmatmul.bf16.gmra.mxu0 %v3554
        %v3732 = vpop.f32.mrf.mxu0
        %v3733 = vadd.f32 0.0, %v3732
        %v3734 = vpop.f32.mrf.mxu0
        %v3735 = vadd.f32 0.0, %v3734
        %3736 = vmatmul.bf16.gmra.mxu0 %v3555
        %v3737 = vpop.f32.mrf.mxu0
        %v3738 = vadd.f32 0.0, %v3737
        %v3739 = vpop.f32.mrf.mxu0
        %v3740 = vadd.f32 0.0, %v3739
        %3741 = vdwg.mxu0
        %v3742 = vadd.f32 %v3379, %v3654
        %v3743 = vadd.f32 %v3428, %v3703
        %v3744 = vadd.f32 %v3381, %v3656
        %v3745 = vadd.f32 %v3430, %v3705
        %v3746 = vadd.f32 %v3384, %v3659
        %v3747 = vadd.f32 %v3433, %v3708
        %v3748 = vadd.f32 %v3386, %v3661
        %v3749 = vadd.f32 %v3435, %v3710
        %v3750 = vadd.f32 %v3389, %v3664
        %v3751 = vadd.f32 %v3438, %v3713
        %v3752 = vadd.f32 %v3391, %v3666
        %v3753 = vadd.f32 %v3440, %v3715
        %v3754 = vadd.f32 %v3394, %v3669
        %v3755 = vadd.f32 %v3443, %v3718
        %v3756 = vadd.f32 %v3396, %v3671
        %v3757 = vadd.f32 %v3445, %v3720
        %v3758 = vadd.f32 %v3399, %v3674
        %v3759 = vadd.f32 %v3448, %v3723
        %v3760 = vadd.f32 %v3401, %v3676
        %v3761 = vadd.f32 %v3450, %v3725
        %v3762 = vadd.f32 %v3404, %v3679
        %v3763 = vadd.f32 %v3453, %v3728
        %v3764 = vadd.f32 %v3406, %v3681
        %v3765 = vadd.f32 %v3455, %v3730
        %v3766 = vadd.f32 %v3409, %v3684
        %v3767 = vadd.f32 %v3458, %v3733
        %v3768 = vadd.f32 %v3411, %v3686
        %v3769 = vadd.f32 %v3460, %v3735
        %v3770 = vadd.f32 %v3414, %v3689
        %v3771 = vadd.f32 %v3463, %v3738
        %v3772 = vadd.f32 %v3416, %v3691
        %v3773 = vadd.f32 %v3465, %v3740
        %v3774 = vld [vmem:[%s8] sm:$0x3]
        %v3776 = vperm.slane %v3774, 0
        %v3777 = vperm.slane %v3774, 1
        %v3780 = vadd.f32 %v3742, %v3776
        %v3781 = vadd.f32 %v3743, %v3777
        %v3782 = vadd.f32 %v3744, %v3776
        %v3783 = vadd.f32 %v3745, %v3777
        %v3784 = vadd.f32 %v3746, %v3776
        %v3785 = vadd.f32 %v3747, %v3777
        %v3786 = vadd.f32 %v3748, %v3776
        %v3787 = vadd.f32 %v3749, %v3777
        %v3788 = vadd.f32 %v3750, %v3776
        %v3789 = vadd.f32 %v3751, %v3777
        %v3790 = vadd.f32 %v3752, %v3776
        %v3791 = vadd.f32 %v3753, %v3777
        %v3792 = vadd.f32 %v3754, %v3776
        %v3793 = vadd.f32 %v3755, %v3777
        %v3794 = vadd.f32 %v3756, %v3776
        %v3795 = vadd.f32 %v3757, %v3777
        %v3796 = vadd.f32 %v3758, %v3776
        %v3797 = vadd.f32 %v3759, %v3777
        %v3798 = vadd.f32 %v3760, %v3776
        %v3799 = vadd.f32 %v3761, %v3777
        %v3800 = vadd.f32 %v3762, %v3776
        %v3801 = vadd.f32 %v3763, %v3777
        %v3802 = vadd.f32 %v3764, %v3776
        %v3803 = vadd.f32 %v3765, %v3777
        %v3804 = vadd.f32 %v3766, %v3776
        %v3805 = vadd.f32 %v3767, %v3777
        %v3806 = vadd.f32 %v3768, %v3776
        %v3807 = vadd.f32 %v3769, %v3777
        %v3808 = vadd.f32 %v3770, %v3776
        %v3809 = vadd.f32 %v3771, %v3777
        %v3810 = vadd.f32 %v3772, %v3776
        %v3811 = vadd.f32 %v3773, %v3777
        %v3812 = vmax.f32 %v3780, 0.0
        %v3813 = vmax.f32 %v3781, 0.0
        %v3814 = vmax.f32 %v3782, 0.0
        %v3815 = vmax.f32 %v3783, 0.0
        %v3816 = vmax.f32 %v3784, 0.0
        %v3817 = vmax.f32 %v3785, 0.0
        %v3818 = vmax.f32 %v3786, 0.0
        %v3819 = vmax.f32 %v3787, 0.0
        %v3820 = vmax.f32 %v3788, 0.0
        %v3821 = vmax.f32 %v3789, 0.0
        %v3822 = vmax.f32 %v3790, 0.0
        %v3823 = vmax.f32 %v3791, 0.0
        %v3824 = vmax.f32 %v3792, 0.0
        %v3825 = vmax.f32 %v3793, 0.0
        %v3826 = vmax.f32 %v3794, 0.0
        %v3827 = vmax.f32 %v3795, 0.0
        %v3828 = vmax.f32 %v3796, 0.0
        %v3829 = vmax.f32 %v3797, 0.0
        %v3830 = vmax.f32 %v3798, 0.0
        %v3831 = vmax.f32 %v3799, 0.0
        %v3832 = vmax.f32 %v3800, 0.0
        %v3833 = vmax.f32 %v3801, 0.0
        %v3834 = vmax.f32 %v3802, 0.0
        %v3835 = vmax.f32 %v3803, 0.0
        %v3836 = vmax.f32 %v3804, 0.0
        %v3837 = vmax.f32 %v3805, 0.0
        %v3838 = vmax.f32 %v3806, 0.0
        %v3839 = vmax.f32 %v3807, 0.0
        %v3840 = vmax.f32 %v3808, 0.0
        %v3841 = vmax.f32 %v3809, 0.0
        %v3842 = vmax.f32 %v3810, 0.0
        %v3843 = vmax.f32 %v3811, 0.0
        %v3844 = vpack.c.bf16 %v3814, %v3812
        %v3845 = vpack.c.bf16 %v3815, %v3813
        %v3846 = vpack.c.bf16 %v3818, %v3816
        %v3847 = vpack.c.bf16 %v3819, %v3817
        %v3848 = vpack.c.bf16 %v3822, %v3820
        %v3849 = vpack.c.bf16 %v3823, %v3821
        %v3850 = vpack.c.bf16 %v3826, %v3824
        %v3851 = vpack.c.bf16 %v3827, %v3825
        %v3852 = vpack.c.bf16 %v3830, %v3828
        %v3853 = vpack.c.bf16 %v3831, %v3829
        %v3854 = vpack.c.bf16 %v3834, %v3832
        %v3855 = vpack.c.bf16 %v3835, %v3833
        %v3856 = vpack.c.bf16 %v3838, %v3836
        %v3857 = vpack.c.bf16 %v3839, %v3837
        %v3858 = vpack.c.bf16 %v3842, %v3840
        %v3859 = vpack.c.bf16 %v3843, %v3841
        %v3860 = vld [vmem:[#allocation16] sm:$0xf]
        %v3861 = vld [vmem:[#allocation16 + $0x4] sm:$0xf]
        %v3862 = vld [vmem:[#allocation16 + $0x8] sm:$0xf]
        %v3863 = vld [vmem:[#allocation16 + $0xc] sm:$0xf]
        %v3864 = vld [vmem:[#allocation16 + $0x10] sm:$0xf]
        %v3865 = vld [vmem:[#allocation16 + $0x14] sm:$0xf]
        %v3866 = vld [vmem:[#allocation16 + $0x18] sm:$0xf]
        %v3867 = vld [vmem:[#allocation16 + $0x1c] sm:$0xf]
        %v3876 = vunpack.c.l.b16 %v3860
        %v3877 = vunpack.c.l.b16 %v3861
        %v3878 = vunpack.c.l.b16 %v3862
        %v3879 = vunpack.c.l.b16 %v3863
        %v3880 = vunpack.c.l.b16 %v3864
        %v3881 = vunpack.c.l.b16 %v3865
        %v3882 = vunpack.c.l.b16 %v3866
        %v3883 = vunpack.c.l.b16 %v3867
        %v3884 = vpack.c.b16 %v3877, %v3876
        %v3885 = vpack.c.b16 %v3879, %v3878
        %v3886 = vpack.c.b16 %v3881, %v3880
        %v3887 = vpack.c.b16 %v3883, %v3882
        %3892 = vmatpush.bf16.msra.mxu0 %v3858
        %3893 = vmatpush.bf16.msra.mxu0 %v3856
        %3894 = vmatpush.bf16.msra.mxu0 %v3854
        %3895 = vmatpush.bf16.msra.mxu0 %v3852
        %3896 = vmatpush.bf16.msra.mxu0 %v3850
        %3897 = vmatpush.bf16.msra.mxu0 %v3848
        %3898 = vmatpush.bf16.msra.mxu0 %v3846
        %3899 = vmatpush.bf16.msra.mxu0 %v3844
        %3900 = vmatmul.bf16.gmra.mxu0 %v3884
        %v3901 = vpop.f32.mrf.mxu0
        %v3902 = vadd.f32 0.0, %v3901
        %v3903 = vpop.f32.mrf.mxu0
        %v3904 = vadd.f32 0.0, %v3903
        %3905 = vmatmul.bf16.gmra.mxu0 %v3885
        %v3906 = vpop.f32.mrf.mxu0
        %v3907 = vadd.f32 0.0, %v3906
        %v3908 = vpop.f32.mrf.mxu0
        %v3909 = vadd.f32 0.0, %v3908
        %3910 = vmatmul.bf16.gmra.mxu0 %v3886
        %v3911 = vpop.f32.mrf.mxu0
        %v3912 = vadd.f32 0.0, %v3911
        %v3913 = vpop.f32.mrf.mxu0
        %v3914 = vadd.f32 0.0, %v3913
        %3915 = vmatmul.bf16.gmra.mxu0 %v3887
        %v3916 = vpop.f32.mrf.mxu0
        %v3917 = vadd.f32 0.0, %v3916
        %v3918 = vpop.f32.mrf.mxu0
        %v3919 = vadd.f32 0.0, %v3918
        %3920 = vdwg.mxu0
        %3921 = vmatpush.bf16.msra.mxu0 %v3859
        %3922 = vmatpush.bf16.msra.mxu0 %v3857
        %3923 = vmatpush.bf16.msra.mxu0 %v3855
        %3924 = vmatpush.bf16.msra.mxu0 %v3853
        %3925 = vmatpush.bf16.msra.mxu0 %v3851
        %3926 = vmatpush.bf16.msra.mxu0 %v3849
        %3927 = vmatpush.bf16.msra.mxu0 %v3847
        %3928 = vmatpush.bf16.msra.mxu0 %v3845
        %3929 = vmatmul.bf16.gmra.mxu0 %v3884
        %v3930 = vpop.f32.mrf.mxu0
        %v3931 = vadd.f32 0.0, %v3930
        %v3932 = vpop.f32.mrf.mxu0
        %v3933 = vadd.f32 0.0, %v3932
        %3934 = vmatmul.bf16.gmra.mxu0 %v3885
        %v3935 = vpop.f32.mrf.mxu0
        %v3936 = vadd.f32 0.0, %v3935
        %v3937 = vpop.f32.mrf.mxu0
        %v3938 = vadd.f32 0.0, %v3937
        %3939 = vmatmul.bf16.gmra.mxu0 %v3886
        %v3940 = vpop.f32.mrf.mxu0
        %v3941 = vadd.f32 0.0, %v3940
        %v3942 = vpop.f32.mrf.mxu0
        %v3943 = vadd.f32 0.0, %v3942
        %3944 = vmatmul.bf16.gmra.mxu0 %v3887
        %v3945 = vpop.f32.mrf.mxu0
        %v3946 = vadd.f32 0.0, %v3945
        %v3947 = vpop.f32.mrf.mxu0
        %v3948 = vadd.f32 0.0, %v3947
        %3949 = vdwg.mxu0
        %v3950 = vld [vmem:[#allocation18] sm:$0xf]
        %v3951 = vld [vmem:[#allocation18 + $0x4] sm:$0xf]
        %v3952 = vld [vmem:[#allocation18 + $0x8] sm:$0xf]
        %v3953 = vld [vmem:[#allocation18 + $0xc] sm:$0xf]
        %v3954 = vld [vmem:[#allocation18 + $0x10] sm:$0xf]
        %v3955 = vld [vmem:[#allocation18 + $0x14] sm:$0xf]
        %v3956 = vld [vmem:[#allocation18 + $0x18] sm:$0xf]
        %v3957 = vld [vmem:[#allocation18 + $0x1c] sm:$0xf]
        %v3966 = vunpack.c.l.b16 %v3950
        %v3967 = vunpack.c.l.b16 %v3951
        %v3968 = vunpack.c.l.b16 %v3952
        %v3969 = vunpack.c.l.b16 %v3953
        %v3970 = vunpack.c.l.b16 %v3954
        %v3971 = vunpack.c.l.b16 %v3955
        %v3972 = vunpack.c.l.b16 %v3956
        %v3973 = vunpack.c.l.b16 %v3957
        %v3974 = vpack.c.b16 %v3967, %v3966
        %v3975 = vpack.c.b16 %v3969, %v3968
        %v3976 = vpack.c.b16 %v3971, %v3970
        %v3977 = vpack.c.b16 %v3973, %v3972
        %3982 = vmatpush.bf16.msra.mxu0 %v3858
        %3983 = vmatpush.bf16.msra.mxu0 %v3856
        %3984 = vmatpush.bf16.msra.mxu0 %v3854
        %3985 = vmatpush.bf16.msra.mxu0 %v3852
        %3986 = vmatpush.bf16.msra.mxu0 %v3850
        %3987 = vmatpush.bf16.msra.mxu0 %v3848
        %3988 = vmatpush.bf16.msra.mxu0 %v3846
        %3989 = vmatpush.bf16.msra.mxu0 %v3844
        %3990 = vmatmul.bf16.gmra.mxu0 %v3974
        %v3991 = vpop.f32.mrf.mxu0
        %v3992 = vadd.f32 0.0, %v3991
        %v3993 = vpop.f32.mrf.mxu0
        %v3994 = vadd.f32 0.0, %v3993
        %3995 = vmatmul.bf16.gmra.mxu0 %v3975
        %v3996 = vpop.f32.mrf.mxu0
        %v3997 = vadd.f32 0.0, %v3996
        %v3998 = vpop.f32.mrf.mxu0
        %v3999 = vadd.f32 0.0, %v3998
        %4000 = vmatmul.bf16.gmra.mxu0 %v3976
        %v4001 = vpop.f32.mrf.mxu0
        %v4002 = vadd.f32 0.0, %v4001
        %v4003 = vpop.f32.mrf.mxu0
        %v4004 = vadd.f32 0.0, %v4003
        %4005 = vmatmul.bf16.gmra.mxu0 %v3977
        %v4006 = vpop.f32.mrf.mxu0
        %v4007 = vadd.f32 0.0, %v4006
        %v4008 = vpop.f32.mrf.mxu0
        %v4009 = vadd.f32 0.0, %v4008
        %4010 = vdwg.mxu0
        %4011 = vmatpush.bf16.msra.mxu0 %v3859
        %4012 = vmatpush.bf16.msra.mxu0 %v3857
        %4013 = vmatpush.bf16.msra.mxu0 %v3855
        %4014 = vmatpush.bf16.msra.mxu0 %v3853
        %4015 = vmatpush.bf16.msra.mxu0 %v3851
        %4016 = vmatpush.bf16.msra.mxu0 %v3849
        %4017 = vmatpush.bf16.msra.mxu0 %v3847
        %4018 = vmatpush.bf16.msra.mxu0 %v3845
        %4019 = vmatmul.bf16.gmra.mxu0 %v3974
        %v4020 = vpop.f32.mrf.mxu0
        %v4021 = vadd.f32 0.0, %v4020
        %v4022 = vpop.f32.mrf.mxu0
        %v4023 = vadd.f32 0.0, %v4022
        %4024 = vmatmul.bf16.gmra.mxu0 %v3975
        %v4025 = vpop.f32.mrf.mxu0
        %v4026 = vadd.f32 0.0, %v4025
        %v4027 = vpop.f32.mrf.mxu0
        %v4028 = vadd.f32 0.0, %v4027
        %4029 = vmatmul.bf16.gmra.mxu0 %v3976
        %v4030 = vpop.f32.mrf.mxu0
        %v4031 = vadd.f32 0.0, %v4030
        %v4032 = vpop.f32.mrf.mxu0
        %v4033 = vadd.f32 0.0, %v4032
        %4034 = vmatmul.bf16.gmra.mxu0 %v3977
        %v4035 = vpop.f32.mrf.mxu0
        %v4036 = vadd.f32 0.0, %v4035
        %v4037 = vpop.f32.mrf.mxu0
        %v4038 = vadd.f32 0.0, %v4037
        %4039 = vdwg.mxu0
        %v4040 = vmax.f32 %v3902, %v3992
        %v4041 = vmax.f32 %v3931, %v4021
        %v4042 = vmax.f32 %v3904, %v3994
        %v4043 = vmax.f32 %v3933, %v4023
        %v4044 = vmax.f32 %v3907, %v3997
        %v4045 = vmax.f32 %v3936, %v4026
        %v4046 = vmax.f32 %v3909, %v3999
        %v4047 = vmax.f32 %v3938, %v4028
        %v4048 = vmax.f32 %v3912, %v4002
        %v4049 = vmax.f32 %v3941, %v4031
        %v4050 = vmax.f32 %v3914, %v4004
        %v4051 = vmax.f32 %v3943, %v4033
        %v4052 = vmax.f32 %v3917, %v4007
        %v4053 = vmax.f32 %v3946, %v4036
        %v4054 = vmax.f32 %v3919, %v4009
        %v4055 = vmax.f32 %v3948, %v4038
        %v4056 = vpack.c.bf16 %v4042, %v4040
        %v4057 = vpack.c.bf16 %v4043, %v4041
        %v4058 = vpack.c.bf16 %v4046, %v4044
        %v4059 = vpack.c.bf16 %v4047, %v4045
        %v4060 = vpack.c.bf16 %v4050, %v4048
        %v4061 = vpack.c.bf16 %v4051, %v4049
        %v4062 = vpack.c.bf16 %v4054, %v4052
        %v4063 = vpack.c.bf16 %v4055, %v4053
        %v4064 = vld [vmem:[#allocation19] sm:$0xf]
        %v4065 = vld [vmem:[#allocation19 + $0x4] sm:$0xf]
        %v4066 = vld [vmem:[#allocation19 + $0x8] sm:$0xf]
        %v4067 = vld [vmem:[#allocation19 + $0xc] sm:$0xf]
        %v4068 = vld [vmem:[#allocation19 + $0x10] sm:$0xf]
        %v4069 = vld [vmem:[#allocation19 + $0x14] sm:$0xf]
        %v4070 = vld [vmem:[#allocation19 + $0x18] sm:$0xf]
        %v4071 = vld [vmem:[#allocation19 + $0x1c] sm:$0xf]
        %v4072 = vld [vmem:[#allocation19 + $0x20] sm:$0xf]
        %v4073 = vld [vmem:[#allocation19 + $0x24] sm:$0xf]
        %v4074 = vld [vmem:[#allocation19 + $0x28] sm:$0xf]
        %v4075 = vld [vmem:[#allocation19 + $0x2c] sm:$0xf]
        %v4076 = vld [vmem:[#allocation19 + $0x30] sm:$0xf]
        %v4077 = vld [vmem:[#allocation19 + $0x34] sm:$0xf]
        %v4078 = vld [vmem:[#allocation19 + $0x38] sm:$0xf]
        %v4079 = vld [vmem:[#allocation19 + $0x3c] sm:$0xf]
        %v4080 = vld [vmem:[#allocation19 + $0x40] sm:$0xf]
        %v4081 = vld [vmem:[#allocation19 + $0x44] sm:$0xf]
        %v4082 = vld [vmem:[#allocation19 + $0x48] sm:$0xf]
        %v4083 = vld [vmem:[#allocation19 + $0x4c] sm:$0xf]
        %v4084 = vld [vmem:[#allocation19 + $0x50] sm:$0xf]
        %v4085 = vld [vmem:[#allocation19 + $0x54] sm:$0xf]
        %v4086 = vld [vmem:[#allocation19 + $0x58] sm:$0xf]
        %v4087 = vld [vmem:[#allocation19 + $0x5c] sm:$0xf]
        %v4088 = vld [vmem:[#allocation19 + $0x60] sm:$0xf]
        %v4089 = vld [vmem:[#allocation19 + $0x64] sm:$0xf]
        %v4090 = vld [vmem:[#allocation19 + $0x68] sm:$0xf]
        %v4091 = vld [vmem:[#allocation19 + $0x6c] sm:$0xf]
        %v4092 = vld [vmem:[#allocation19 + $0x70] sm:$0xf]
        %v4093 = vld [vmem:[#allocation19 + $0x74] sm:$0xf]
        %v4094 = vld [vmem:[#allocation19 + $0x78] sm:$0xf]
        %v4095 = vld [vmem:[#allocation19 + $0x7c] sm:$0xf]
        %v4128 = vunpack.c.l.b16 %v4064
        %v4129 = vunpack.c.l.b16 %v4065
        %v4130 = vunpack.c.l.b16 %v4066
        %v4131 = vunpack.c.l.b16 %v4067
        %v4132 = vunpack.c.l.b16 %v4068
        %v4133 = vunpack.c.l.b16 %v4069
        %v4134 = vunpack.c.l.b16 %v4070
        %v4135 = vunpack.c.l.b16 %v4071
        %v4136 = vunpack.c.l.b16 %v4072
        %v4137 = vunpack.c.l.b16 %v4073
        %v4138 = vunpack.c.l.b16 %v4074
        %v4139 = vunpack.c.l.b16 %v4075
        %v4140 = vunpack.c.l.b16 %v4076
        %v4141 = vunpack.c.l.b16 %v4077
        %v4142 = vunpack.c.l.b16 %v4078
        %v4143 = vunpack.c.l.b16 %v4079
        %v4144 = vunpack.c.l.b16 %v4080
        %v4145 = vunpack.c.l.b16 %v4081
        %v4146 = vunpack.c.l.b16 %v4082
        %v4147 = vunpack.c.l.b16 %v4083
        %v4148 = vunpack.c.l.b16 %v4084
        %v4149 = vunpack.c.l.b16 %v4085
        %v4150 = vunpack.c.l.b16 %v4086
        %v4151 = vunpack.c.l.b16 %v4087
        %v4152 = vunpack.c.l.b16 %v4088
        %v4153 = vunpack.c.l.b16 %v4089
        %v4154 = vunpack.c.l.b16 %v4090
        %v4155 = vunpack.c.l.b16 %v4091
        %v4156 = vunpack.c.l.b16 %v4092
        %v4157 = vunpack.c.l.b16 %v4093
        %v4158 = vunpack.c.l.b16 %v4094
        %v4159 = vunpack.c.l.b16 %v4095
        %v4160 = vpack.c.b16 %v4129, %v4128
        %v4161 = vpack.c.b16 %v4131, %v4130
        %v4162 = vpack.c.b16 %v4133, %v4132
        %v4163 = vpack.c.b16 %v4135, %v4134
        %v4164 = vpack.c.b16 %v4137, %v4136
        %v4165 = vpack.c.b16 %v4139, %v4138
        %v4166 = vpack.c.b16 %v4141, %v4140
        %v4167 = vpack.c.b16 %v4143, %v4142
        %v4168 = vpack.c.b16 %v4145, %v4144
        %v4169 = vpack.c.b16 %v4147, %v4146
        %v4170 = vpack.c.b16 %v4149, %v4148
        %v4171 = vpack.c.b16 %v4151, %v4150
        %v4172 = vpack.c.b16 %v4153, %v4152
        %v4173 = vpack.c.b16 %v4155, %v4154
        %v4174 = vpack.c.b16 %v4157, %v4156
        %v4175 = vpack.c.b16 %v4159, %v4158
        %4192 = vmatpush.bf16.msra.mxu0 %v4167
        %4193 = vmatpush.bf16.msra.mxu0 %v4166
        %4194 = vmatpush.bf16.msra.mxu0 %v4165
        %4195 = vmatpush.bf16.msra.mxu0 %v4164
        %4196 = vmatpush.bf16.msra.mxu0 %v4163
        %4197 = vmatpush.bf16.msra.mxu0 %v4162
        %4198 = vmatpush.bf16.msra.mxu0 %v4161
        %4199 = vmatpush.bf16.msra.mxu0 %v4160
        %4200 = vmatmul.bf16.gmra.mxu0 %v4056
        %v4201 = vpop.f32.mrf.mxu0
        %v4202 = vadd.f32 0.0, %v4201
        %v4203 = vpop.f32.mrf.mxu0
        %v4204 = vadd.f32 0.0, %v4203
        %4205 = vmatmul.bf16.gmra.mxu0 %v4058
        %v4206 = vpop.f32.mrf.mxu0
        %v4207 = vadd.f32 0.0, %v4206
        %v4208 = vpop.f32.mrf.mxu0
        %v4209 = vadd.f32 0.0, %v4208
        %4210 = vmatmul.bf16.gmra.mxu0 %v4060
        %v4211 = vpop.f32.mrf.mxu0
        %v4212 = vadd.f32 0.0, %v4211
        %v4213 = vpop.f32.mrf.mxu0
        %v4214 = vadd.f32 0.0, %v4213
        %4215 = vmatmul.bf16.gmra.mxu0 %v4062
        %v4216 = vpop.f32.mrf.mxu0
        %v4217 = vadd.f32 0.0, %v4216
        %v4218 = vpop.f32.mrf.mxu0
        %v4219 = vadd.f32 0.0, %v4218
        %4220 = vdwg.mxu0
        %4221 = vmatpush.bf16.msra.mxu0 %v4175
        %4222 = vmatpush.bf16.msra.mxu0 %v4174
        %4223 = vmatpush.bf16.msra.mxu0 %v4173
        %4224 = vmatpush.bf16.msra.mxu0 %v4172
        %4225 = vmatpush.bf16.msra.mxu0 %v4171
        %4226 = vmatpush.bf16.msra.mxu0 %v4170
        %4227 = vmatpush.bf16.msra.mxu0 %v4169
        %4228 = vmatpush.bf16.msra.mxu0 %v4168
        %4229 = vmatmul.bf16.gmra.mxu0 %v4057
        %v4230 = vpop.f32.mrf.mxu0
        %v4231 = vadd.f32 %v4202, %v4230
        %v4232 = vpop.f32.mrf.mxu0
        %v4233 = vadd.f32 %v4204, %v4232
        %4234 = vmatmul.bf16.gmra.mxu0 %v4059
        %v4235 = vpop.f32.mrf.mxu0
        %v4236 = vadd.f32 %v4207, %v4235
        %v4237 = vpop.f32.mrf.mxu0
        %v4238 = vadd.f32 %v4209, %v4237
        %4239 = vmatmul.bf16.gmra.mxu0 %v4061
        %v4240 = vpop.f32.mrf.mxu0
        %v4241 = vadd.f32 %v4212, %v4240
        %v4242 = vpop.f32.mrf.mxu0
        %v4243 = vadd.f32 %v4214, %v4242
        %4244 = vmatmul.bf16.gmra.mxu0 %v4063
        %v4245 = vpop.f32.mrf.mxu0
        %v4246 = vadd.f32 %v4217, %v4245
        %v4247 = vpop.f32.mrf.mxu0
        %v4248 = vadd.f32 %v4219, %v4247
        %4249 = vdwg.mxu0
        %v4250 = vld [vmem:[#allocation21] sm:$0xf]
        %v4251 = vld [vmem:[#allocation21 + $0x4] sm:$0xf]
        %v4252 = vld [vmem:[#allocation21 + $0x8] sm:$0xf]
        %v4253 = vld [vmem:[#allocation21 + $0xc] sm:$0xf]
        %v4254 = vld [vmem:[#allocation21 + $0x10] sm:$0xf]
        %v4255 = vld [vmem:[#allocation21 + $0x14] sm:$0xf]
        %v4256 = vld [vmem:[#allocation21 + $0x18] sm:$0xf]
        %v4257 = vld [vmem:[#allocation21 + $0x1c] sm:$0xf]
        %v4258 = vld [vmem:[#allocation21 + $0x20] sm:$0xf]
        %v4259 = vld [vmem:[#allocation21 + $0x24] sm:$0xf]
        %v4260 = vld [vmem:[#allocation21 + $0x28] sm:$0xf]
        %v4261 = vld [vmem:[#allocation21 + $0x2c] sm:$0xf]
        %v4262 = vld [vmem:[#allocation21 + $0x30] sm:$0xf]
        %v4263 = vld [vmem:[#allocation21 + $0x34] sm:$0xf]
        %v4264 = vld [vmem:[#allocation21 + $0x38] sm:$0xf]
        %v4265 = vld [vmem:[#allocation21 + $0x3c] sm:$0xf]
        %v4266 = vld [vmem:[#allocation21 + $0x40] sm:$0xf]
        %v4267 = vld [vmem:[#allocation21 + $0x44] sm:$0xf]
        %v4268 = vld [vmem:[#allocation21 + $0x48] sm:$0xf]
        %v4269 = vld [vmem:[#allocation21 + $0x4c] sm:$0xf]
        %v4270 = vld [vmem:[#allocation21 + $0x50] sm:$0xf]
        %v4271 = vld [vmem:[#allocation21 + $0x54] sm:$0xf]
        %v4272 = vld [vmem:[#allocation21 + $0x58] sm:$0xf]
        %v4273 = vld [vmem:[#allocation21 + $0x5c] sm:$0xf]
        %v4274 = vld [vmem:[#allocation21 + $0x60] sm:$0xf]
        %v4275 = vld [vmem:[#allocation21 + $0x64] sm:$0xf]
        %v4276 = vld [vmem:[#allocation21 + $0x68] sm:$0xf]
        %v4277 = vld [vmem:[#allocation21 + $0x6c] sm:$0xf]
        %v4278 = vld [vmem:[#allocation21 + $0x70] sm:$0xf]
        %v4279 = vld [vmem:[#allocation21 + $0x74] sm:$0xf]
        %v4280 = vld [vmem:[#allocation21 + $0x78] sm:$0xf]
        %v4281 = vld [vmem:[#allocation21 + $0x7c] sm:$0xf]
        %v4314 = vunpack.c.l.b16 %v4250
        %v4315 = vunpack.c.l.b16 %v4251
        %v4316 = vunpack.c.l.b16 %v4252
        %v4317 = vunpack.c.l.b16 %v4253
        %v4318 = vunpack.c.l.b16 %v4254
        %v4319 = vunpack.c.l.b16 %v4255
        %v4320 = vunpack.c.l.b16 %v4256
        %v4321 = vunpack.c.l.b16 %v4257
        %v4322 = vunpack.c.l.b16 %v4258
        %v4323 = vunpack.c.l.b16 %v4259
        %v4324 = vunpack.c.l.b16 %v4260
        %v4325 = vunpack.c.l.b16 %v4261
        %v4326 = vunpack.c.l.b16 %v4262
        %v4327 = vunpack.c.l.b16 %v4263
        %v4328 = vunpack.c.l.b16 %v4264
        %v4329 = vunpack.c.l.b16 %v4265
        %v4330 = vunpack.c.l.b16 %v4266
        %v4331 = vunpack.c.l.b16 %v4267
        %v4332 = vunpack.c.l.b16 %v4268
        %v4333 = vunpack.c.l.b16 %v4269
        %v4334 = vunpack.c.l.b16 %v4270
        %v4335 = vunpack.c.l.b16 %v4271
        %v4336 = vunpack.c.l.b16 %v4272
        %v4337 = vunpack.c.l.b16 %v4273
        %v4338 = vunpack.c.l.b16 %v4274
        %v4339 = vunpack.c.l.b16 %v4275
        %v4340 = vunpack.c.l.b16 %v4276
        %v4341 = vunpack.c.l.b16 %v4277
        %v4342 = vunpack.c.l.b16 %v4278
        %v4343 = vunpack.c.l.b16 %v4279
        %v4344 = vunpack.c.l.b16 %v4280
        %v4345 = vunpack.c.l.b16 %v4281
        %v4346 = vpack.c.b16 %v4315, %v4314
        %v4347 = vpack.c.b16 %v4317, %v4316
        %v4348 = vpack.c.b16 %v4319, %v4318
        %v4349 = vpack.c.b16 %v4321, %v4320
        %v4350 = vpack.c.b16 %v4323, %v4322
        %v4351 = vpack.c.b16 %v4325, %v4324
        %v4352 = vpack.c.b16 %v4327, %v4326
        %v4353 = vpack.c.b16 %v4329, %v4328
        %v4354 = vpack.c.b16 %v4331, %v4330
        %v4355 = vpack.c.b16 %v4333, %v4332
        %v4356 = vpack.c.b16 %v4335, %v4334
        %v4357 = vpack.c.b16 %v4337, %v4336
        %v4358 = vpack.c.b16 %v4339, %v4338
        %v4359 = vpack.c.b16 %v4341, %v4340
        %v4360 = vpack.c.b16 %v4343, %v4342
        %v4361 = vpack.c.b16 %v4345, %v4344
        %4378 = vmatpush.bf16.msra.mxu0 %v4353
        %4379 = vmatpush.bf16.msra.mxu0 %v4352
        %4380 = vmatpush.bf16.msra.mxu0 %v4351
        %4381 = vmatpush.bf16.msra.mxu0 %v4350
        %4382 = vmatpush.bf16.msra.mxu0 %v4349
        %4383 = vmatpush.bf16.msra.mxu0 %v4348
        %4384 = vmatpush.bf16.msra.mxu0 %v4347
        %4385 = vmatpush.bf16.msra.mxu0 %v4346
        %4386 = vmatmul.bf16.gmra.mxu0 %v4056
        %v4387 = vpop.f32.mrf.mxu0
        %v4388 = vadd.f32 0.0, %v4387
        %v4389 = vpop.f32.mrf.mxu0
        %v4390 = vadd.f32 0.0, %v4389
        %4391 = vmatmul.bf16.gmra.mxu0 %v4058
        %v4392 = vpop.f32.mrf.mxu0
        %v4393 = vadd.f32 0.0, %v4392
        %v4394 = vpop.f32.mrf.mxu0
        %v4395 = vadd.f32 0.0, %v4394
        %4396 = vmatmul.bf16.gmra.mxu0 %v4060
        %v4397 = vpop.f32.mrf.mxu0
        %v4398 = vadd.f32 0.0, %v4397
        %v4399 = vpop.f32.mrf.mxu0
        %v4400 = vadd.f32 0.0, %v4399
        %4401 = vmatmul.bf16.gmra.mxu0 %v4062
        %v4402 = vpop.f32.mrf.mxu0
        %v4403 = vadd.f32 0.0, %v4402
        %v4404 = vpop.f32.mrf.mxu0
        %v4405 = vadd.f32 0.0, %v4404
        %4406 = vdwg.mxu0
        %4407 = vmatpush.bf16.msra.mxu0 %v4361
        %4408 = vmatpush.bf16.msra.mxu0 %v4360
        %4409 = vmatpush.bf16.msra.mxu0 %v4359
        %4410 = vmatpush.bf16.msra.mxu0 %v4358
        %4411 = vmatpush.bf16.msra.mxu0 %v4357
        %4412 = vmatpush.bf16.msra.mxu0 %v4356
        %4413 = vmatpush.bf16.msra.mxu0 %v4355
        %4414 = vmatpush.bf16.msra.mxu0 %v4354
        %4415 = vmatmul.bf16.gmra.mxu0 %v4057
        %v4416 = vpop.f32.mrf.mxu0
        %v4417 = vadd.f32 %v4388, %v4416
        %v4418 = vpop.f32.mrf.mxu0
        %v4419 = vadd.f32 %v4390, %v4418
        %4420 = vmatmul.bf16.gmra.mxu0 %v4059
        %v4421 = vpop.f32.mrf.mxu0
        %v4422 = vadd.f32 %v4393, %v4421
        %v4423 = vpop.f32.mrf.mxu0
        %v4424 = vadd.f32 %v4395, %v4423
        %4425 = vmatmul.bf16.gmra.mxu0 %v4061
        %v4426 = vpop.f32.mrf.mxu0
        %v4427 = vadd.f32 %v4398, %v4426
        %v4428 = vpop.f32.mrf.mxu0
        %v4429 = vadd.f32 %v4400, %v4428
        %4430 = vmatmul.bf16.gmra.mxu0 %v4063
        %v4431 = vpop.f32.mrf.mxu0
        %v4432 = vadd.f32 %v4403, %v4431
        %v4433 = vpop.f32.mrf.mxu0
        %v4434 = vadd.f32 %v4405, %v4433
        %4435 = vdwg.mxu0
        %v4436 = vmax.f32 %v4231, %v4417
        %v4437 = vmax.f32 %v4233, %v4419
        %v4438 = vmax.f32 %v4236, %v4422
        %v4439 = vmax.f32 %v4238, %v4424
        %v4440 = vmax.f32 %v4241, %v4427
        %v4441 = vmax.f32 %v4243, %v4429
        %v4442 = vmax.f32 %v4246, %v4432
        %v4443 = vmax.f32 %v4248, %v4434
        %v4444 = vpack.c.bf16 %v4437, %v4436
        %v4445 = vpack.c.bf16 %v4439, %v4438
        %v4446 = vpack.c.bf16 %v4441, %v4440
        %v4447 = vpack.c.bf16 %v4443, %v4442
        %v4448 = vld [vmem:[#allocation22] sm:$0xff]
        %v4449 = vld [vmem:[#allocation22 + $0x8] sm:$0xff]
        %v4450 = vld [vmem:[#allocation22 + $0x10] sm:$0xff]
        %v4451 = vld [vmem:[#allocation22 + $0x18] sm:$0xff]
        %v4452 = vld [vmem:[#allocation22 + $0x20] sm:$0xff]
        %v4453 = vld [vmem:[#allocation22 + $0x28] sm:$0xff]
        %v4454 = vld [vmem:[#allocation22 + $0x30] sm:$0xff]
        %v4455 = vld [vmem:[#allocation22 + $0x38] sm:$0xff]
        %v4456 = vld [vmem:[#allocation22 + $0x40] sm:$0xff]
        %v4457 = vld [vmem:[#allocation22 + $0x48] sm:$0xff]
        %v4458 = vld [vmem:[#allocation22 + $0x50] sm:$0xff]
        %v4459 = vld [vmem:[#allocation22 + $0x58] sm:$0xff]
        %v4460 = vld [vmem:[#allocation22 + $0x60] sm:$0xff]
        %v4461 = vld [vmem:[#allocation22 + $0x68] sm:$0xff]
        %v4462 = vld [vmem:[#allocation22 + $0x70] sm:$0xff]
        %v4463 = vld [vmem:[#allocation22 + $0x78] sm:$0xff]
        %v4464 = vld [vmem:[#allocation22 + $0x80] sm:$0xff]
        %v4465 = vld [vmem:[#allocation22 + $0x88] sm:$0xff]
        %v4466 = vld [vmem:[#allocation22 + $0x90] sm:$0xff]
        %v4467 = vld [vmem:[#allocation22 + $0x98] sm:$0xff]
        %v4468 = vld [vmem:[#allocation22 + $0xa0] sm:$0xff]
        %v4469 = vld [vmem:[#allocation22 + $0xa8] sm:$0xff]
        %v4470 = vld [vmem:[#allocation22 + $0xb0] sm:$0xff]
        %v4471 = vld [vmem:[#allocation22 + $0xb8] sm:$0xff]
        %v4472 = vld [vmem:[#allocation22 + $0xc0] sm:$0xff]
        %v4473 = vld [vmem:[#allocation22 + $0xc8] sm:$0xff]
        %v4474 = vld [vmem:[#allocation22 + $0xd0] sm:$0xff]
        %v4475 = vld [vmem:[#allocation22 + $0xd8] sm:$0xff]
        %v4476 = vld [vmem:[#allocation22 + $0xe0] sm:$0xff]
        %v4477 = vld [vmem:[#allocation22 + $0xe8] sm:$0xff]
        %v4478 = vld [vmem:[#allocation22 + $0xf0] sm:$0xff]
        %v4479 = vld [vmem:[#allocation22 + $0xf8] sm:$0xff]
        %v4480 = vld [vmem:[#allocation22 + $0x100] sm:$0xff]
        %v4481 = vld [vmem:[#allocation22 + $0x108] sm:$0xff]
        %v4482 = vld [vmem:[#allocation22 + $0x110] sm:$0xff]
        %v4483 = vld [vmem:[#allocation22 + $0x118] sm:$0xff]
        %v4484 = vld [vmem:[#allocation22 + $0x120] sm:$0xff]
        %v4485 = vld [vmem:[#allocation22 + $0x128] sm:$0xff]
        %v4486 = vld [vmem:[#allocation22 + $0x130] sm:$0xff]
        %v4487 = vld [vmem:[#allocation22 + $0x138] sm:$0xff]
        %v4488 = vld [vmem:[#allocation22 + $0x140] sm:$0xff]
        %v4489 = vld [vmem:[#allocation22 + $0x148] sm:$0xff]
        %v4490 = vld [vmem:[#allocation22 + $0x150] sm:$0xff]
        %v4491 = vld [vmem:[#allocation22 + $0x158] sm:$0xff]
        %v4492 = vld [vmem:[#allocation22 + $0x160] sm:$0xff]
        %v4493 = vld [vmem:[#allocation22 + $0x168] sm:$0xff]
        %v4494 = vld [vmem:[#allocation22 + $0x170] sm:$0xff]
        %v4495 = vld [vmem:[#allocation22 + $0x178] sm:$0xff]
        %v4496 = vld [vmem:[#allocation22 + $0x180] sm:$0xff]
        %v4497 = vld [vmem:[#allocation22 + $0x188] sm:$0xff]
        %v4498 = vld [vmem:[#allocation22 + $0x190] sm:$0xff]
        %v4499 = vld [vmem:[#allocation22 + $0x198] sm:$0xff]
        %v4500 = vld [vmem:[#allocation22 + $0x1a0] sm:$0xff]
        %v4501 = vld [vmem:[#allocation22 + $0x1a8] sm:$0xff]
        %v4502 = vld [vmem:[#allocation22 + $0x1b0] sm:$0xff]
        %v4503 = vld [vmem:[#allocation22 + $0x1b8] sm:$0xff]
        %v4504 = vld [vmem:[#allocation22 + $0x1c0] sm:$0xff]
        %v4505 = vld [vmem:[#allocation22 + $0x1c8] sm:$0xff]
        %v4506 = vld [vmem:[#allocation22 + $0x1d0] sm:$0xff]
        %v4507 = vld [vmem:[#allocation22 + $0x1d8] sm:$0xff]
        %v4508 = vld [vmem:[#allocation22 + $0x1e0] sm:$0xff]
        %v4509 = vld [vmem:[#allocation22 + $0x1e8] sm:$0xff]
        %v4510 = vld [vmem:[#allocation22 + $0x1f0] sm:$0xff]
        %v4511 = vld [vmem:[#allocation22 + $0x1f8] sm:$0xff]
        %v4576 = vunpack.c.l.b16 %v4448
        %v4577 = vunpack.c.h.b16 %v4448
        %v4578 = vunpack.c.l.b16 %v4449
        %v4579 = vunpack.c.h.b16 %v4449
        %v4580 = vunpack.c.l.b16 %v4450
        %v4581 = vunpack.c.h.b16 %v4450
        %v4582 = vunpack.c.l.b16 %v4451
        %v4583 = vunpack.c.h.b16 %v4451
        %v4584 = vunpack.c.l.b16 %v4452
        %v4585 = vunpack.c.h.b16 %v4452
        %v4586 = vunpack.c.l.b16 %v4453
        %v4587 = vunpack.c.h.b16 %v4453
        %v4588 = vunpack.c.l.b16 %v4454
        %v4589 = vunpack.c.h.b16 %v4454
        %v4590 = vunpack.c.l.b16 %v4455
        %v4591 = vunpack.c.h.b16 %v4455
        %v4592 = vunpack.c.l.b16 %v4456
        %v4593 = vunpack.c.h.b16 %v4456
        %v4594 = vunpack.c.l.b16 %v4457
        %v4595 = vunpack.c.h.b16 %v4457
        %v4596 = vunpack.c.l.b16 %v4458
        %v4597 = vunpack.c.h.b16 %v4458
        %v4598 = vunpack.c.l.b16 %v4459
        %v4599 = vunpack.c.h.b16 %v4459
        %v4600 = vunpack.c.l.b16 %v4460
        %v4601 = vunpack.c.h.b16 %v4460
        %v4602 = vunpack.c.l.b16 %v4461
        %v4603 = vunpack.c.h.b16 %v4461
        %v4604 = vunpack.c.l.b16 %v4462
        %v4605 = vunpack.c.h.b16 %v4462
        %v4606 = vunpack.c.l.b16 %v4463
        %v4607 = vunpack.c.h.b16 %v4463
        %v4608 = vunpack.c.l.b16 %v4464
        %v4609 = vunpack.c.h.b16 %v4464
        %v4610 = vunpack.c.l.b16 %v4465
        %v4611 = vunpack.c.h.b16 %v4465
        %v4612 = vunpack.c.l.b16 %v4466
        %v4613 = vunpack.c.h.b16 %v4466
        %v4614 = vunpack.c.l.b16 %v4467
        %v4615 = vunpack.c.h.b16 %v4467
        %v4616 = vunpack.c.l.b16 %v4468
        %v4617 = vunpack.c.h.b16 %v4468
        %v4618 = vunpack.c.l.b16 %v4469
        %v4619 = vunpack.c.h.b16 %v4469
        %v4620 = vunpack.c.l.b16 %v4470
        %v4621 = vunpack.c.h.b16 %v4470
        %v4622 = vunpack.c.l.b16 %v4471
        %v4623 = vunpack.c.h.b16 %v4471
        %v4624 = vunpack.c.l.b16 %v4472
        %v4625 = vunpack.c.h.b16 %v4472
        %v4626 = vunpack.c.l.b16 %v4473
        %v4627 = vunpack.c.h.b16 %v4473
        %v4628 = vunpack.c.l.b16 %v4474
        %v4629 = vunpack.c.h.b16 %v4474
        %v4630 = vunpack.c.l.b16 %v4475
        %v4631 = vunpack.c.h.b16 %v4475
        %v4632 = vunpack.c.l.b16 %v4476
        %v4633 = vunpack.c.h.b16 %v4476
        %v4634 = vunpack.c.l.b16 %v4477
        %v4635 = vunpack.c.h.b16 %v4477
        %v4636 = vunpack.c.l.b16 %v4478
        %v4637 = vunpack.c.h.b16 %v4478
        %v4638 = vunpack.c.l.b16 %v4479
        %v4639 = vunpack.c.h.b16 %v4479
        %v4640 = vunpack.c.l.b16 %v4480
        %v4641 = vunpack.c.h.b16 %v4480
        %v4642 = vunpack.c.l.b16 %v4481
        %v4643 = vunpack.c.h.b16 %v4481
        %v4644 = vunpack.c.l.b16 %v4482
        %v4645 = vunpack.c.h.b16 %v4482
        %v4646 = vunpack.c.l.b16 %v4483
        %v4647 = vunpack.c.h.b16 %v4483
        %v4648 = vunpack.c.l.b16 %v4484
        %v4649 = vunpack.c.h.b16 %v4484
        %v4650 = vunpack.c.l.b16 %v4485
        %v4651 = vunpack.c.h.b16 %v4485
        %v4652 = vunpack.c.l.b16 %v4486
        %v4653 = vunpack.c.h.b16 %v4486
        %v4654 = vunpack.c.l.b16 %v4487
        %v4655 = vunpack.c.h.b16 %v4487
        %v4656 = vunpack.c.l.b16 %v4488
        %v4657 = vunpack.c.h.b16 %v4488
        %v4658 = vunpack.c.l.b16 %v4489
        %v4659 = vunpack.c.h.b16 %v4489
        %v4660 = vunpack.c.l.b16 %v4490
        %v4661 = vunpack.c.h.b16 %v4490
        %v4662 = vunpack.c.l.b16 %v4491
        %v4663 = vunpack.c.h.b16 %v4491
        %v4664 = vunpack.c.l.b16 %v4492
        %v4665 = vunpack.c.h.b16 %v4492
        %v4666 = vunpack.c.l.b16 %v4493
        %v4667 = vunpack.c.h.b16 %v4493
        %v4668 = vunpack.c.l.b16 %v4494
        %v4669 = vunpack.c.h.b16 %v4494
        %v4670 = vunpack.c.l.b16 %v4495
        %v4671 = vunpack.c.h.b16 %v4495
        %v4672 = vunpack.c.l.b16 %v4496
        %v4673 = vunpack.c.h.b16 %v4496
        %v4674 = vunpack.c.l.b16 %v4497
        %v4675 = vunpack.c.h.b16 %v4497
        %v4676 = vunpack.c.l.b16 %v4498
        %v4677 = vunpack.c.h.b16 %v4498
        %v4678 = vunpack.c.l.b16 %v4499
        %v4679 = vunpack.c.h.b16 %v4499
        %v4680 = vunpack.c.l.b16 %v4500
        %v4681 = vunpack.c.h.b16 %v4500
        %v4682 = vunpack.c.l.b16 %v4501
        %v4683 = vunpack.c.h.b16 %v4501
        %v4684 = vunpack.c.l.b16 %v4502
        %v4685 = vunpack.c.h.b16 %v4502
        %v4686 = vunpack.c.l.b16 %v4503
        %v4687 = vunpack.c.h.b16 %v4503
        %v4688 = vunpack.c.l.b16 %v4504
        %v4689 = vunpack.c.h.b16 %v4504
        %v4690 = vunpack.c.l.b16 %v4505
        %v4691 = vunpack.c.h.b16 %v4505
        %v4692 = vunpack.c.l.b16 %v4506
        %v4693 = vunpack.c.h.b16 %v4506
        %v4694 = vunpack.c.l.b16 %v4507
        %v4695 = vunpack.c.h.b16 %v4507
        %v4696 = vunpack.c.l.b16 %v4508
        %v4697 = vunpack.c.h.b16 %v4508
        %v4698 = vunpack.c.l.b16 %v4509
        %v4699 = vunpack.c.h.b16 %v4509
        %v4700 = vunpack.c.l.b16 %v4510
        %v4701 = vunpack.c.h.b16 %v4510
        %v4702 = vunpack.c.l.b16 %v4511
        %v4703 = vunpack.c.h.b16 %v4511
        %v4704 = vpack.c.b16 %v4584, %v4576
        %v4705 = vpack.c.b16 %v4585, %v4577
        %v4706 = vpack.c.b16 %v4586, %v4578
        %v4707 = vpack.c.b16 %v4587, %v4579
        %v4708 = vpack.c.b16 %v4588, %v4580
        %v4709 = vpack.c.b16 %v4589, %v4581
        %v4710 = vpack.c.b16 %v4590, %v4582
        %v4711 = vpack.c.b16 %v4591, %v4583
        %v4712 = vpack.c.b16 %v4600, %v4592
        %v4713 = vpack.c.b16 %v4601, %v4593
        %v4714 = vpack.c.b16 %v4602, %v4594
        %v4715 = vpack.c.b16 %v4603, %v4595
        %v4716 = vpack.c.b16 %v4604, %v4596
        %v4717 = vpack.c.b16 %v4605, %v4597
        %v4718 = vpack.c.b16 %v4606, %v4598
        %v4719 = vpack.c.b16 %v4607, %v4599
        %v4720 = vpack.c.b16 %v4616, %v4608
        %v4721 = vpack.c.b16 %v4617, %v4609
        %v4722 = vpack.c.b16 %v4618, %v4610
        %v4723 = vpack.c.b16 %v4619, %v4611
        %v4724 = vpack.c.b16 %v4620, %v4612
        %v4725 = vpack.c.b16 %v4621, %v4613
        %v4726 = vpack.c.b16 %v4622, %v4614
        %v4727 = vpack.c.b16 %v4623, %v4615
        %v4728 = vpack.c.b16 %v4632, %v4624
        %v4729 = vpack.c.b16 %v4633, %v4625
        %v4730 = vpack.c.b16 %v4634, %v4626
        %v4731 = vpack.c.b16 %v4635, %v4627
        %v4732 = vpack.c.b16 %v4636, %v4628
        %v4733 = vpack.c.b16 %v4637, %v4629
        %v4734 = vpack.c.b16 %v4638, %v4630
        %v4735 = vpack.c.b16 %v4639, %v4631
        %v4736 = vpack.c.b16 %v4648, %v4640
        %v4737 = vpack.c.b16 %v4649, %v4641
        %v4738 = vpack.c.b16 %v4650, %v4642
        %v4739 = vpack.c.b16 %v4651, %v4643
        %v4740 = vpack.c.b16 %v4652, %v4644
        %v4741 = vpack.c.b16 %v4653, %v4645
        %v4742 = vpack.c.b16 %v4654, %v4646
        %v4743 = vpack.c.b16 %v4655, %v4647
        %v4744 = vpack.c.b16 %v4664, %v4656
        %v4745 = vpack.c.b16 %v4665, %v4657
        %v4746 = vpack.c.b16 %v4666, %v4658
        %v4747 = vpack.c.b16 %v4667, %v4659
        %v4748 = vpack.c.b16 %v4668, %v4660
        %v4749 = vpack.c.b16 %v4669, %v4661
        %v4750 = vpack.c.b16 %v4670, %v4662
        %v4751 = vpack.c.b16 %v4671, %v4663
        %v4752 = vpack.c.b16 %v4680, %v4672
        %v4753 = vpack.c.b16 %v4681, %v4673
        %v4754 = vpack.c.b16 %v4682, %v4674
        %v4755 = vpack.c.b16 %v4683, %v4675
        %v4756 = vpack.c.b16 %v4684, %v4676
        %v4757 = vpack.c.b16 %v4685, %v4677
        %v4758 = vpack.c.b16 %v4686, %v4678
        %v4759 = vpack.c.b16 %v4687, %v4679
        %v4760 = vpack.c.b16 %v4696, %v4688
        %v4761 = vpack.c.b16 %v4697, %v4689
        %v4762 = vpack.c.b16 %v4698, %v4690
        %v4763 = vpack.c.b16 %v4699, %v4691
        %v4764 = vpack.c.b16 %v4700, %v4692
        %v4765 = vpack.c.b16 %v4701, %v4693
        %v4766 = vpack.c.b16 %v4702, %v4694
        %v4767 = vpack.c.b16 %v4703, %v4695
        %4832 = vmatpush.bf16.msra.mxu0 %v4760
        %4833 = vmatpush.bf16.msra.mxu0 %v4752
        %4834 = vmatpush.bf16.msra.mxu0 %v4744
        %4835 = vmatpush.bf16.msra.mxu0 %v4736
        %4836 = vmatpush.bf16.msra.mxu0 %v4728
        %4837 = vmatpush.bf16.msra.mxu0 %v4720
        %4838 = vmatpush.bf16.msra.mxu0 %v4712
        %4839 = vmatpush.bf16.msra.mxu0 %v4704
        %4840 = vmatmul.bf16.gmra.mxu0 %v4444
        %v4841 = vpop.f32.mrf.mxu0
        %v4842 = vadd.f32 0.0, %v4841
        %v4843 = vpop.f32.mrf.mxu0
        %v4844 = vadd.f32 0.0, %v4843
        %4845 = vmatmul.bf16.gmra.mxu0 %v4445
        %v4846 = vpop.f32.mrf.mxu0
        %v4847 = vadd.f32 0.0, %v4846
        %v4848 = vpop.f32.mrf.mxu0
        %v4849 = vadd.f32 0.0, %v4848
        %4850 = vmatmul.bf16.gmra.mxu0 %v4446
        %v4851 = vpop.f32.mrf.mxu0
        %v4852 = vadd.f32 0.0, %v4851
        %v4853 = vpop.f32.mrf.mxu0
        %v4854 = vadd.f32 0.0, %v4853
        %4855 = vmatmul.bf16.gmra.mxu0 %v4447
        %v4856 = vpop.f32.mrf.mxu0
        %v4857 = vadd.f32 0.0, %v4856
        %v4858 = vpop.f32.mrf.mxu0
        %v4859 = vadd.f32 0.0, %v4858
        %4860 = vdwg.mxu0
        %4861 = vmatpush.bf16.msra.mxu0 %v4761
        %4862 = vmatpush.bf16.msra.mxu0 %v4753
        %4863 = vmatpush.bf16.msra.mxu0 %v4745
        %4864 = vmatpush.bf16.msra.mxu0 %v4737
        %4865 = vmatpush.bf16.msra.mxu0 %v4729
        %4866 = vmatpush.bf16.msra.mxu0 %v4721
        %4867 = vmatpush.bf16.msra.mxu0 %v4713
        %4868 = vmatpush.bf16.msra.mxu0 %v4705
        %4869 = vmatmul.bf16.gmra.mxu0 %v4444
        %v4870 = vpop.f32.mrf.mxu0
        %v4871 = vadd.f32 0.0, %v4870
        %v4872 = vpop.f32.mrf.mxu0
        %v4873 = vadd.f32 0.0, %v4872
        %4874 = vmatmul.bf16.gmra.mxu0 %v4445
        %v4875 = vpop.f32.mrf.mxu0
        %v4876 = vadd.f32 0.0, %v4875
        %v4877 = vpop.f32.mrf.mxu0
        %v4878 = vadd.f32 0.0, %v4877
        %4879 = vmatmul.bf16.gmra.mxu0 %v4446
        %v4880 = vpop.f32.mrf.mxu0
        %v4881 = vadd.f32 0.0, %v4880
        %v4882 = vpop.f32.mrf.mxu0
        %v4883 = vadd.f32 0.0, %v4882
        %4884 = vmatmul.bf16.gmra.mxu0 %v4447
        %v4885 = vpop.f32.mrf.mxu0
        %v4886 = vadd.f32 0.0, %v4885
        %v4887 = vpop.f32.mrf.mxu0
        %v4888 = vadd.f32 0.0, %v4887
        %4889 = vdwg.mxu0
        %4890 = vmatpush.bf16.msra.mxu0 %v4762
        %4891 = vmatpush.bf16.msra.mxu0 %v4754
        %4892 = vmatpush.bf16.msra.mxu0 %v4746
        %4893 = vmatpush.bf16.msra.mxu0 %v4738
        %4894 = vmatpush.bf16.msra.mxu0 %v4730
        %4895 = vmatpush.bf16.msra.mxu0 %v4722
        %4896 = vmatpush.bf16.msra.mxu0 %v4714
        %4897 = vmatpush.bf16.msra.mxu0 %v4706
        %4898 = vmatmul.bf16.gmra.mxu0 %v4444
        %v4899 = vpop.f32.mrf.mxu0
        %v4900 = vadd.f32 0.0, %v4899
        %v4901 = vpop.f32.mrf.mxu0
        %v4902 = vadd.f32 0.0, %v4901
        %4903 = vmatmul.bf16.gmra.mxu0 %v4445
        %v4904 = vpop.f32.mrf.mxu0
        %v4905 = vadd.f32 0.0, %v4904
        %v4906 = vpop.f32.mrf.mxu0
        %v4907 = vadd.f32 0.0, %v4906
        %4908 = vmatmul.bf16.gmra.mxu0 %v4446
        %v4909 = vpop.f32.mrf.mxu0
        %v4910 = vadd.f32 0.0, %v4909
        %v4911 = vpop.f32.mrf.mxu0
        %v4912 = vadd.f32 0.0, %v4911
        %4913 = vmatmul.bf16.gmra.mxu0 %v4447
        %v4914 = vpop.f32.mrf.mxu0
        %v4915 = vadd.f32 0.0, %v4914
        %v4916 = vpop.f32.mrf.mxu0
        %v4917 = vadd.f32 0.0, %v4916
        %4918 = vdwg.mxu0
        %4919 = vmatpush.bf16.msra.mxu0 %v4763
        %4920 = vmatpush.bf16.msra.mxu0 %v4755
        %4921 = vmatpush.bf16.msra.mxu0 %v4747
        %4922 = vmatpush.bf16.msra.mxu0 %v4739
        %4923 = vmatpush.bf16.msra.mxu0 %v4731
        %4924 = vmatpush.bf16.msra.mxu0 %v4723
        %4925 = vmatpush.bf16.msra.mxu0 %v4715
        %4926 = vmatpush.bf16.msra.mxu0 %v4707
        %4927 = vmatmul.bf16.gmra.mxu0 %v4444
        %v4928 = vpop.f32.mrf.mxu0
        %v4929 = vadd.f32 0.0, %v4928
        %v4930 = vpop.f32.mrf.mxu0
        %v4931 = vadd.f32 0.0, %v4930
        %4932 = vmatmul.bf16.gmra.mxu0 %v4445
        %v4933 = vpop.f32.mrf.mxu0
        %v4934 = vadd.f32 0.0, %v4933
        %v4935 = vpop.f32.mrf.mxu0
        %v4936 = vadd.f32 0.0, %v4935
        %4937 = vmatmul.bf16.gmra.mxu0 %v4446
        %v4938 = vpop.f32.mrf.mxu0
        %v4939 = vadd.f32 0.0, %v4938
        %v4940 = vpop.f32.mrf.mxu0
        %v4941 = vadd.f32 0.0, %v4940
        %4942 = vmatmul.bf16.gmra.mxu0 %v4447
        %v4943 = vpop.f32.mrf.mxu0
        %v4944 = vadd.f32 0.0, %v4943
        %v4945 = vpop.f32.mrf.mxu0
        %v4946 = vadd.f32 0.0, %v4945
        %4947 = vdwg.mxu0
        %4948 = vmatpush.bf16.msra.mxu0 %v4764
        %4949 = vmatpush.bf16.msra.mxu0 %v4756
        %4950 = vmatpush.bf16.msra.mxu0 %v4748
        %4951 = vmatpush.bf16.msra.mxu0 %v4740
        %4952 = vmatpush.bf16.msra.mxu0 %v4732
        %4953 = vmatpush.bf16.msra.mxu0 %v4724
        %4954 = vmatpush.bf16.msra.mxu0 %v4716
        %4955 = vmatpush.bf16.msra.mxu0 %v4708
        %4956 = vmatmul.bf16.gmra.mxu0 %v4444
        %v4957 = vpop.f32.mrf.mxu0
        %v4958 = vadd.f32 0.0, %v4957
        %v4959 = vpop.f32.mrf.mxu0
        %v4960 = vadd.f32 0.0, %v4959
        %4961 = vmatmul.bf16.gmra.mxu0 %v4445
        %v4962 = vpop.f32.mrf.mxu0
        %v4963 = vadd.f32 0.0, %v4962
        %v4964 = vpop.f32.mrf.mxu0
        %v4965 = vadd.f32 0.0, %v4964
        %4966 = vmatmul.bf16.gmra.mxu0 %v4446
        %v4967 = vpop.f32.mrf.mxu0
        %v4968 = vadd.f32 0.0, %v4967
        %v4969 = vpop.f32.mrf.mxu0
        %v4970 = vadd.f32 0.0, %v4969
        %4971 = vmatmul.bf16.gmra.mxu0 %v4447
        %v4972 = vpop.f32.mrf.mxu0
        %v4973 = vadd.f32 0.0, %v4972
        %v4974 = vpop.f32.mrf.mxu0
        %v4975 = vadd.f32 0.0, %v4974
        %4976 = vdwg.mxu0
        %4977 = vmatpush.bf16.msra.mxu0 %v4765
        %4978 = vmatpush.bf16.msra.mxu0 %v4757
        %4979 = vmatpush.bf16.msra.mxu0 %v4749
        %4980 = vmatpush.bf16.msra.mxu0 %v4741
        %4981 = vmatpush.bf16.msra.mxu0 %v4733
        %4982 = vmatpush.bf16.msra.mxu0 %v4725
        %4983 = vmatpush.bf16.msra.mxu0 %v4717
        %4984 = vmatpush.bf16.msra.mxu0 %v4709
        %4985 = vmatmul.bf16.gmra.mxu0 %v4444
        %v4986 = vpop.f32.mrf.mxu0
        %v4987 = vadd.f32 0.0, %v4986
        %v4988 = vpop.f32.mrf.mxu0
        %v4989 = vadd.f32 0.0, %v4988
        %4990 = vmatmul.bf16.gmra.mxu0 %v4445
        %v4991 = vpop.f32.mrf.mxu0
        %v4992 = vadd.f32 0.0, %v4991
        %v4993 = vpop.f32.mrf.mxu0
        %v4994 = vadd.f32 0.0, %v4993
        %4995 = vmatmul.bf16.gmra.mxu0 %v4446
        %v4996 = vpop.f32.mrf.mxu0
        %v4997 = vadd.f32 0.0, %v4996
        %v4998 = vpop.f32.mrf.mxu0
        %v4999 = vadd.f32 0.0, %v4998
        %5000 = vmatmul.bf16.gmra.mxu0 %v4447
        %v5001 = vpop.f32.mrf.mxu0
        %v5002 = vadd.f32 0.0, %v5001
        %v5003 = vpop.f32.mrf.mxu0
        %v5004 = vadd.f32 0.0, %v5003
        %5005 = vdwg.mxu0
        %5006 = vmatpush.bf16.msra.mxu0 %v4766
        %5007 = vmatpush.bf16.msra.mxu0 %v4758
        %5008 = vmatpush.bf16.msra.mxu0 %v4750
        %5009 = vmatpush.bf16.msra.mxu0 %v4742
        %5010 = vmatpush.bf16.msra.mxu0 %v4734
        %5011 = vmatpush.bf16.msra.mxu0 %v4726
        %5012 = vmatpush.bf16.msra.mxu0 %v4718
        %5013 = vmatpush.bf16.msra.mxu0 %v4710
        %5014 = vmatmul.bf16.gmra.mxu0 %v4444
        %v5015 = vpop.f32.mrf.mxu0
        %v5016 = vadd.f32 0.0, %v5015
        %v5017 = vpop.f32.mrf.mxu0
        %v5018 = vadd.f32 0.0, %v5017
        %5019 = vmatmul.bf16.gmra.mxu0 %v4445
        %v5020 = vpop.f32.mrf.mxu0
        %v5021 = vadd.f32 0.0, %v5020
        %v5022 = vpop.f32.mrf.mxu0
        %v5023 = vadd.f32 0.0, %v5022
        %5024 = vmatmul.bf16.gmra.mxu0 %v4446
        %v5025 = vpop.f32.mrf.mxu0
        %v5026 = vadd.f32 0.0, %v5025
        %v5027 = vpop.f32.mrf.mxu0
        %v5028 = vadd.f32 0.0, %v5027
        %5029 = vmatmul.bf16.gmra.mxu0 %v4447
        %v5030 = vpop.f32.mrf.mxu0
        %v5031 = vadd.f32 0.0, %v5030
        %v5032 = vpop.f32.mrf.mxu0
        %v5033 = vadd.f32 0.0, %v5032
        %5034 = vdwg.mxu0
        %5035 = vmatpush.bf16.msra.mxu0 %v4767
        %5036 = vmatpush.bf16.msra.mxu0 %v4759
        %5037 = vmatpush.bf16.msra.mxu0 %v4751
        %5038 = vmatpush.bf16.msra.mxu0 %v4743
        %5039 = vmatpush.bf16.msra.mxu0 %v4735
        %5040 = vmatpush.bf16.msra.mxu0 %v4727
        %5041 = vmatpush.bf16.msra.mxu0 %v4719
        %5042 = vmatpush.bf16.msra.mxu0 %v4711
        %5043 = vmatmul.bf16.gmra.mxu0 %v4444
        %v5044 = vpop.f32.mrf.mxu0
        %v5045 = vadd.f32 0.0, %v5044
        %v5046 = vpop.f32.mrf.mxu0
        %v5047 = vadd.f32 0.0, %v5046
        %5048 = vmatmul.bf16.gmra.mxu0 %v4445
        %v5049 = vpop.f32.mrf.mxu0
        %v5050 = vadd.f32 0.0, %v5049
        %v5051 = vpop.f32.mrf.mxu0
        %v5052 = vadd.f32 0.0, %v5051
        %5053 = vmatmul.bf16.gmra.mxu0 %v4446
        %v5054 = vpop.f32.mrf.mxu0
        %v5055 = vadd.f32 0.0, %v5054
        %v5056 = vpop.f32.mrf.mxu0
        %v5057 = vadd.f32 0.0, %v5056
        %5058 = vmatmul.bf16.gmra.mxu0 %v4447
        %v5059 = vpop.f32.mrf.mxu0
        %v5060 = vadd.f32 0.0, %v5059
        %v5061 = vpop.f32.mrf.mxu0
        %v5062 = vadd.f32 0.0, %v5061
        %5063 = vdwg.mxu0
        %v5072 = vrot.slane %v4871, 1
        %v5073 = vrot.slane %v4873, 1
        %v5074 = vrot.slane %v4876, 1
        %v5075 = vrot.slane %v4878, 1
        %v5076 = vrot.slane %v4881, 1
        %v5077 = vrot.slane %v4883, 1
        %v5078 = vrot.slane %v4886, 1
        %v5079 = vrot.slane %v4888, 1
        %v5088 = vadd.f32 %v4842, %v5072
        %v5089 = vadd.f32 %v4844, %v5073
        %v5090 = vadd.f32 %v4847, %v5074
        %v5091 = vadd.f32 %v4849, %v5075
        %v5092 = vadd.f32 %v4852, %v5076
        %v5093 = vadd.f32 %v4854, %v5077
        %v5094 = vadd.f32 %v4857, %v5078
        %v5095 = vadd.f32 %v4859, %v5079
        %v5104 = vrot.slane %v4900, 2
        %v5105 = vrot.slane %v4902, 2
        %v5106 = vrot.slane %v4905, 2
        %v5107 = vrot.slane %v4907, 2
        %v5108 = vrot.slane %v4910, 2
        %v5109 = vrot.slane %v4912, 2
        %v5110 = vrot.slane %v4915, 2
        %v5111 = vrot.slane %v4917, 2
        %v5120 = vadd.f32 %v5088, %v5104
        %v5121 = vadd.f32 %v5089, %v5105
        %v5122 = vadd.f32 %v5090, %v5106
        %v5123 = vadd.f32 %v5091, %v5107
        %v5124 = vadd.f32 %v5092, %v5108
        %v5125 = vadd.f32 %v5093, %v5109
        %v5126 = vadd.f32 %v5094, %v5110
        %v5127 = vadd.f32 %v5095, %v5111
        %v5136 = vrot.slane %v4929, 3
        %v5137 = vrot.slane %v4931, 3
        %v5138 = vrot.slane %v4934, 3
        %v5139 = vrot.slane %v4936, 3
        %v5140 = vrot.slane %v4939, 3
        %v5141 = vrot.slane %v4941, 3
        %v5142 = vrot.slane %v4944, 3
        %v5143 = vrot.slane %v4946, 3
        %v5152 = vadd.f32 %v5120, %v5136
        %v5153 = vadd.f32 %v5121, %v5137
        %v5154 = vadd.f32 %v5122, %v5138
        %v5155 = vadd.f32 %v5123, %v5139
        %v5156 = vadd.f32 %v5124, %v5140
        %v5157 = vadd.f32 %v5125, %v5141
        %v5158 = vadd.f32 %v5126, %v5142
        %v5159 = vadd.f32 %v5127, %v5143
        %v5168 = vrot.slane %v4958, 4
        %v5169 = vrot.slane %v4960, 4
        %v5170 = vrot.slane %v4963, 4
        %v5171 = vrot.slane %v4965, 4
        %v5172 = vrot.slane %v4968, 4
        %v5173 = vrot.slane %v4970, 4
        %v5174 = vrot.slane %v4973, 4
        %v5175 = vrot.slane %v4975, 4
        %v5184 = vadd.f32 %v5152, %v5168
        %v5185 = vadd.f32 %v5153, %v5169
        %v5186 = vadd.f32 %v5154, %v5170
        %v5187 = vadd.f32 %v5155, %v5171
        %v5188 = vadd.f32 %v5156, %v5172
        %v5189 = vadd.f32 %v5157, %v5173
        %v5190 = vadd.f32 %v5158, %v5174
        %v5191 = vadd.f32 %v5159, %v5175
        %v5200 = vrot.slane %v4987, 5
        %v5201 = vrot.slane %v4989, 5
        %v5202 = vrot.slane %v4992, 5
        %v5203 = vrot.slane %v4994, 5
        %v5204 = vrot.slane %v4997, 5
        %v5205 = vrot.slane %v4999, 5
        %v5206 = vrot.slane %v5002, 5
        %v5207 = vrot.slane %v5004, 5
        %v5216 = vadd.f32 %v5184, %v5200
        %v5217 = vadd.f32 %v5185, %v5201
        %v5218 = vadd.f32 %v5186, %v5202
        %v5219 = vadd.f32 %v5187, %v5203
        %v5220 = vadd.f32 %v5188, %v5204
        %v5221 = vadd.f32 %v5189, %v5205
        %v5222 = vadd.f32 %v5190, %v5206
        %v5223 = vadd.f32 %v5191, %v5207
        %v5232 = vrot.slane %v5016, 6
        %v5233 = vrot.slane %v5018, 6
        %v5234 = vrot.slane %v5021, 6
        %v5235 = vrot.slane %v5023, 6
        %v5236 = vrot.slane %v5026, 6
        %v5237 = vrot.slane %v5028, 6
        %v5238 = vrot.slane %v5031, 6
        %v5239 = vrot.slane %v5033, 6
        %v5248 = vadd.f32 %v5216, %v5232
        %v5249 = vadd.f32 %v5217, %v5233
        %v5250 = vadd.f32 %v5218, %v5234
        %v5251 = vadd.f32 %v5219, %v5235
        %v5252 = vadd.f32 %v5220, %v5236
        %v5253 = vadd.f32 %v5221, %v5237
        %v5254 = vadd.f32 %v5222, %v5238
        %v5255 = vadd.f32 %v5223, %v5239
        %v5264 = vrot.slane %v5045, 7
        %v5265 = vrot.slane %v5047, 7
        %v5266 = vrot.slane %v5050, 7
        %v5267 = vrot.slane %v5052, 7
        %v5268 = vrot.slane %v5055, 7
        %v5269 = vrot.slane %v5057, 7
        %v5270 = vrot.slane %v5060, 7
        %v5271 = vrot.slane %v5062, 7
        %v5280 = vadd.f32 %v5248, %v5264
        %v5281 = vadd.f32 %v5249, %v5265
        %v5282 = vadd.f32 %v5250, %v5266
        %v5283 = vadd.f32 %v5251, %v5267
        %v5284 = vadd.f32 %v5252, %v5268
        %v5285 = vadd.f32 %v5253, %v5269
        %v5286 = vadd.f32 %v5254, %v5270
        %v5287 = vadd.f32 %v5255, %v5271
        %v5288 = vld [vmem:[%s14] sm:$0x1]
        %v5290 = vperm.slane %v5288, 0
        %v5292 = vadd.f32 %v5280, %v5290
        %v5293 = vadd.f32 %v5281, %v5290
        %v5294 = vadd.f32 %v5282, %v5290
        %v5295 = vadd.f32 %v5283, %v5290
        %v5296 = vadd.f32 %v5284, %v5290
        %v5297 = vadd.f32 %v5285, %v5290
        %v5298 = vadd.f32 %v5286, %v5290
        %v5299 = vadd.f32 %v5287, %v5290
        %v5300 = vmax.f32 %v5292, 0.0
        %v5301 = vmax.f32 %v5293, 0.0
        %v5302 = vmax.f32 %v5294, 0.0
        %v5303 = vmax.f32 %v5295, 0.0
        %v5304 = vmax.f32 %v5296, 0.0
        %v5305 = vmax.f32 %v5297, 0.0
        %v5306 = vmax.f32 %v5298, 0.0
        %v5307 = vmax.f32 %v5299, 0.0
        %v5308 = vpack.c.bf16 %v5300, %v5300
        %v5309 = vpack.c.bf16 %v5301, %v5301
        %v5310 = vpack.c.bf16 %v5302, %v5302
        %v5311 = vpack.c.bf16 %v5303, %v5303
        %v5312 = vpack.c.bf16 %v5304, %v5304
        %v5313 = vpack.c.bf16 %v5305, %v5305
        %v5314 = vpack.c.bf16 %v5306, %v5306
        %v5315 = vpack.c.bf16 %v5307, %v5307
        %v5316 = vld [vmem:[#allocation24] sm:$0xf]
        %v5317 = vld [vmem:[#allocation24 + $0x4] sm:$0xf]
        %v5318 = vld [vmem:[#allocation24 + $0x8] sm:$0xf]
        %v5319 = vld [vmem:[#allocation24 + $0xc] sm:$0xf]
        %v5320 = vld [vmem:[#allocation24 + $0x10] sm:$0xf]
        %v5321 = vld [vmem:[#allocation24 + $0x14] sm:$0xf]
        %v5322 = vld [vmem:[#allocation24 + $0x18] sm:$0xf]
        %v5323 = vld [vmem:[#allocation24 + $0x1c] sm:$0xf]
        %v5324 = vld [vmem:[%s16] sm:$0x1]
        %v5326 = vperm.slane %v5324, 0
        %v5336 = vunpack.c.l.b16 %v5308
        %v5337 = vunpack.c.l.b16 %v5309
        %v5338 = vunpack.c.l.b16 %v5310
        %v5339 = vunpack.c.l.b16 %v5311
        %v5340 = vunpack.c.l.b16 %v5312
        %v5341 = vunpack.c.l.b16 %v5313
        %v5342 = vunpack.c.l.b16 %v5314
        %v5343 = vunpack.c.l.b16 %v5315
        %v5344 = vrot.slane %v5337, 7
        %vm5345 = vcmask 1041409
        %v5346 = vsel %vm5345, %v5344, %v5336
        %v5347 = vrot.slane %v5338, 6
        %vm5348 = vcmask 1042434
        %v5349 = vsel %vm5348, %v5347, %v5346
        %v5350 = vrot.slane %v5339, 5
        %vm5351 = vcmask 1043459
        %v5352 = vsel %vm5351, %v5350, %v5349
        %v5353 = vrot.slane %v5340, 4
        %vm5354 = vcmask 1044484
        %v5355 = vsel %vm5354, %v5353, %v5352
        %v5356 = vrot.slane %v5341, 3
        %vm5357 = vcmask 1045509
        %v5358 = vsel %vm5357, %v5356, %v5355
        %v5359 = vrot.slane %v5342, 2
        %vm5360 = vcmask 1046534
        %v5361 = vsel %vm5360, %v5359, %v5358
        %v5362 = vrot.slane %v5343, 1
        %vm5363 = vcmask 1047559
        %v5364 = vsel %vm5363, %v5362, %v5361
        %v5365 = vpack.c.b16 %v5364, %v5364
        %v5374 = vunpack.c.l.b16 %v5316
        %v5375 = vunpack.c.l.b16 %v5317
        %v5376 = vunpack.c.l.b16 %v5318
        %v5377 = vunpack.c.l.b16 %v5319
        %v5378 = vunpack.c.l.b16 %v5320
        %v5379 = vunpack.c.l.b16 %v5321
        %v5380 = vunpack.c.l.b16 %v5322
        %v5381 = vunpack.c.l.b16 %v5323
        %v5382 = vpack.c.b16 %v5375, %v5374
        %v5383 = vpack.c.b16 %v5377, %v5376
        %v5384 = vpack.c.b16 %v5379, %v5378
        %v5385 = vpack.c.b16 %v5381, %v5380
        %vm5390 = vcmask 523264
        %v5392 = vsel %vm5390, %v5365, 0
        %5394 = vmatpush.bf16.msra.mxu0 0
        %5395 = vmatpush.bf16.msra.mxu0 0
        %5396 = vmatpush.bf16.msra.mxu0 0
        %5397 = vmatpush.bf16.msra.mxu0 0
        %5398 = vmatpush.bf16.msra.mxu0 %v5385
        %5399 = vmatpush.bf16.msra.mxu0 %v5384
        %5400 = vmatpush.bf16.msra.mxu0 %v5383
        %5401 = vmatpush.bf16.msra.mxu0 %v5382
        %5402 = vmatmul.bf16.gmra.mxu0 %v5392
        %v5403 = vpop.f32.mrf.mxu0
        %v5404 = vadd.f32 %v5326, %v5403
        %v5405 = vpop.f32.mrf.mxu0
        %5406 = vdwg.mxu0
        %5407 = vst [vmem:[%s767] sm:$0xff] %v5404
        %s5408 = sand.u32 %s410, 1
        %s5409 = scalar_lea.sflag [#allocation6], %s5408
        %s5410 = sand.u32 %s410, 1
        %s5411 = smul.addr %s5410, 8
        %s5412 = scalar_lea.vmem [#allocation25], %s5411
        // Predicated region
        $region141: #{tiny_cnn_forward.1} parent=87 // pred_check
          %p5413 = pneg %p420
        $region142: #{tiny_cnn_forward.1} parent=87 // pred_check_branch
          %5415 = sbr.rel (%p5413) target = $region144
        $region143: #{tiny_cnn_forward.1} parent=87 // pred_region
          %5417 = vsyncadd %s5409, 0
          %s5418 = smul.addr %s40, 8
          %s5419 = scalar_lea.hbm %s17, %s5418
          %s5421 = sshll.u32 %s5412, 4
          %s5422 = int_to_ptr.vmem [resolvable:$true] %s5421
          %s5423 = sshll.u32 %s5419, 4
          %s5424 = int_to_ptr.hbm [resolvable:$true] %s5423
          %5426 = dma.vmem_to_hbm [thread:$0]  %s5422, 128, %s5424, %s5409
        $region144: #{tiny_cnn_forward.1} parent=87 // pred_fallthru
          _
      $region88: #{tiny_cnn_forward.1} parent=5 // pred_fallthru
        _
      %p5427 = scmp.le.s32.totalorder 2, %s35
      // Predicated region
      $region145: #{tiny_cnn_forward.1} parent=5 // pred_check
        %p5428 = pneg %p5427
      $region146: #{tiny_cnn_forward.1} parent=5 // pred_check_branch
        %5430 = sbr.rel (%p5428) target = $region148
      $region147: #{tiny_cnn_forward.1} parent=5 // pred_region
        %s5431 = ssub.s32 %s35, 2
        // Predicated region
        $region149: #{tiny_cnn_forward.1} parent=147 // pred_check
          %p5432 = pneg %p426
        $region150: #{tiny_cnn_forward.1} parent=147 // pred_check_branch
          %5434 = sbr.rel (%p5432) target = $region152
        $region151: #{tiny_cnn_forward.1} parent=147 // pred_region
          %s5435 = sand.u32 %s411, 1
          %s5436 = scalar_lea.sflag [#allocation6], %s5435
          %s5437 = sand.u32 %s411, 1
          %s5438 = smul.addr %s5437, 8
          %s5439 = scalar_lea.vmem [#allocation25], %s5438
          %5441 = dma.done %s5436, 128
        $region152: #{tiny_cnn_forward.1} parent=147 // pred_fallthru
          _
      $region148: #{tiny_cnn_forward.1} parent=5 // pred_fallthru
        _
    $region6: #{tiny_cnn_forward.1} parent=1 // loop_footer
      %s39 = sadd.s32 1, %s35
    $region7: #{tiny_cnn_forward.1} parent=1 // loop_footer_branch
      %34 = sbr.rel target = $region3
    $region8: #{tiny_cnn_forward.1} parent=1 // loop_exit
      _
    %5442 = vsyncpa [#allocation5], 1
    %s5443 = scalar_lea.sflag [#allocation5], 1
    %5444 = vsyncpa %s5443, 1
    %5445 = vsyncpa [#allocation8], 1
    %5446 = vsyncpa [#allocation11], 1
    %5447 = vsyncpa [#allocation14], 1
    %5448 = vsyncpa [#allocation17], 1
    %5449 = vsyncpa [#allocation20], 1
    %5450 = vsyncpa [#allocation23], 1
    %5451 = vsyncpa [#allocation6], 1
    %s5452 = scalar_lea.sflag [#allocation6], 1
    %5453 = vsyncpa %s5452, 1

</llo_original>
